<compile_context>
chip_gen: v6e
topology: v6e:2x2x1
jax: 0.10.0
libtpu: 0.0.40
codegen_flags: <defaults>
</compile_context>

<pallas_src>
import jax
import jax.numpy as jnp
import numpy as np
from jax.experimental import pallas as pl
from jax.experimental.pallas import tpu as pltpu  # noqa: F401  (TPU backend import)


# ----------------------------- fused forward kernel -----------------------------

def make_fused_forward_kernel(T, B, E, H, HP, V, L):
    """Builds a kernel computing L LSTM layers over T steps + Linear + log_softmax.

    Kernel ref order:
      emb2d (T*B, E),
      [w_ih_p (in_pad, 4*HP), w_hh_p (HP, 4*HP), b_p (1, 4*HP)] * L,
      w_out_p (HP, V), b_out (1, V), h0_p (L, B, HP), c0_p (L, B, HP),
      -> logp (B, V), h_n (L, B, H), c_n (L, B, H)
    """

    def kernel(*refs):
        emb_ref = refs[0]
        layer_refs = [(refs[1 + 3 * l], refs[2 + 3 * l], refs[3 + 3 * l]) for l in range(L)]
        base = 1 + 3 * L
        w_out_ref, b_out_ref, h0_ref, c0_ref = refs[base:base + 4]
        logp_ref, hN_ref, cN_ref = refs[base + 4:base + 7]

        x = emb_ref[...]                                   # (T*B, E_in) input to layer 0
        h = None
        for l, (wih_ref, whh_ref, b_ref) in enumerate(layer_refs):
            w_hh = whh_ref[...]                            # (HP, 4*HP)
            # Hoisted input projection over all timesteps at once (off the serial path).
            gates_x = (jnp.dot(x, wih_ref[...], preferred_element_type=jnp.float32)
                       + b_ref[...])                       # (T*B, 4*HP)

            h = h0_ref[l]                                  # (B, HP), pad columns are zero
            c = c0_ref[l]
            ys = [] if l + 1 < L else None

            for t in range(T):                             # fully unrolled (T static)
                gx = gates_x[t * B:(t + 1) * B, :]
                gates = gx + jnp.dot(h, w_hh, preferred_element_type=jnp.float32)
                # Lane-aligned gate slices (each gate block is exactly HP=128 lanes).
                i = jax.nn.sigmoid(gates[:, 0 * HP:1 * HP])
                f = jax.nn.sigmoid(gates[:, 1 * HP:2 * HP])
                g = jnp.tanh(gates[:, 2 * HP:3 * HP])
                o = jax.nn.sigmoid(gates[:, 3 * HP:4 * HP])
                c = f * c + i * g
                h = o * jnp.tanh(c)
                if ys is not None:
                    ys.append(h)

            hN_ref[l] = h[:, :H].astype(hN_ref.dtype)
            cN_ref[l] = c[:, :H].astype(cN_ref.dtype)
            if ys is not None:
                x = jnp.concatenate(ys, axis=0)            # (T*B, HP) -> next layer's input

        # Output head on the last timestep of the last layer (padding rows of W_out are zero).
        logits = (jnp.dot(h, w_out_ref[...], preferred_element_type=jnp.float32)
                  + b_out_ref[...])                        # (B, V)
        m = jnp.max(logits, axis=-1, keepdims=True)
        z = logits - m
        lse = jnp.log(jnp.sum(jnp.exp(z), axis=-1, keepdims=True))
        logp_ref[...] = (z - lse).astype(logp_ref.dtype)

    return kernel


def fused_forward(emb2d, lstm_padded, w_out_p, b_out, h0_p, c0_p, H, V):
    TB, E = emb2d.shape
    L, B, HP = h0_p.shape
    T = TB // B
    kernel = make_fused_forward_kernel(T, B, E, H, HP, V, L)

    flat_w = []
    for (wih_p, whh_p, b_p) in lstm_padded:
        flat_w += [wih_p, whh_p, b_p]

    out_shapes = (jax.ShapeDtypeStruct((B, V), jnp.float32),
                  jax.ShapeDtypeStruct((L, B, H), jnp.float32),
                  jax.ShapeDtypeStruct((L, B, H), jnp.float32))
    # Everything fits in VMEM on v5e/v6e/v7x; no grid, whole arrays resident (default BlockSpecs).
    return pl.pallas_call(kernel, out_shape=out_shapes)(
        emb2d, *flat_w, w_out_p, b_out, h0_p, c0_p)


# ----------------------------- parameter padding helpers -----------------------------

def _pad_gate_cols(w, H, HP):
    """(in_dim, 4H) -> (in_dim, 4*HP): each gate block zero-padded to HP columns."""
    if HP == H:
        return w
    in_dim = w.shape[0]
    w4 = w.reshape(in_dim, 4, H)
    out = jnp.zeros((in_dim, 4, HP), w.dtype).at[:, :, :H].set(w4)
    return out.reshape(in_dim, 4 * HP)


def _pad_rows(w, rows):
    if w.shape[0] == rows:
        return w
    return jnp.zeros((rows,) + w.shape[1:], w.dtype).at[:w.shape[0]].set(w)


# ----------------------------- full model forward -----------------------------

def custom_model_forward(tokens, params, hx=None):
    emb = jnp.take(params["embedding"], tokens, axis=0)     # (T, B, E) or (T, E)
    reshape = emb.ndim == 2
    if reshape:                                             # matches x.unsqueeze(dim=1)
        emb = emb[:, None, :]
    T, B, E = emb.shape

    L = len(params["lstm"])
    H = params["lstm"][0][1].shape[0]
    HP = ((H + 127) // 128) * 128                           # lane-aligned hidden dim
    V = params["out_w_t"].shape[-1]

    # Pad packed LSTM weights so each gate block sits at a 128-lane-aligned offset.
    lstm_p = []
    for l, (w_ih_t, w_hh_t, b) in enumerate(params["lstm"]):
        in_pad = E if l == 0 else HP
        wih_p = _pad_rows(_pad_gate_cols(w_ih_t, H, HP), in_pad)
        whh_p = _pad_rows(_pad_gate_cols(w_hh_t, H, HP), HP)
        b_p = _pad_gate_cols(b, H, HP)
        lstm_p.append((wih_p, whh_p, b_p))
    w_out_p = _pad_rows(params["out_w_t"], HP)
    b_out = params["out_b"]

    if hx is None:
        h0 = jnp.zeros((L, B, H), jnp.float32)
        c0 = jnp.zeros((L, B, H), jnp.float32)
    else:
        h0, c0 = hx
    h0_p = jnp.zeros((L, B, HP), jnp.float32).at[:, :, :H].set(h0)
    c0_p = jnp.zeros((L, B, HP), jnp.float32).at[:, :, :H].set(c0)

    emb2d = emb.reshape(T * B, E)
    logp, h_n, c_n = fused_forward(emb2d, lstm_p, w_out_p, b_out, h0_p, c0_p, H, V)

    logp = logp[None]                                       # unsqueeze(0) -> (1, B, V)
    if reshape:
        logp = jnp.squeeze(logp, axis=1)                    # -> (1, V)
    return logp, (h_n, c_n)


# ----------------------------- parameter init -----------------------------

def init_params(key, vocab, emb, hid, layers):
    keys = jax.random.split(key, 3 + 4 * layers)
    it = iter(keys)
    params = {"embedding": jax.random.normal(next(it), (vocab, emb), jnp.float32)}
    k = float(1.0 / (hid ** 0.5))
    lstm = []
    in_dim = emb
    for _ in range(layers):
        w_ih = jax.random.uniform(next(it), (4 * hid, in_dim), jnp.float32, -k, k)
        w_hh = jax.random.uniform(next(it), (4 * hid, hid), jnp.float32, -k, k)
        b_ih = jax.random.uniform(next(it), (4 * hid,), jnp.float32, -k, k)
        b_hh = jax.random.uniform(next(it), (4 * hid,), jnp.float32, -k, k)
        lstm.append((jnp.transpose(w_ih), jnp.transpose(w_hh), (b_ih + b_hh)[None, :]))
        in_dim = hid
    params["lstm"] = lstm
    params["out_w_t"] = jnp.transpose(
        jax.random.uniform(next(it), (vocab, hid), jnp.float32, -k, k))
    params["out_b"] = jax.random.uniform(next(it), (vocab,), jnp.float32, -k, k)[None, :]
    return params


# ----------------------------- pure-JAX reference -----------------------------

def reference_forward(tokens, params):
    hp = jax.lax.Precision.HIGHEST
    x = jnp.take(params["embedding"], tokens, axis=0)
    reshape = x.ndim == 2
    if reshape:
        x = x[:, None, :]
    T, B, _ = x.shape
    h_fin, c_fin = [], []
    for (w_ih_t, w_hh_t, b) in params["lstm"]:
        H = w_hh_t.shape[0]
        h = jnp.zeros((B, H), jnp.float32)
        c = jnp.zeros((B, H), jnp.float32)
        ys = []
        for t in range(T):
            gates = (jnp.dot(x[t], w_ih_t, precision=hp)
                     + jnp.dot(h, w_hh_t, precision=hp) + b)
            i = jax.nn.sigmoid(gates[:, 0 * H:1 * H])
            f = jax.nn.sigmoid(gates[:, 1 * H:2 * H])
            g = jnp.tanh(gates[:, 2 * H:3 * H])
            o = jax.nn.sigmoid(gates[:, 3 * H:4 * H])
            c = f * c + i * g
            h = o * jnp.tanh(c)
            ys.append(h)
        x = jnp.stack(ys)
        h_fin.append(h)
        c_fin.append(c)
    logits = jnp.dot(x[-1], params["out_w_t"], precision=hp) + params["out_b"]
    logp = jax.nn.log_softmax(logits, axis=-1)[None]
    if reshape:
        logp = jnp.squeeze(logp, axis=1)
    return logp, (jnp.stack(h_fin), jnp.stack(c_fin))


# ----------------------------- main -----------------------------

if __name__ == "__main__":
    # Small shapes consistent with the module (emb=32, hidden=64, 2 layers, vocab=128).
    VOCAB, EMB, HID, LAYERS = 128, 32, 64, 2
    T, B = 8, 2

    key = jax.random.PRNGKey(0)
    key, pkey, tkey, skey = jax.random.split(key, 4)
    params = init_params(pkey, VOCAB, EMB, HID, LAYERS)

    fwd = jax.jit(custom_model_forward)

    # ---- batched tokens (T, B) ----
    tokens = jax.random.randint(tkey, (T, B), 0, VOCAB, dtype=jnp.int32)
    logp, (h_n, c_n) = fwd(tokens, params)
    jax.block_until_ready((logp, h_n, c_n))

    assert logp.shape == (1, B, VOCAB)
    assert h_n.shape == (LAYERS, B, HID) and c_n.shape == (LAYERS, B, HID)

    ref_logp, (ref_h, ref_c) = reference_forward(tokens, params)
    np.testing.assert_allclose(np.asarray(logp), np.asarray(ref_logp), atol=2e-3, rtol=2e-3)
    np.testing.assert_allclose(np.asarray(h_n), np.asarray(ref_h), atol=2e-3, rtol=2e-3)
    np.testing.assert_allclose(np.asarray(c_n), np.asarray(ref_c), atol=2e-3, rtol=2e-3)

    # ---- 1-D seed tokens (T,) -> exercises the unsqueeze/squeeze reshape path ----
    tokens1d = jax.random.randint(skey, (T,), 0, VOCAB, dtype=jnp.int32)
    logp1, (h1, c1) = fwd(tokens1d, params)
    jax.block_until_ready((logp1, h1, c1))

    assert logp1.shape == (1, VOCAB)
    ref1, (rh1, rc1) = reference_forward(tokens1d, params)
    np.testing.assert_allclose(np.asarray(logp1), np.asarray(ref1), atol=2e-3, rtol=2e-3)
    np.testing.assert_allclose(np.asarray(h1), np.asarray(rh1), atol=2e-3, rtol=2e-3)
    np.testing.assert_allclose(np.asarray(c1), np.asarray(rc1), atol=2e-3, rtol=2e-3)

    print("KERNEL_OK")
</pallas_src>

<mosaic_0001>
module attributes {stable_mosaic.version = 11 : i64} {
  func.func @kernel(%arg0: memref<16x32xf32, #tpu.memory_space<vmem>>, %arg1: memref<32x512xf32, #tpu.memory_space<vmem>>, %arg2: memref<128x512xf32, #tpu.memory_space<vmem>>, %arg3: memref<1x512xf32, #tpu.memory_space<vmem>>, %arg4: memref<128x512xf32, #tpu.memory_space<vmem>>, %arg5: memref<128x512xf32, #tpu.memory_space<vmem>>, %arg6: memref<1x512xf32, #tpu.memory_space<vmem>>, %arg7: memref<128x128xf32, #tpu.memory_space<vmem>>, %arg8: memref<1x128xf32, #tpu.memory_space<vmem>>, %arg9: memref<2x2x128xf32, #tpu.memory_space<vmem>>, %arg10: memref<2x2x128xf32, #tpu.memory_space<vmem>>, %arg11: memref<2x128xf32, #tpu.memory_space<vmem>>, %arg12: memref<2x2x64xf32, #tpu.memory_space<vmem>>, %arg13: memref<2x2x64xf32, #tpu.memory_space<vmem>>) attributes {dimension_semantics = [], scalar_prefetch = 0 : i64, scratch_operands = 0 : i64, tpu.core_type = #tpu.core_type<tc>} {
    %c0 = arith.constant 0 : index
    %c0_0 = arith.constant 0 : index
    %0 = vector.load %arg0[%c0, %c0_0] : memref<16x32xf32, #tpu.memory_space<vmem>>, vector<16x32xf32>
    %c0_1 = arith.constant 0 : index
    %c0_2 = arith.constant 0 : index
    %1 = vector.load %arg2[%c0_1, %c0_2] : memref<128x512xf32, #tpu.memory_space<vmem>>, vector<128x512xf32>
    %c0_3 = arith.constant 0 : index
    %c0_4 = arith.constant 0 : index
    %2 = vector.load %arg1[%c0_3, %c0_4] : memref<32x512xf32, #tpu.memory_space<vmem>>, vector<32x512xf32>
    %cst = arith.constant dense<0.000000e+00> : vector<16x512xf32>
    %3 = tpu.matmul %0, %2, %cst {dimension_numbers = #tpu.dot_dimension_numbers<[1], [0], [0], [1], [0, 0, 1, 1], [], []>} : vector<16x32xf32>, vector<32x512xf32>, vector<16x512xf32> -> vector<16x512xf32>
    %c0_5 = arith.constant 0 : index
    %c0_6 = arith.constant 0 : index
    %4 = vector.load %arg3[%c0_5, %c0_6] : memref<1x512xf32, #tpu.memory_space<vmem>>, vector<1x512xf32>
    %5 = vector.broadcast %4 : vector<1x512xf32> to vector<16x512xf32>
    %6 = arith.addf %3, %5 : vector<16x512xf32>
    %c0_7 = arith.constant 0 : index
    %c0_8 = arith.constant 0 : index
    %c0_9 = arith.constant 0 : index
    %7 = vector.load %arg9[%c0_7, %c0_8, %c0_9] : memref<2x2x128xf32, #tpu.memory_space<vmem>>, vector<1x2x128xf32>
    %8 = vector.shape_cast %7 : vector<1x2x128xf32> to vector<2x128xf32>
    %c0_10 = arith.constant 0 : index
    %c0_11 = arith.constant 0 : index
    %c0_12 = arith.constant 0 : index
    %9 = vector.load %arg10[%c0_10, %c0_11, %c0_12] : memref<2x2x128xf32, #tpu.memory_space<vmem>>, vector<1x2x128xf32>
    %10 = vector.shape_cast %9 : vector<1x2x128xf32> to vector<2x128xf32>
    %11 = vector.extract_strided_slice %6 {offsets = [0, 0], sizes = [2, 512], strides = [1, 1]} : vector<16x512xf32> to vector<2x512xf32>
    %cst_13 = arith.constant dense<0.000000e+00> : vector<2x512xf32>
    %12 = tpu.matmul %8, %1, %cst_13 {dimension_numbers = #tpu.dot_dimension_numbers<[1], [0], [0], [1], [0, 0, 1, 1], [], []>} : vector<2x128xf32>, vector<128x512xf32>, vector<2x512xf32> -> vector<2x512xf32>
    %13 = arith.addf %11, %12 : vector<2x512xf32>
    %14 = vector.extract_strided_slice %13 {offsets = [0, 0], sizes = [2, 128], strides = [1, 1]} : vector<2x512xf32> to vector<2x128xf32>
    %15 = arith.negf %14 : vector<2x128xf32>
    %16 = math.exp %15 : vector<2x128xf32>
    %cst_14 = arith.constant 1.000000e+00 : f32
    %17 = vector.broadcast %cst_14 : f32 to vector<2x128xf32>
    %18 = arith.addf %17, %16 : vector<2x128xf32>
    %19 = arith.divf %17, %18 : vector<2x128xf32>
    %20 = vector.extract_strided_slice %13 {offsets = [0, 128], sizes = [2, 128], strides = [1, 1]} : vector<2x512xf32> to vector<2x128xf32>
    %21 = arith.negf %20 : vector<2x128xf32>
    %22 = math.exp %21 : vector<2x128xf32>
    %cst_15 = arith.constant 1.000000e+00 : f32
    %23 = vector.broadcast %cst_15 : f32 to vector<2x128xf32>
    %24 = arith.addf %23, %22 : vector<2x128xf32>
    %25 = arith.divf %23, %24 : vector<2x128xf32>
    %26 = vector.extract_strided_slice %13 {offsets = [0, 256], sizes = [2, 128], strides = [1, 1]} : vector<2x512xf32> to vector<2x128xf32>
    %27 = math.tanh %26 : vector<2x128xf32>
    %28 = vector.extract_strided_slice %13 {offsets = [0, 384], sizes = [2, 128], strides = [1, 1]} : vector<2x512xf32> to vector<2x128xf32>
    %29 = arith.negf %28 : vector<2x128xf32>
    %30 = math.exp %29 : vector<2x128xf32>
    %cst_16 = arith.constant 1.000000e+00 : f32
    %31 = vector.broadcast %cst_16 : f32 to vector<2x128xf32>
    %32 = arith.addf %31, %30 : vector<2x128xf32>
    %33 = arith.divf %31, %32 : vector<2x128xf32>
    %34 = arith.mulf %25, %10 : vector<2x128xf32>
    %35 = arith.mulf %19, %27 : vector<2x128xf32>
    %36 = arith.addf %34, %35 : vector<2x128xf32>
    %37 = math.tanh %36 : vector<2x128xf32>
    %38 = arith.mulf %33, %37 : vector<2x128xf32>
    %39 = vector.extract_strided_slice %6 {offsets = [2, 0], sizes = [2, 512], strides = [1, 1]} : vector<16x512xf32> to vector<2x512xf32>
    %cst_17 = arith.constant dense<0.000000e+00> : vector<2x512xf32>
    %40 = tpu.matmul %38, %1, %cst_17 {dimension_numbers = #tpu.dot_dimension_numbers<[1], [0], [0], [1], [0, 0, 1, 1], [], []>} : vector<2x128xf32>, vector<128x512xf32>, vector<2x512xf32> -> vector<2x512xf32>
    %41 = arith.addf %39, %40 : vector<2x512xf32>
    %42 = vector.extract_strided_slice %41 {offsets = [0, 0], sizes = [2, 128], strides = [1, 1]} : vector<2x512xf32> to vector<2x128xf32>
    %43 = arith.negf %42 : vector<2x128xf32>
    %44 = math.exp %43 : vector<2x128xf32>
    %cst_18 = arith.constant 1.000000e+00 : f32
    %45 = vector.broadcast %cst_18 : f32 to vector<2x128xf32>
    %46 = arith.addf %45, %44 : vector<2x128xf32>
    %47 = arith.divf %45, %46 : vector<2x128xf32>
    %48 = vector.extract_strided_slice %41 {offsets = [0, 128], sizes = [2, 128], strides = [1, 1]} : vector<2x512xf32> to vector<2x128xf32>
    %49 = arith.negf %48 : vector<2x128xf32>
    %50 = math.exp %49 : vector<2x128xf32>
    %cst_19 = arith.constant 1.000000e+00 : f32
    %51 = vector.broadcast %cst_19 : f32 to vector<2x128xf32>
    %52 = arith.addf %51, %50 : vector<2x128xf32>
    %53 = arith.divf %51, %52 : vector<2x128xf32>
    %54 = vector.extract_strided_slice %41 {offsets = [0, 256], sizes = [2, 128], strides = [1, 1]} : vector<2x512xf32> to vector<2x128xf32>
    %55 = math.tanh %54 : vector<2x128xf32>
    %56 = vector.extract_strided_slice %41 {offsets = [0, 384], sizes = [2, 128], strides = [1, 1]} : vector<2x512xf32> to vector<2x128xf32>
    %57 = arith.negf %56 : vector<2x128xf32>
    %58 = math.exp %57 : vector<2x128xf32>
    %cst_20 = arith.constant 1.000000e+00 : f32
    %59 = vector.broadcast %cst_20 : f32 to vector<2x128xf32>
    %60 = arith.addf %59, %58 : vector<2x128xf32>
    %61 = arith.divf %59, %60 : vector<2x128xf32>
    %62 = arith.mulf %53, %36 : vector<2x128xf32>
    %63 = arith.mulf %47, %55 : vector<2x128xf32>
    %64 = arith.addf %62, %63 : vector<2x128xf32>
    %65 = math.tanh %64 : vector<2x128xf32>
    %66 = arith.mulf %61, %65 : vector<2x128xf32>
    %67 = vector.extract_strided_slice %6 {offsets = [4, 0], sizes = [2, 512], strides = [1, 1]} : vector<16x512xf32> to vector<2x512xf32>
    %cst_21 = arith.constant dense<0.000000e+00> : vector<2x512xf32>
    %68 = tpu.matmul %66, %1, %cst_21 {dimension_numbers = #tpu.dot_dimension_numbers<[1], [0], [0], [1], [0, 0, 1, 1], [], []>} : vector<2x128xf32>, vector<128x512xf32>, vector<2x512xf32> -> vector<2x512xf32>
    %69 = arith.addf %67, %68 : vector<2x512xf32>
    %70 = vector.extract_strided_slice %69 {offsets = [0, 0], sizes = [2, 128], strides = [1, 1]} : vector<2x512xf32> to vector<2x128xf32>
    %71 = arith.negf %70 : vector<2x128xf32>
    %72 = math.exp %71 : vector<2x128xf32>
    %cst_22 = arith.constant 1.000000e+00 : f32
    %73 = vector.broadcast %cst_22 : f32 to vector<2x128xf32>
    %74 = arith.addf %73, %72 : vector<2x128xf32>
    %75 = arith.divf %73, %74 : vector<2x128xf32>
    %76 = vector.extract_strided_slice %69 {offsets = [0, 128], sizes = [2, 128], strides = [1, 1]} : vector<2x512xf32> to vector<2x128xf32>
    %77 = arith.negf %76 : vector<2x128xf32>
    %78 = math.exp %77 : vector<2x128xf32>
    %cst_23 = arith.constant 1.000000e+00 : f32
    %79 = vector.broadcast %cst_23 : f32 to vector<2x128xf32>
    %80 = arith.addf %79, %78 : vector<2x128xf32>
    %81 = arith.divf %79, %80 : vector<2x128xf32>
    %82 = vector.extract_strided_slice %69 {offsets = [0, 256], sizes = [2, 128], strides = [1, 1]} : vector<2x512xf32> to vector<2x128xf32>
    %83 = math.tanh %82 : vector<2x128xf32>
    %84 = vector.extract_strided_slice %69 {offsets = [0, 384], sizes = [2, 128], strides = [1, 1]} : vector<2x512xf32> to vector<2x128xf32>
    %85 = arith.negf %84 : vector<2x128xf32>
    %86 = math.exp %85 : vector<2x128xf32>
    %cst_24 = arith.constant 1.000000e+00 : f32
    %87 = vector.broadcast %cst_24 : f32 to vector<2x128xf32>
    %88 = arith.addf %87, %86 : vector<2x128xf32>
    %89 = arith.divf %87, %88 : vector<2x128xf32>
    %90 = arith.mulf %81, %64 : vector<2x128xf32>
    %91 = arith.mulf %75, %83 : vector<2x128xf32>
    %92 = arith.addf %90, %91 : vector<2x128xf32>
    %93 = math.tanh %92 : vector<2x128xf32>
    %94 = arith.mulf %89, %93 : vector<2x128xf32>
    %95 = vector.extract_strided_slice %6 {offsets = [6, 0], sizes = [2, 512], strides = [1, 1]} : vector<16x512xf32> to vector<2x512xf32>
    %cst_25 = arith.constant dense<0.000000e+00> : vector<2x512xf32>
    %96 = tpu.matmul %94, %1, %cst_25 {dimension_numbers = #tpu.dot_dimension_numbers<[1], [0], [0], [1], [0, 0, 1, 1], [], []>} : vector<2x128xf32>, vector<128x512xf32>, vector<2x512xf32> -> vector<2x512xf32>
    %97 = arith.addf %95, %96 : vector<2x512xf32>
    %98 = vector.extract_strided_slice %97 {offsets = [0, 0], sizes = [2, 128], strides = [1, 1]} : vector<2x512xf32> to vector<2x128xf32>
    %99 = arith.negf %98 : vector<2x128xf32>
    %100 = math.exp %99 : vector<2x128xf32>
    %cst_26 = arith.constant 1.000000e+00 : f32
    %101 = vector.broadcast %cst_26 : f32 to vector<2x128xf32>
    %102 = arith.addf %101, %100 : vector<2x128xf32>
    %103 = arith.divf %101, %102 : vector<2x128xf32>
    %104 = vector.extract_strided_slice %97 {offsets = [0, 128], sizes = [2, 128], strides = [1, 1]} : vector<2x512xf32> to vector<2x128xf32>
    %105 = arith.negf %104 : vector<2x128xf32>
    %106 = math.exp %105 : vector<2x128xf32>
    %cst_27 = arith.constant 1.000000e+00 : f32
    %107 = vector.broadcast %cst_27 : f32 to vector<2x128xf32>
    %108 = arith.addf %107, %106 : vector<2x128xf32>
    %109 = arith.divf %107, %108 : vector<2x128xf32>
    %110 = vector.extract_strided_slice %97 {offsets = [0, 256], sizes = [2, 128], strides = [1, 1]} : vector<2x512xf32> to vector<2x128xf32>
    %111 = math.tanh %110 : vector<2x128xf32>
    %112 = vector.extract_strided_slice %97 {offsets = [0, 384], sizes = [2, 128], strides = [1, 1]} : vector<2x512xf32> to vector<2x128xf32>
    %113 = arith.negf %112 : vector<2x128xf32>
    %114 = math.exp %113 : vector<2x128xf32>
    %cst_28 = arith.constant 1.000000e+00 : f32
    %115 = vector.broadcast %cst_28 : f32 to vector<2x128xf32>
    %116 = arith.addf %115, %114 : vector<2x128xf32>
    %117 = arith.divf %115, %116 : vector<2x128xf32>
    %118 = arith.mulf %109, %92 : vector<2x128xf32>
    %119 = arith.mulf %103, %111 : vector<2x128xf32>
    %120 = arith.addf %118, %119 : vector<2x128xf32>
    %121 = math.tanh %120 : vector<2x128xf32>
    %122 = arith.mulf %117, %121 : vector<2x128xf32>
    %123 = vector.extract_strided_slice %6 {offsets = [8, 0], sizes = [2, 512], strides = [1, 1]} : vector<16x512xf32> to vector<2x512xf32>
    %cst_29 = arith.constant dense<0.000000e+00> : vector<2x512xf32>
    %124 = tpu.matmul %122, %1, %cst_29 {dimension_numbers = #tpu.dot_dimension_numbers<[1], [0], [0], [1], [0, 0, 1, 1], [], []>} : vector<2x128xf32>, vector<128x512xf32>, vector<2x512xf32> -> vector<2x512xf32>
    %125 = arith.addf %123, %124 : vector<2x512xf32>
    %126 = vector.extract_strided_slice %125 {offsets = [0, 0], sizes = [2, 128], strides = [1, 1]} : vector<2x512xf32> to vector<2x128xf32>
    %127 = arith.negf %126 : vector<2x128xf32>
    %128 = math.exp %127 : vector<2x128xf32>
    %cst_30 = arith.constant 1.000000e+00 : f32
    %129 = vector.broadcast %cst_30 : f32 to vector<2x128xf32>
    %130 = arith.addf %129, %128 : vector<2x128xf32>
    %131 = arith.divf %129, %130 : vector<2x128xf32>
    %132 = vector.extract_strided_slice %125 {offsets = [0, 128], sizes = [2, 128], strides = [1, 1]} : vector<2x512xf32> to vector<2x128xf32>
    %133 = arith.negf %132 : vector<2x128xf32>
    %134 = math.exp %133 : vector<2x128xf32>
    %cst_31 = arith.constant 1.000000e+00 : f32
    %135 = vector.broadcast %cst_31 : f32 to vector<2x128xf32>
    %136 = arith.addf %135, %134 : vector<2x128xf32>
    %137 = arith.divf %135, %136 : vector<2x128xf32>
    %138 = vector.extract_strided_slice %125 {offsets = [0, 256], sizes = [2, 128], strides = [1, 1]} : vector<2x512xf32> to vector<2x128xf32>
    %139 = math.tanh %138 : vector<2x128xf32>
    %140 = vector.extract_strided_slice %125 {offsets = [0, 384], sizes = [2, 128], strides = [1, 1]} : vector<2x512xf32> to vector<2x128xf32>
    %141 = arith.negf %140 : vector<2x128xf32>
    %142 = math.exp %141 : vector<2x128xf32>
    %cst_32 = arith.constant 1.000000e+00 : f32
    %143 = vector.broadcast %cst_32 : f32 to vector<2x128xf32>
    %144 = arith.addf %143, %142 : vector<2x128xf32>
    %145 = arith.divf %143, %144 : vector<2x128xf32>
    %146 = arith.mulf %137, %120 : vector<2x128xf32>
    %147 = arith.mulf %131, %139 : vector<2x128xf32>
    %148 = arith.addf %146, %147 : vector<2x128xf32>
    %149 = math.tanh %148 : vector<2x128xf32>
    %150 = arith.mulf %145, %149 : vector<2x128xf32>
    %151 = vector.extract_strided_slice %6 {offsets = [10, 0], sizes = [2, 512], strides = [1, 1]} : vector<16x512xf32> to vector<2x512xf32>
    %cst_33 = arith.constant dense<0.000000e+00> : vector<2x512xf32>
    %152 = tpu.matmul %150, %1, %cst_33 {dimension_numbers = #tpu.dot_dimension_numbers<[1], [0], [0], [1], [0, 0, 1, 1], [], []>} : vector<2x128xf32>, vector<128x512xf32>, vector<2x512xf32> -> vector<2x512xf32>
    %153 = arith.addf %151, %152 : vector<2x512xf32>
    %154 = vector.extract_strided_slice %153 {offsets = [0, 0], sizes = [2, 128], strides = [1, 1]} : vector<2x512xf32> to vector<2x128xf32>
    %155 = arith.negf %154 : vector<2x128xf32>
    %156 = math.exp %155 : vector<2x128xf32>
    %cst_34 = arith.constant 1.000000e+00 : f32
    %157 = vector.broadcast %cst_34 : f32 to vector<2x128xf32>
    %158 = arith.addf %157, %156 : vector<2x128xf32>
    %159 = arith.divf %157, %158 : vector<2x128xf32>
    %160 = vector.extract_strided_slice %153 {offsets = [0, 128], sizes = [2, 128], strides = [1, 1]} : vector<2x512xf32> to vector<2x128xf32>
    %161 = arith.negf %160 : vector<2x128xf32>
    %162 = math.exp %161 : vector<2x128xf32>
    %cst_35 = arith.constant 1.000000e+00 : f32
    %163 = vector.broadcast %cst_35 : f32 to vector<2x128xf32>
    %164 = arith.addf %163, %162 : vector<2x128xf32>
    %165 = arith.divf %163, %164 : vector<2x128xf32>
    %166 = vector.extract_strided_slice %153 {offsets = [0, 256], sizes = [2, 128], strides = [1, 1]} : vector<2x512xf32> to vector<2x128xf32>
    %167 = math.tanh %166 : vector<2x128xf32>
    %168 = vector.extract_strided_slice %153 {offsets = [0, 384], sizes = [2, 128], strides = [1, 1]} : vector<2x512xf32> to vector<2x128xf32>
    %169 = arith.negf %168 : vector<2x128xf32>
    %170 = math.exp %169 : vector<2x128xf32>
    %cst_36 = arith.constant 1.000000e+00 : f32
    %171 = vector.broadcast %cst_36 : f32 to vector<2x128xf32>
    %172 = arith.addf %171, %170 : vector<2x128xf32>
    %173 = arith.divf %171, %172 : vector<2x128xf32>
    %174 = arith.mulf %165, %148 : vector<2x128xf32>
    %175 = arith.mulf %159, %167 : vector<2x128xf32>
    %176 = arith.addf %174, %175 : vector<2x128xf32>
    %177 = math.tanh %176 : vector<2x128xf32>
    %178 = arith.mulf %173, %177 : vector<2x128xf32>
    %179 = vector.extract_strided_slice %6 {offsets = [12, 0], sizes = [2, 512], strides = [1, 1]} : vector<16x512xf32> to vector<2x512xf32>
    %cst_37 = arith.constant dense<0.000000e+00> : vector<2x512xf32>
    %180 = tpu.matmul %178, %1, %cst_37 {dimension_numbers = #tpu.dot_dimension_numbers<[1], [0], [0], [1], [0, 0, 1, 1], [], []>} : vector<2x128xf32>, vector<128x512xf32>, vector<2x512xf32> -> vector<2x512xf32>
    %181 = arith.addf %179, %180 : vector<2x512xf32>
    %182 = vector.extract_strided_slice %181 {offsets = [0, 0], sizes = [2, 128], strides = [1, 1]} : vector<2x512xf32> to vector<2x128xf32>
    %183 = arith.negf %182 : vector<2x128xf32>
    %184 = math.exp %183 : vector<2x128xf32>
    %cst_38 = arith.constant 1.000000e+00 : f32
    %185 = vector.broadcast %cst_38 : f32 to vector<2x128xf32>
    %186 = arith.addf %185, %184 : vector<2x128xf32>
    %187 = arith.divf %185, %186 : vector<2x128xf32>
    %188 = vector.extract_strided_slice %181 {offsets = [0, 128], sizes = [2, 128], strides = [1, 1]} : vector<2x512xf32> to vector<2x128xf32>
    %189 = arith.negf %188 : vector<2x128xf32>
    %190 = math.exp %189 : vector<2x128xf32>
    %cst_39 = arith.constant 1.000000e+00 : f32
    %191 = vector.broadcast %cst_39 : f32 to vector<2x128xf32>
    %192 = arith.addf %191, %190 : vector<2x128xf32>
    %193 = arith.divf %191, %192 : vector<2x128xf32>
    %194 = vector.extract_strided_slice %181 {offsets = [0, 256], sizes = [2, 128], strides = [1, 1]} : vector<2x512xf32> to vector<2x128xf32>
    %195 = math.tanh %194 : vector<2x128xf32>
    %196 = vector.extract_strided_slice %181 {offsets = [0, 384], sizes = [2, 128], strides = [1, 1]} : vector<2x512xf32> to vector<2x128xf32>
    %197 = arith.negf %196 : vector<2x128xf32>
    %198 = math.exp %197 : vector<2x128xf32>
    %cst_40 = arith.constant 1.000000e+00 : f32
    %199 = vector.broadcast %cst_40 : f32 to vector<2x128xf32>
    %200 = arith.addf %199, %198 : vector<2x128xf32>
    %201 = arith.divf %199, %200 : vector<2x128xf32>
    %202 = arith.mulf %193, %176 : vector<2x128xf32>
    %203 = arith.mulf %187, %195 : vector<2x128xf32>
    %204 = arith.addf %202, %203 : vector<2x128xf32>
    %205 = math.tanh %204 : vector<2x128xf32>
    %206 = arith.mulf %201, %205 : vector<2x128xf32>
    %207 = vector.extract_strided_slice %6 {offsets = [14, 0], sizes = [2, 512], strides = [1, 1]} : vector<16x512xf32> to vector<2x512xf32>
    %cst_41 = arith.constant dense<0.000000e+00> : vector<2x512xf32>
    %208 = tpu.matmul %206, %1, %cst_41 {dimension_numbers = #tpu.dot_dimension_numbers<[1], [0], [0], [1], [0, 0, 1, 1], [], []>} : vector<2x128xf32>, vector<128x512xf32>, vector<2x512xf32> -> vector<2x512xf32>
    %209 = arith.addf %207, %208 : vector<2x512xf32>
    %210 = vector.extract_strided_slice %209 {offsets = [0, 0], sizes = [2, 128], strides = [1, 1]} : vector<2x512xf32> to vector<2x128xf32>
    %211 = arith.negf %210 : vector<2x128xf32>
    %212 = math.exp %211 : vector<2x128xf32>
    %cst_42 = arith.constant 1.000000e+00 : f32
    %213 = vector.broadcast %cst_42 : f32 to vector<2x128xf32>
    %214 = arith.addf %213, %212 : vector<2x128xf32>
    %215 = arith.divf %213, %214 : vector<2x128xf32>
    %216 = vector.extract_strided_slice %209 {offsets = [0, 128], sizes = [2, 128], strides = [1, 1]} : vector<2x512xf32> to vector<2x128xf32>
    %217 = arith.negf %216 : vector<2x128xf32>
    %218 = math.exp %217 : vector<2x128xf32>
    %cst_43 = arith.constant 1.000000e+00 : f32
    %219 = vector.broadcast %cst_43 : f32 to vector<2x128xf32>
    %220 = arith.addf %219, %218 : vector<2x128xf32>
    %221 = arith.divf %219, %220 : vector<2x128xf32>
    %222 = vector.extract_strided_slice %209 {offsets = [0, 256], sizes = [2, 128], strides = [1, 1]} : vector<2x512xf32> to vector<2x128xf32>
    %223 = math.tanh %222 : vector<2x128xf32>
    %224 = vector.extract_strided_slice %209 {offsets = [0, 384], sizes = [2, 128], strides = [1, 1]} : vector<2x512xf32> to vector<2x128xf32>
    %225 = arith.negf %224 : vector<2x128xf32>
    %226 = math.exp %225 : vector<2x128xf32>
    %cst_44 = arith.constant 1.000000e+00 : f32
    %227 = vector.broadcast %cst_44 : f32 to vector<2x128xf32>
    %228 = arith.addf %227, %226 : vector<2x128xf32>
    %229 = arith.divf %227, %228 : vector<2x128xf32>
    %230 = arith.mulf %221, %204 : vector<2x128xf32>
    %231 = arith.mulf %215, %223 : vector<2x128xf32>
    %232 = arith.addf %230, %231 : vector<2x128xf32>
    %233 = math.tanh %232 : vector<2x128xf32>
    %234 = arith.mulf %229, %233 : vector<2x128xf32>
    %235 = vector.extract_strided_slice %234 {offsets = [0, 0], sizes = [2, 64], strides = [1, 1]} : vector<2x128xf32> to vector<2x64xf32>
    %c0_45 = arith.constant 0 : index
    %c0_46 = arith.constant 0 : index
    %c0_47 = arith.constant 0 : index
    %236 = vector.load %arg12[%c0_45, %c0_46, %c0_47] : memref<2x2x64xf32, #tpu.memory_space<vmem>>, vector<1x2x64xf32>
    %237 = vector.shape_cast %236 : vector<1x2x64xf32> to vector<2x64xf32>
    %238 = vector.shape_cast %235 : vector<2x64xf32> to vector<1x2x64xf32>
    tpu.vector_store %arg12[%c0_45, %c0_46, %c0_47], %238 {strides = array<i32>} : memref<2x2x64xf32, #tpu.memory_space<vmem>>, vector<1x2x64xf32>,
    %239 = vector.extract_strided_slice %232 {offsets = [0, 0], sizes = [2, 64], strides = [1, 1]} : vector<2x128xf32> to vector<2x64xf32>
    %c0_48 = arith.constant 0 : index
    %c0_49 = arith.constant 0 : index
    %c0_50 = arith.constant 0 : index
    %240 = vector.load %arg13[%c0_48, %c0_49, %c0_50] : memref<2x2x64xf32, #tpu.memory_space<vmem>>, vector<1x2x64xf32>
    %241 = vector.shape_cast %240 : vector<1x2x64xf32> to vector<2x64xf32>
    %242 = vector.shape_cast %239 : vector<2x64xf32> to vector<1x2x64xf32>
    tpu.vector_store %arg13[%c0_48, %c0_49, %c0_50], %242 {strides = array<i32>} : memref<2x2x64xf32, #tpu.memory_space<vmem>>, vector<1x2x64xf32>,
    %243 = tpu.concatenate %38, %66, %94, %122, %150, %178, %206, %234 in 0 : vector<2x128xf32>, vector<2x128xf32>, vector<2x128xf32>, vector<2x128xf32>, vector<2x128xf32>, vector<2x128xf32>, vector<2x128xf32>, vector<2x128xf32> -> vector<16x128xf32>
    %c0_51 = arith.constant 0 : index
    %c0_52 = arith.constant 0 : index
    %244 = vector.load %arg5[%c0_51, %c0_52] : memref<128x512xf32, #tpu.memory_space<vmem>>, vector<128x512xf32>
    %c0_53 = arith.constant 0 : index
    %c0_54 = arith.constant 0 : index
    %245 = vector.load %arg4[%c0_53, %c0_54] : memref<128x512xf32, #tpu.memory_space<vmem>>, vector<128x512xf32>
    %cst_55 = arith.constant dense<0.000000e+00> : vector<16x512xf32>
    %246 = tpu.matmul %243, %245, %cst_55 {dimension_numbers = #tpu.dot_dimension_numbers<[1], [0], [0], [1], [0, 0, 1, 1], [], []>} : vector<16x128xf32>, vector<128x512xf32>, vector<16x512xf32> -> vector<16x512xf32>
    %c0_56 = arith.constant 0 : index
    %c0_57 = arith.constant 0 : index
    %247 = vector.load %arg6[%c0_56, %c0_57] : memref<1x512xf32, #tpu.memory_space<vmem>>, vector<1x512xf32>
    %248 = vector.broadcast %247 : vector<1x512xf32> to vector<16x512xf32>
    %249 = arith.addf %246, %248 : vector<16x512xf32>
    %c1 = arith.constant 1 : index
    %c0_58 = arith.constant 0 : index
    %c0_59 = arith.constant 0 : index
    %250 = vector.load %arg9[%c1, %c0_58, %c0_59] : memref<2x2x128xf32, #tpu.memory_space<vmem>>, vector<1x2x128xf32>
    %251 = vector.shape_cast %250 : vector<1x2x128xf32> to vector<2x128xf32>
    %c1_60 = arith.constant 1 : index
    %c0_61 = arith.constant 0 : index
    %c0_62 = arith.constant 0 : index
    %252 = vector.load %arg10[%c1_60, %c0_61, %c0_62] : memref<2x2x128xf32, #tpu.memory_space<vmem>>, vector<1x2x128xf32>
    %253 = vector.shape_cast %252 : vector<1x2x128xf32> to vector<2x128xf32>
    %254 = vector.extract_strided_slice %249 {offsets = [0, 0], sizes = [2, 512], strides = [1, 1]} : vector<16x512xf32> to vector<2x512xf32>
    %cst_63 = arith.constant dense<0.000000e+00> : vector<2x512xf32>
    %255 = tpu.matmul %251, %244, %cst_63 {dimension_numbers = #tpu.dot_dimension_numbers<[1], [0], [0], [1], [0, 0, 1, 1], [], []>} : vector<2x128xf32>, vector<128x512xf32>, vector<2x512xf32> -> vector<2x512xf32>
    %256 = arith.addf %254, %255 : vector<2x512xf32>
    %257 = vector.extract_strided_slice %256 {offsets = [0, 0], sizes = [2, 128], strides = [1, 1]} : vector<2x512xf32> to vector<2x128xf32>
    %258 = arith.negf %257 : vector<2x128xf32>
    %259 = math.exp %258 : vector<2x128xf32>
    %cst_64 = arith.constant 1.000000e+00 : f32
    %260 = vector.broadcast %cst_64 : f32 to vector<2x128xf32>
    %261 = arith.addf %260, %259 : vector<2x128xf32>
    %262 = arith.divf %260, %261 : vector<2x128xf32>
    %263 = vector.extract_strided_slice %256 {offsets = [0, 128], sizes = [2, 128], strides = [1, 1]} : vector<2x512xf32> to vector<2x128xf32>
    %264 = arith.negf %263 : vector<2x128xf32>
    %265 = math.exp %264 : vector<2x128xf32>
    %cst_65 = arith.constant 1.000000e+00 : f32
    %266 = vector.broadcast %cst_65 : f32 to vector<2x128xf32>
    %267 = arith.addf %266, %265 : vector<2x128xf32>
    %268 = arith.divf %266, %267 : vector<2x128xf32>
    %269 = vector.extract_strided_slice %256 {offsets = [0, 256], sizes = [2, 128], strides = [1, 1]} : vector<2x512xf32> to vector<2x128xf32>
    %270 = math.tanh %269 : vector<2x128xf32>
    %271 = vector.extract_strided_slice %256 {offsets = [0, 384], sizes = [2, 128], strides = [1, 1]} : vector<2x512xf32> to vector<2x128xf32>
    %272 = arith.negf %271 : vector<2x128xf32>
    %273 = math.exp %272 : vector<2x128xf32>
    %cst_66 = arith.constant 1.000000e+00 : f32
    %274 = vector.broadcast %cst_66 : f32 to vector<2x128xf32>
    %275 = arith.addf %274, %273 : vector<2x128xf32>
    %276 = arith.divf %274, %275 : vector<2x128xf32>
    %277 = arith.mulf %268, %253 : vector<2x128xf32>
    %278 = arith.mulf %262, %270 : vector<2x128xf32>
    %279 = arith.addf %277, %278 : vector<2x128xf32>
    %280 = math.tanh %279 : vector<2x128xf32>
    %281 = arith.mulf %276, %280 : vector<2x128xf32>
    %282 = vector.extract_strided_slice %249 {offsets = [2, 0], sizes = [2, 512], strides = [1, 1]} : vector<16x512xf32> to vector<2x512xf32>
    %cst_67 = arith.constant dense<0.000000e+00> : vector<2x512xf32>
    %283 = tpu.matmul %281, %244, %cst_67 {dimension_numbers = #tpu.dot_dimension_numbers<[1], [0], [0], [1], [0, 0, 1, 1], [], []>} : vector<2x128xf32>, vector<128x512xf32>, vector<2x512xf32> -> vector<2x512xf32>
    %284 = arith.addf %282, %283 : vector<2x512xf32>
    %285 = vector.extract_strided_slice %284 {offsets = [0, 0], sizes = [2, 128], strides = [1, 1]} : vector<2x512xf32> to vector<2x128xf32>
    %286 = arith.negf %285 : vector<2x128xf32>
    %287 = math.exp %286 : vector<2x128xf32>
    %cst_68 = arith.constant 1.000000e+00 : f32
    %288 = vector.broadcast %cst_68 : f32 to vector<2x128xf32>
    %289 = arith.addf %288, %287 : vector<2x128xf32>
    %290 = arith.divf %288, %289 : vector<2x128xf32>
    %291 = vector.extract_strided_slice %284 {offsets = [0, 128], sizes = [2, 128], strides = [1, 1]} : vector<2x512xf32> to vector<2x128xf32>
    %292 = arith.negf %291 : vector<2x128xf32>
    %293 = math.exp %292 : vector<2x128xf32>
    %cst_69 = arith.constant 1.000000e+00 : f32
    %294 = vector.broadcast %cst_69 : f32 to vector<2x128xf32>
    %295 = arith.addf %294, %293 : vector<2x128xf32>
    %296 = arith.divf %294, %295 : vector<2x128xf32>
    %297 = vector.extract_strided_slice %284 {offsets = [0, 256], sizes = [2, 128], strides = [1, 1]} : vector<2x512xf32> to vector<2x128xf32>
    %298 = math.tanh %297 : vector<2x128xf32>
    %299 = vector.extract_strided_slice %284 {offsets = [0, 384], sizes = [2, 128], strides = [1, 1]} : vector<2x512xf32> to vector<2x128xf32>
    %300 = arith.negf %299 : vector<2x128xf32>
    %301 = math.exp %300 : vector<2x128xf32>
    %cst_70 = arith.constant 1.000000e+00 : f32
    %302 = vector.broadcast %cst_70 : f32 to vector<2x128xf32>
    %303 = arith.addf %302, %301 : vector<2x128xf32>
    %304 = arith.divf %302, %303 : vector<2x128xf32>
    %305 = arith.mulf %296, %279 : vector<2x128xf32>
    %306 = arith.mulf %290, %298 : vector<2x128xf32>
    %307 = arith.addf %305, %306 : vector<2x128xf32>
    %308 = math.tanh %307 : vector<2x128xf32>
    %309 = arith.mulf %304, %308 : vector<2x128xf32>
    %310 = vector.extract_strided_slice %249 {offsets = [4, 0], sizes = [2, 512], strides = [1, 1]} : vector<16x512xf32> to vector<2x512xf32>
    %cst_71 = arith.constant dense<0.000000e+00> : vector<2x512xf32>
    %311 = tpu.matmul %309, %244, %cst_71 {dimension_numbers = #tpu.dot_dimension_numbers<[1], [0], [0], [1], [0, 0, 1, 1], [], []>} : vector<2x128xf32>, vector<128x512xf32>, vector<2x512xf32> -> vector<2x512xf32>
    %312 = arith.addf %310, %311 : vector<2x512xf32>
    %313 = vector.extract_strided_slice %312 {offsets = [0, 0], sizes = [2, 128], strides = [1, 1]} : vector<2x512xf32> to vector<2x128xf32>
    %314 = arith.negf %313 : vector<2x128xf32>
    %315 = math.exp %314 : vector<2x128xf32>
    %cst_72 = arith.constant 1.000000e+00 : f32
    %316 = vector.broadcast %cst_72 : f32 to vector<2x128xf32>
    %317 = arith.addf %316, %315 : vector<2x128xf32>
    %318 = arith.divf %316, %317 : vector<2x128xf32>
    %319 = vector.extract_strided_slice %312 {offsets = [0, 128], sizes = [2, 128], strides = [1, 1]} : vector<2x512xf32> to vector<2x128xf32>
    %320 = arith.negf %319 : vector<2x128xf32>
    %321 = math.exp %320 : vector<2x128xf32>
    %cst_73 = arith.constant 1.000000e+00 : f32
    %322 = vector.broadcast %cst_73 : f32 to vector<2x128xf32>
    %323 = arith.addf %322, %321 : vector<2x128xf32>
    %324 = arith.divf %322, %323 : vector<2x128xf32>
    %325 = vector.extract_strided_slice %312 {offsets = [0, 256], sizes = [2, 128], strides = [1, 1]} : vector<2x512xf32> to vector<2x128xf32>
    %326 = math.tanh %325 : vector<2x128xf32>
    %327 = vector.extract_strided_slice %312 {offsets = [0, 384], sizes = [2, 128], strides = [1, 1]} : vector<2x512xf32> to vector<2x128xf32>
    %328 = arith.negf %327 : vector<2x128xf32>
    %329 = math.exp %328 : vector<2x128xf32>
    %cst_74 = arith.constant 1.000000e+00 : f32
    %330 = vector.broadcast %cst_74 : f32 to vector<2x128xf32>
    %331 = arith.addf %330, %329 : vector<2x128xf32>
    %332 = arith.divf %330, %331 : vector<2x128xf32>
    %333 = arith.mulf %324, %307 : vector<2x128xf32>
    %334 = arith.mulf %318, %326 : vector<2x128xf32>
    %335 = arith.addf %333, %334 : vector<2x128xf32>
    %336 = math.tanh %335 : vector<2x128xf32>
    %337 = arith.mulf %332, %336 : vector<2x128xf32>
    %338 = vector.extract_strided_slice %249 {offsets = [6, 0], sizes = [2, 512], strides = [1, 1]} : vector<16x512xf32> to vector<2x512xf32>
    %cst_75 = arith.constant dense<0.000000e+00> : vector<2x512xf32>
    %339 = tpu.matmul %337, %244, %cst_75 {dimension_numbers = #tpu.dot_dimension_numbers<[1], [0], [0], [1], [0, 0, 1, 1], [], []>} : vector<2x128xf32>, vector<128x512xf32>, vector<2x512xf32> -> vector<2x512xf32>
    %340 = arith.addf %338, %339 : vector<2x512xf32>
    %341 = vector.extract_strided_slice %340 {offsets = [0, 0], sizes = [2, 128], strides = [1, 1]} : vector<2x512xf32> to vector<2x128xf32>
    %342 = arith.negf %341 : vector<2x128xf32>
    %343 = math.exp %342 : vector<2x128xf32>
    %cst_76 = arith.constant 1.000000e+00 : f32
    %344 = vector.broadcast %cst_76 : f32 to vector<2x128xf32>
    %345 = arith.addf %344, %343 : vector<2x128xf32>
    %346 = arith.divf %344, %345 : vector<2x128xf32>
    %347 = vector.extract_strided_slice %340 {offsets = [0, 128], sizes = [2, 128], strides = [1, 1]} : vector<2x512xf32> to vector<2x128xf32>
    %348 = arith.negf %347 : vector<2x128xf32>
    %349 = math.exp %348 : vector<2x128xf32>
    %cst_77 = arith.constant 1.000000e+00 : f32
    %350 = vector.broadcast %cst_77 : f32 to vector<2x128xf32>
    %351 = arith.addf %350, %349 : vector<2x128xf32>
    %352 = arith.divf %350, %351 : vector<2x128xf32>
    %353 = vector.extract_strided_slice %340 {offsets = [0, 256], sizes = [2, 128], strides = [1, 1]} : vector<2x512xf32> to vector<2x128xf32>
    %354 = math.tanh %353 : vector<2x128xf32>
    %355 = vector.extract_strided_slice %340 {offsets = [0, 384], sizes = [2, 128], strides = [1, 1]} : vector<2x512xf32> to vector<2x128xf32>
    %356 = arith.negf %355 : vector<2x128xf32>
    %357 = math.exp %356 : vector<2x128xf32>
    %cst_78 = arith.constant 1.000000e+00 : f32
    %358 = vector.broadcast %cst_78 : f32 to vector<2x128xf32>
    %359 = arith.addf %358, %357 : vector<2x128xf32>
    %360 = arith.divf %358, %359 : vector<2x128xf32>
    %361 = arith.mulf %352, %335 : vector<2x128xf32>
    %362 = arith.mulf %346, %354 : vector<2x128xf32>
    %363 = arith.addf %361, %362 : vector<2x128xf32>
    %364 = math.tanh %363 : vector<2x128xf32>
    %365 = arith.mulf %360, %364 : vector<2x128xf32>
    %366 = vector.extract_strided_slice %249 {offsets = [8, 0], sizes = [2, 512], strides = [1, 1]} : vector<16x512xf32> to vector<2x512xf32>
    %cst_79 = arith.constant dense<0.000000e+00> : vector<2x512xf32>
    %367 = tpu.matmul %365, %244, %cst_79 {dimension_numbers = #tpu.dot_dimension_numbers<[1], [0], [0], [1], [0, 0, 1, 1], [], []>} : vector<2x128xf32>, vector<128x512xf32>, vector<2x512xf32> -> vector<2x512xf32>
    %368 = arith.addf %366, %367 : vector<2x512xf32>
    %369 = vector.extract_strided_slice %368 {offsets = [0, 0], sizes = [2, 128], strides = [1, 1]} : vector<2x512xf32> to vector<2x128xf32>
    %370 = arith.negf %369 : vector<2x128xf32>
    %371 = math.exp %370 : vector<2x128xf32>
    %cst_80 = arith.constant 1.000000e+00 : f32
    %372 = vector.broadcast %cst_80 : f32 to vector<2x128xf32>
    %373 = arith.addf %372, %371 : vector<2x128xf32>
    %374 = arith.divf %372, %373 : vector<2x128xf32>
    %375 = vector.extract_strided_slice %368 {offsets = [0, 128], sizes = [2, 128], strides = [1, 1]} : vector<2x512xf32> to vector<2x128xf32>
    %376 = arith.negf %375 : vector<2x128xf32>
    %377 = math.exp %376 : vector<2x128xf32>
    %cst_81 = arith.constant 1.000000e+00 : f32
    %378 = vector.broadcast %cst_81 : f32 to vector<2x128xf32>
    %379 = arith.addf %378, %377 : vector<2x128xf32>
    %380 = arith.divf %378, %379 : vector<2x128xf32>
    %381 = vector.extract_strided_slice %368 {offsets = [0, 256], sizes = [2, 128], strides = [1, 1]} : vector<2x512xf32> to vector<2x128xf32>
    %382 = math.tanh %381 : vector<2x128xf32>
    %383 = vector.extract_strided_slice %368 {offsets = [0, 384], sizes = [2, 128], strides = [1, 1]} : vector<2x512xf32> to vector<2x128xf32>
    %384 = arith.negf %383 : vector<2x128xf32>
    %385 = math.exp %384 : vector<2x128xf32>
    %cst_82 = arith.constant 1.000000e+00 : f32
    %386 = vector.broadcast %cst_82 : f32 to vector<2x128xf32>
    %387 = arith.addf %386, %385 : vector<2x128xf32>
    %388 = arith.divf %386, %387 : vector<2x128xf32>
    %389 = arith.mulf %380, %363 : vector<2x128xf32>
    %390 = arith.mulf %374, %382 : vector<2x128xf32>
    %391 = arith.addf %389, %390 : vector<2x128xf32>
    %392 = math.tanh %391 : vector<2x128xf32>
    %393 = arith.mulf %388, %392 : vector<2x128xf32>
    %394 = vector.extract_strided_slice %249 {offsets = [10, 0], sizes = [2, 512], strides = [1, 1]} : vector<16x512xf32> to vector<2x512xf32>
    %cst_83 = arith.constant dense<0.000000e+00> : vector<2x512xf32>
    %395 = tpu.matmul %393, %244, %cst_83 {dimension_numbers = #tpu.dot_dimension_numbers<[1], [0], [0], [1], [0, 0, 1, 1], [], []>} : vector<2x128xf32>, vector<128x512xf32>, vector<2x512xf32> -> vector<2x512xf32>
    %396 = arith.addf %394, %395 : vector<2x512xf32>
    %397 = vector.extract_strided_slice %396 {offsets = [0, 0], sizes = [2, 128], strides = [1, 1]} : vector<2x512xf32> to vector<2x128xf32>
    %398 = arith.negf %397 : vector<2x128xf32>
    %399 = math.exp %398 : vector<2x128xf32>
    %cst_84 = arith.constant 1.000000e+00 : f32
    %400 = vector.broadcast %cst_84 : f32 to vector<2x128xf32>
    %401 = arith.addf %400, %399 : vector<2x128xf32>
    %402 = arith.divf %400, %401 : vector<2x128xf32>
    %403 = vector.extract_strided_slice %396 {offsets = [0, 128], sizes = [2, 128], strides = [1, 1]} : vector<2x512xf32> to vector<2x128xf32>
    %404 = arith.negf %403 : vector<2x128xf32>
    %405 = math.exp %404 : vector<2x128xf32>
    %cst_85 = arith.constant 1.000000e+00 : f32
    %406 = vector.broadcast %cst_85 : f32 to vector<2x128xf32>
    %407 = arith.addf %406, %405 : vector<2x128xf32>
    %408 = arith.divf %406, %407 : vector<2x128xf32>
    %409 = vector.extract_strided_slice %396 {offsets = [0, 256], sizes = [2, 128], strides = [1, 1]} : vector<2x512xf32> to vector<2x128xf32>
    %410 = math.tanh %409 : vector<2x128xf32>
    %411 = vector.extract_strided_slice %396 {offsets = [0, 384], sizes = [2, 128], strides = [1, 1]} : vector<2x512xf32> to vector<2x128xf32>
    %412 = arith.negf %411 : vector<2x128xf32>
    %413 = math.exp %412 : vector<2x128xf32>
    %cst_86 = arith.constant 1.000000e+00 : f32
    %414 = vector.broadcast %cst_86 : f32 to vector<2x128xf32>
    %415 = arith.addf %414, %413 : vector<2x128xf32>
    %416 = arith.divf %414, %415 : vector<2x128xf32>
    %417 = arith.mulf %408, %391 : vector<2x128xf32>
    %418 = arith.mulf %402, %410 : vector<2x128xf32>
    %419 = arith.addf %417, %418 : vector<2x128xf32>
    %420 = math.tanh %419 : vector<2x128xf32>
    %421 = arith.mulf %416, %420 : vector<2x128xf32>
    %422 = vector.extract_strided_slice %249 {offsets = [12, 0], sizes = [2, 512], strides = [1, 1]} : vector<16x512xf32> to vector<2x512xf32>
    %cst_87 = arith.constant dense<0.000000e+00> : vector<2x512xf32>
    %423 = tpu.matmul %421, %244, %cst_87 {dimension_numbers = #tpu.dot_dimension_numbers<[1], [0], [0], [1], [0, 0, 1, 1], [], []>} : vector<2x128xf32>, vector<128x512xf32>, vector<2x512xf32> -> vector<2x512xf32>
    %424 = arith.addf %422, %423 : vector<2x512xf32>
    %425 = vector.extract_strided_slice %424 {offsets = [0, 0], sizes = [2, 128], strides = [1, 1]} : vector<2x512xf32> to vector<2x128xf32>
    %426 = arith.negf %425 : vector<2x128xf32>
    %427 = math.exp %426 : vector<2x128xf32>
    %cst_88 = arith.constant 1.000000e+00 : f32
    %428 = vector.broadcast %cst_88 : f32 to vector<2x128xf32>
    %429 = arith.addf %428, %427 : vector<2x128xf32>
    %430 = arith.divf %428, %429 : vector<2x128xf32>
    %431 = vector.extract_strided_slice %424 {offsets = [0, 128], sizes = [2, 128], strides = [1, 1]} : vector<2x512xf32> to vector<2x128xf32>
    %432 = arith.negf %431 : vector<2x128xf32>
    %433 = math.exp %432 : vector<2x128xf32>
    %cst_89 = arith.constant 1.000000e+00 : f32
    %434 = vector.broadcast %cst_89 : f32 to vector<2x128xf32>
    %435 = arith.addf %434, %433 : vector<2x128xf32>
    %436 = arith.divf %434, %435 : vector<2x128xf32>
    %437 = vector.extract_strided_slice %424 {offsets = [0, 256], sizes = [2, 128], strides = [1, 1]} : vector<2x512xf32> to vector<2x128xf32>
    %438 = math.tanh %437 : vector<2x128xf32>
    %439 = vector.extract_strided_slice %424 {offsets = [0, 384], sizes = [2, 128], strides = [1, 1]} : vector<2x512xf32> to vector<2x128xf32>
    %440 = arith.negf %439 : vector<2x128xf32>
    %441 = math.exp %440 : vector<2x128xf32>
    %cst_90 = arith.constant 1.000000e+00 : f32
    %442 = vector.broadcast %cst_90 : f32 to vector<2x128xf32>
    %443 = arith.addf %442, %441 : vector<2x128xf32>
    %444 = arith.divf %442, %443 : vector<2x128xf32>
    %445 = arith.mulf %436, %419 : vector<2x128xf32>
    %446 = arith.mulf %430, %438 : vector<2x128xf32>
    %447 = arith.addf %445, %446 : vector<2x128xf32>
    %448 = math.tanh %447 : vector<2x128xf32>
    %449 = arith.mulf %444, %448 : vector<2x128xf32>
    %450 = vector.extract_strided_slice %249 {offsets = [14, 0], sizes = [2, 512], strides = [1, 1]} : vector<16x512xf32> to vector<2x512xf32>
    %cst_91 = arith.constant dense<0.000000e+00> : vector<2x512xf32>
    %451 = tpu.matmul %449, %244, %cst_91 {dimension_numbers = #tpu.dot_dimension_numbers<[1], [0], [0], [1], [0, 0, 1, 1], [], []>} : vector<2x128xf32>, vector<128x512xf32>, vector<2x512xf32> -> vector<2x512xf32>
    %452 = arith.addf %450, %451 : vector<2x512xf32>
    %453 = vector.extract_strided_slice %452 {offsets = [0, 0], sizes = [2, 128], strides = [1, 1]} : vector<2x512xf32> to vector<2x128xf32>
    %454 = arith.negf %453 : vector<2x128xf32>
    %455 = math.exp %454 : vector<2x128xf32>
    %cst_92 = arith.constant 1.000000e+00 : f32
    %456 = vector.broadcast %cst_92 : f32 to vector<2x128xf32>
    %457 = arith.addf %456, %455 : vector<2x128xf32>
    %458 = arith.divf %456, %457 : vector<2x128xf32>
    %459 = vector.extract_strided_slice %452 {offsets = [0, 128], sizes = [2, 128], strides = [1, 1]} : vector<2x512xf32> to vector<2x128xf32>
    %460 = arith.negf %459 : vector<2x128xf32>
    %461 = math.exp %460 : vector<2x128xf32>
    %cst_93 = arith.constant 1.000000e+00 : f32
    %462 = vector.broadcast %cst_93 : f32 to vector<2x128xf32>
    %463 = arith.addf %462, %461 : vector<2x128xf32>
    %464 = arith.divf %462, %463 : vector<2x128xf32>
    %465 = vector.extract_strided_slice %452 {offsets = [0, 256], sizes = [2, 128], strides = [1, 1]} : vector<2x512xf32> to vector<2x128xf32>
    %466 = math.tanh %465 : vector<2x128xf32>
    %467 = vector.extract_strided_slice %452 {offsets = [0, 384], sizes = [2, 128], strides = [1, 1]} : vector<2x512xf32> to vector<2x128xf32>
    %468 = arith.negf %467 : vector<2x128xf32>
    %469 = math.exp %468 : vector<2x128xf32>
    %cst_94 = arith.constant 1.000000e+00 : f32
    %470 = vector.broadcast %cst_94 : f32 to vector<2x128xf32>
    %471 = arith.addf %470, %469 : vector<2x128xf32>
    %472 = arith.divf %470, %471 : vector<2x128xf32>
    %473 = arith.mulf %464, %447 : vector<2x128xf32>
    %474 = arith.mulf %458, %466 : vector<2x128xf32>
    %475 = arith.addf %473, %474 : vector<2x128xf32>
    %476 = math.tanh %475 : vector<2x128xf32>
    %477 = arith.mulf %472, %476 : vector<2x128xf32>
    %478 = vector.extract_strided_slice %477 {offsets = [0, 0], sizes = [2, 64], strides = [1, 1]} : vector<2x128xf32> to vector<2x64xf32>
    %c1_95 = arith.constant 1 : index
    %c0_96 = arith.constant 0 : index
    %c0_97 = arith.constant 0 : index
    %479 = vector.load %arg12[%c1_95, %c0_96, %c0_97] : memref<2x2x64xf32, #tpu.memory_space<vmem>>, vector<1x2x64xf32>
    %480 = vector.shape_cast %479 : vector<1x2x64xf32> to vector<2x64xf32>
    %481 = vector.shape_cast %478 : vector<2x64xf32> to vector<1x2x64xf32>
    tpu.vector_store %arg12[%c1_95, %c0_96, %c0_97], %481 {strides = array<i32>} : memref<2x2x64xf32, #tpu.memory_space<vmem>>, vector<1x2x64xf32>,
    %482 = vector.extract_strided_slice %475 {offsets = [0, 0], sizes = [2, 64], strides = [1, 1]} : vector<2x128xf32> to vector<2x64xf32>
    %c1_98 = arith.constant 1 : index
    %c0_99 = arith.constant 0 : index
    %c0_100 = arith.constant 0 : index
    %483 = vector.load %arg13[%c1_98, %c0_99, %c0_100] : memref<2x2x64xf32, #tpu.memory_space<vmem>>, vector<1x2x64xf32>
    %484 = vector.shape_cast %483 : vector<1x2x64xf32> to vector<2x64xf32>
    %485 = vector.shape_cast %482 : vector<2x64xf32> to vector<1x2x64xf32>
    tpu.vector_store %arg13[%c1_98, %c0_99, %c0_100], %485 {strides = array<i32>} : memref<2x2x64xf32, #tpu.memory_space<vmem>>, vector<1x2x64xf32>,
    %c0_101 = arith.constant 0 : index
    %c0_102 = arith.constant 0 : index
    %486 = vector.load %arg7[%c0_101, %c0_102] : memref<128x128xf32, #tpu.memory_space<vmem>>, vector<128x128xf32>
    %cst_103 = arith.constant dense<0.000000e+00> : vector<2x128xf32>
    %487 = tpu.matmul %477, %486, %cst_103 {dimension_numbers = #tpu.dot_dimension_numbers<[1], [0], [0], [1], [0, 0, 1, 1], [], []>} : vector<2x128xf32>, vector<128x128xf32>, vector<2x128xf32> -> vector<2x128xf32>
    %c0_104 = arith.constant 0 : index
    %c0_105 = arith.constant 0 : index
    %488 = vector.load %arg8[%c0_104, %c0_105] : memref<1x128xf32, #tpu.memory_space<vmem>>, vector<1x128xf32>
    %489 = vector.broadcast %488 : vector<1x128xf32> to vector<2x128xf32>
    %490 = arith.addf %487, %489 : vector<2x128xf32>
    %cst_106 = arith.constant dense<0xFF800000> : vector<2xf32>
    %491 = vector.multi_reduction <maximumf>, %490, %cst_106 [1] : vector<2x128xf32> to vector<2xf32>
    %492 = vector.shape_cast %491 : vector<2xf32> to vector<2x1xf32>
    %493 = vector.broadcast %492 : vector<2x1xf32> to vector<2x128xf32>
    %494 = arith.subf %490, %493 : vector<2x128xf32>
    %495 = math.exp %494 : vector<2x128xf32>
    %cst_107 = arith.constant dense<0.000000e+00> : vector<2xf32>
    %496 = vector.multi_reduction <add>, %495, %cst_107 [1] : vector<2x128xf32> to vector<2xf32>
    %497 = vector.shape_cast %496 : vector<2xf32> to vector<2x1xf32>
    %498 = math.log %497 : vector<2x1xf32>
    %499 = vector.broadcast %498 : vector<2x1xf32> to vector<2x128xf32>
    %500 = arith.subf %494, %499 : vector<2x128xf32>
    %c0_108 = arith.constant 0 : index
    %c0_109 = arith.constant 0 : index
    %501 = vector.load %arg11[%c0_108, %c0_109] : memref<2x128xf32, #tpu.memory_space<vmem>>, vector<2x128xf32>
    tpu.vector_store %arg11[%c0_108, %c0_109], %500 {strides = array<i32>} : memref<2x128xf32, #tpu.memory_space<vmem>>, vector<2x128xf32>,
    return
  }
}

</mosaic_0001>

<llo_original>
// kernel: custom_model_forward.1
$region0: #{custom_model_forward.1}
  #allocation0 [shape = 'u32[]', space=smem, size = 0x4, offset = 0x4, fixed_abs, tag = 'smem constant byte address 0x4 - core index']
  #allocation1 [shape = 'u32[144,128]{1,0:T(1,128)}', space=vmem, size = 0x12000, scoped, tag = 'internal scratch']
  %s0 = inlined_call_operand.vmem [shape: f32[16,32], index: 0, kind: input, shape index: {}]
  %s1 = inlined_call_operand.vmem [shape: f32[32,512], index: 1, kind: input, shape index: {}]
  %s2 = inlined_call_operand.vmem [shape: f32[128,512], index: 2, kind: input, shape index: {}]
  %s3 = inlined_call_operand.vmem [shape: f32[1,512], index: 3, kind: input, shape index: {}]
  %s4 = inlined_call_operand.vmem [shape: f32[128,512], index: 4, kind: input, shape index: {}]
  %s5 = inlined_call_operand.vmem [shape: f32[128,512], index: 5, kind: input, shape index: {}]
  %s6 = inlined_call_operand.vmem [shape: f32[1,512], index: 6, kind: input, shape index: {}]
  %s7 = inlined_call_operand.vmem [shape: f32[128,128], index: 7, kind: input, shape index: {}]
  %s8 = inlined_call_operand.vmem [shape: f32[1,128], index: 8, kind: input, shape index: {}]
  %s9 = inlined_call_operand.vmem [shape: f32[2,2,128], index: 9, kind: input, shape index: {}, may-alias: {9,10}]
  %s10 = inlined_call_operand.vmem [shape: f32[2,2,128], index: 10, kind: input, shape index: {}, may-alias: {9,10}]
  %s11 = inlined_call_operand.hbm [shape: f32[2,128], index: 11, kind: output, shape index: {0}]
  %s12 = inlined_call_operand.hbm [shape: f32[2,2,64], index: 12, kind: output, shape index: {1}]
  %s13 = inlined_call_operand.hbm [shape: f32[2,2,64], index: 13, kind: output, shape index: {2}]
  %14 = xla_tuple %s11, %s12, %s13
  %s15 = sld [smem:[#allocation0]]
  $region70: #{custom_model_forward.1} parent=0
    _
  %s17 = ssub.s32 1, %s15
  %s18 = scalar_select 0, %s17, %s15
  $region1: #{custom_model_forward.1} parent=0
    #allocation2 [shape = 'u8[1024]{0}', space=vmem, size = 0x400, scoped, tag = 'output window, operand 0, single buffered']
    #allocation3 [shape = 's32[1]{0}', space=sflag, size = 0x4, scoped, tag = 'scoped memory for custom_model_forward.1']
    #allocation4 [shape = 'u8[2048]{0}', space=vmem, size = 0x800, scoped, tag = 'output window, operand 1, single buffered']
    #allocation5 [shape = 's32[1]{0}', space=sflag, size = 0x4, scoped, tag = 'scoped memory for custom_model_forward.1']
    #allocation6 [shape = 'u8[2048]{0}', space=vmem, size = 0x800, scoped, tag = 'output window, operand 2, single buffered']
    %19 = vsyncpa [#allocation3], 0
    %20 = vsyncpa [#allocation5], 0
    // Predicated region
    $region2: #{custom_model_forward.1} parent=1 // pred_check
      _
    $region3: #{custom_model_forward.1} parent=1 // pred_check_branch
      %22 = sbr.rel (0) target = $region5
    $region4: #{custom_model_forward.1} parent=1 // pred_region
      _
    $region5: #{custom_model_forward.1} parent=1 // pred_fallthru
      _
    // Predicated region
    $region6: #{custom_model_forward.1} parent=1 // pred_check
      _
    $region7: #{custom_model_forward.1} parent=1 // pred_check_branch
      %24 = sbr.rel (0) target = $region9
    $region8: #{custom_model_forward.1} parent=1 // pred_region
      _
    $region9: #{custom_model_forward.1} parent=1 // pred_fallthru
      _
    // Predicated region
    $region10: #{custom_model_forward.1} parent=1 // pred_check
      _
    $region11: #{custom_model_forward.1} parent=1 // pred_check_branch
      %26 = sbr.rel (0) target = $region13
    $region12: #{custom_model_forward.1} parent=1 // pred_region
      _
    $region13: #{custom_model_forward.1} parent=1 // pred_fallthru
      _
    // Predicated region
    $region14: #{custom_model_forward.1} parent=1 // pred_check
      _
    $region15: #{custom_model_forward.1} parent=1 // pred_check_branch
      %28 = sbr.rel (0) target = $region17
    $region16: #{custom_model_forward.1} parent=1 // pred_region
      _
    $region17: #{custom_model_forward.1} parent=1 // pred_fallthru
      _
    // Predicated region
    $region18: #{custom_model_forward.1} parent=1 // pred_check
      _
    $region19: #{custom_model_forward.1} parent=1 // pred_check_branch
      %30 = sbr.rel (0) target = $region21
    $region20: #{custom_model_forward.1} parent=1 // pred_region
      _
    $region21: #{custom_model_forward.1} parent=1 // pred_fallthru
      _
    // Predicated region
    $region22: #{custom_model_forward.1} parent=1 // pred_check
      _
    $region23: #{custom_model_forward.1} parent=1 // pred_check_branch
      %32 = sbr.rel (0) target = $region25
    $region24: #{custom_model_forward.1} parent=1 // pred_region
      _
    $region25: #{custom_model_forward.1} parent=1 // pred_fallthru
      _
    // Predicated region
    $region26: #{custom_model_forward.1} parent=1 // pred_check
      _
    $region27: #{custom_model_forward.1} parent=1 // pred_check_branch
      %34 = sbr.rel (0) target = $region29
    $region28: #{custom_model_forward.1} parent=1 // pred_region
      _
    $region29: #{custom_model_forward.1} parent=1 // pred_fallthru
      _
    // Predicated region
    $region30: #{custom_model_forward.1} parent=1 // pred_check
      _
    $region31: #{custom_model_forward.1} parent=1 // pred_check_branch
      %36 = sbr.rel (0) target = $region33
    $region32: #{custom_model_forward.1} parent=1 // pred_region
      _
    $region33: #{custom_model_forward.1} parent=1 // pred_fallthru
      _
    // Predicated region
    $region34: #{custom_model_forward.1} parent=1 // pred_check
      _
    $region35: #{custom_model_forward.1} parent=1 // pred_check_branch
      %38 = sbr.rel (0) target = $region37
    $region36: #{custom_model_forward.1} parent=1 // pred_region
      _
    $region37: #{custom_model_forward.1} parent=1 // pred_fallthru
      _
    // Predicated region
    $region38: #{custom_model_forward.1} parent=1 // pred_check
      _
    $region39: #{custom_model_forward.1} parent=1 // pred_check_branch
      %40 = sbr.rel (0) target = $region41
    $region40: #{custom_model_forward.1} parent=1 // pred_region
      _
    $region41: #{custom_model_forward.1} parent=1 // pred_fallthru
      _
    // Predicated region
    $region42: #{custom_model_forward.1} parent=1 // pred_check
      _
    $region43: #{custom_model_forward.1} parent=1 // pred_check_branch
      %42 = sbr.rel (0) target = $region45
    $region44: #{custom_model_forward.1} parent=1 // pred_region
      _
    $region45: #{custom_model_forward.1} parent=1 // pred_fallthru
      _
    %v43 = vld [vmem:[%s0] sm:$0xff]
    %v44 = vld [vmem:[%s0 + $0x8] sm:$0xff]
    %v45 = vld [vmem:[%s2] sm:$0xff]
    %v46 = vld [vmem:[%s2 + $0x8] sm:$0xff]
    %v47 = vld [vmem:[%s2 + $0x10] sm:$0xff]
    %v48 = vld [vmem:[%s2 + $0x18] sm:$0xff]
    %v49 = vld [vmem:[%s2 + $0x20] sm:$0xff]
    %v50 = vld [vmem:[%s2 + $0x28] sm:$0xff]
    %v51 = vld [vmem:[%s2 + $0x30] sm:$0xff]
    %v52 = vld [vmem:[%s2 + $0x38] sm:$0xff]
    %v53 = vld [vmem:[%s2 + $0x40] sm:$0xff]
    %v54 = vld [vmem:[%s2 + $0x48] sm:$0xff]
    %v55 = vld [vmem:[%s2 + $0x50] sm:$0xff]
    %v56 = vld [vmem:[%s2 + $0x58] sm:$0xff]
    %v57 = vld [vmem:[%s2 + $0x60] sm:$0xff]
    %v58 = vld [vmem:[%s2 + $0x68] sm:$0xff]
    %v59 = vld [vmem:[%s2 + $0x70] sm:$0xff]
    %v60 = vld [vmem:[%s2 + $0x78] sm:$0xff]
    %v61 = vld [vmem:[%s2 + $0x80] sm:$0xff]
    %v62 = vld [vmem:[%s2 + $0x88] sm:$0xff]
    %v63 = vld [vmem:[%s2 + $0x90] sm:$0xff]
    %v64 = vld [vmem:[%s2 + $0x98] sm:$0xff]
    %v65 = vld [vmem:[%s2 + $0xa0] sm:$0xff]
    %v66 = vld [vmem:[%s2 + $0xa8] sm:$0xff]
    %v67 = vld [vmem:[%s2 + $0xb0] sm:$0xff]
    %v68 = vld [vmem:[%s2 + $0xb8] sm:$0xff]
    %v69 = vld [vmem:[%s2 + $0xc0] sm:$0xff]
    %v70 = vld [vmem:[%s2 + $0xc8] sm:$0xff]
    %v71 = vld [vmem:[%s2 + $0xd0] sm:$0xff]
    %v72 = vld [vmem:[%s2 + $0xd8] sm:$0xff]
    %v73 = vld [vmem:[%s2 + $0xe0] sm:$0xff]
    %v74 = vld [vmem:[%s2 + $0xe8] sm:$0xff]
    %v75 = vld [vmem:[%s2 + $0xf0] sm:$0xff]
    %v76 = vld [vmem:[%s2 + $0xf8] sm:$0xff]
    %v77 = vld [vmem:[%s2 + $0x100] sm:$0xff]
    %v78 = vld [vmem:[%s2 + $0x108] sm:$0xff]
    %v79 = vld [vmem:[%s2 + $0x110] sm:$0xff]
    %v80 = vld [vmem:[%s2 + $0x118] sm:$0xff]
    %v81 = vld [vmem:[%s2 + $0x120] sm:$0xff]
    %v82 = vld [vmem:[%s2 + $0x128] sm:$0xff]
    %v83 = vld [vmem:[%s2 + $0x130] sm:$0xff]
    %v84 = vld [vmem:[%s2 + $0x138] sm:$0xff]
    %v85 = vld [vmem:[%s2 + $0x140] sm:$0xff]
    %v86 = vld [vmem:[%s2 + $0x148] sm:$0xff]
    %v87 = vld [vmem:[%s2 + $0x150] sm:$0xff]
    %v88 = vld [vmem:[%s2 + $0x158] sm:$0xff]
    %v89 = vld [vmem:[%s2 + $0x160] sm:$0xff]
    %v90 = vld [vmem:[%s2 + $0x168] sm:$0xff]
    %v91 = vld [vmem:[%s2 + $0x170] sm:$0xff]
    %v92 = vld [vmem:[%s2 + $0x178] sm:$0xff]
    %v93 = vld [vmem:[%s2 + $0x180] sm:$0xff]
    %v94 = vld [vmem:[%s2 + $0x188] sm:$0xff]
    %v95 = vld [vmem:[%s2 + $0x190] sm:$0xff]
    %v96 = vld [vmem:[%s2 + $0x198] sm:$0xff]
    %v97 = vld [vmem:[%s2 + $0x1a0] sm:$0xff]
    %v98 = vld [vmem:[%s2 + $0x1a8] sm:$0xff]
    %v99 = vld [vmem:[%s2 + $0x1b0] sm:$0xff]
    %v100 = vld [vmem:[%s2 + $0x1b8] sm:$0xff]
    %v101 = vld [vmem:[%s2 + $0x1c0] sm:$0xff]
    %v102 = vld [vmem:[%s2 + $0x1c8] sm:$0xff]
    %v103 = vld [vmem:[%s2 + $0x1d0] sm:$0xff]
    %v104 = vld [vmem:[%s2 + $0x1d8] sm:$0xff]
    %v105 = vld [vmem:[%s2 + $0x1e0] sm:$0xff]
    %v106 = vld [vmem:[%s2 + $0x1e8] sm:$0xff]
    %v107 = vld [vmem:[%s2 + $0x1f0] sm:$0xff]
    %v108 = vld [vmem:[%s2 + $0x1f8] sm:$0xff]
    %v109 = vld [vmem:[%s1] sm:$0xff]
    %v110 = vld [vmem:[%s1 + $0x8] sm:$0xff]
    %v111 = vld [vmem:[%s1 + $0x10] sm:$0xff]
    %v112 = vld [vmem:[%s1 + $0x18] sm:$0xff]
    %v113 = vld [vmem:[%s1 + $0x20] sm:$0xff]
    %v114 = vld [vmem:[%s1 + $0x28] sm:$0xff]
    %v115 = vld [vmem:[%s1 + $0x30] sm:$0xff]
    %v116 = vld [vmem:[%s1 + $0x38] sm:$0xff]
    %v117 = vld [vmem:[%s1 + $0x40] sm:$0xff]
    %v118 = vld [vmem:[%s1 + $0x48] sm:$0xff]
    %v119 = vld [vmem:[%s1 + $0x50] sm:$0xff]
    %v120 = vld [vmem:[%s1 + $0x58] sm:$0xff]
    %v121 = vld [vmem:[%s1 + $0x60] sm:$0xff]
    %v122 = vld [vmem:[%s1 + $0x68] sm:$0xff]
    %v123 = vld [vmem:[%s1 + $0x70] sm:$0xff]
    %v124 = vld [vmem:[%s1 + $0x78] sm:$0xff]
    %v125 = vld [vmem:[%s3] sm:$0xf]
    %v127 = vlaneseq
    %v128 = vshrl.u32 %v127, 7
    %v129 = vsub.s32 0, %v128
    %v130 = vrot.slane %v125, %v129
    %v131 = vlaneseq
    %v132 = vshrl.u32 %v131, 7
    %v133 = vsub.s32 1, %v132
    %v134 = vrot.slane %v125, %v133
    %v135 = vlaneseq
    %v136 = vshrl.u32 %v135, 7
    %v137 = vsub.s32 2, %v136
    %v138 = vrot.slane %v125, %v137
    %v139 = vlaneseq
    %v140 = vshrl.u32 %v139, 7
    %v141 = vsub.s32 3, %v140
    %v142 = vrot.slane %v125, %v141
    %vm147 = vcmask 261120
    %v149 = vsel %vm147, %v43, 0
    %v152 = vsel %vm147, %v44, 0
    %154 = vmatprep.subr.mxu0 0.0
    %155 = vmatpush1.msra.mxu0 0.0
    %156 = vmatprep.subr.mxu0 0.0
    %157 = vmatpush1.msra.mxu0 0.0
    %158 = vmatprep.subr.mxu0 0.0
    %159 = vmatpush1.msra.mxu0 0.0
    %160 = vmatprep.subr.mxu0 0.0
    %161 = vmatpush1.msra.mxu0 0.0
    %162 = vmatprep.subr.mxu0 0.0
    %163 = vmatpush1.msra.mxu0 0.0
    %164 = vmatprep.subr.mxu0 0.0
    %165 = vmatpush1.msra.mxu0 0.0
    %166 = vmatprep.subr.mxu0 0.0
    %167 = vmatpush1.msra.mxu0 0.0
    %168 = vmatprep.subr.mxu0 0.0
    %169 = vmatpush1.msra.mxu0 0.0
    %170 = vmatprep.subr.mxu0 0.0
    %171 = vmatpush1.msra.mxu0 0.0
    %172 = vmatprep.subr.mxu0 0.0
    %173 = vmatpush1.msra.mxu0 0.0
    %174 = vmatprep.subr.mxu0 0.0
    %175 = vmatpush1.msra.mxu0 0.0
    %176 = vmatprep.subr.mxu0 0.0
    %177 = vmatpush1.msra.mxu0 0.0
    %178 = vmatprep.subr.mxu0 %v122
    %179 = vmatpush1.msra.mxu0 %v121
    %180 = vmatprep.subr.mxu0 %v118
    %181 = vmatpush1.msra.mxu0 %v117
    %182 = vmatprep.subr.mxu0 %v114
    %183 = vmatpush1.msra.mxu0 %v113
    %184 = vmatprep.subr.mxu0 %v110
    %185 = vmatpush1.msra.mxu0 %v109
    %186 = vmatprep.subr.mxu0 0.0
    %187 = vmatpush2.msra.mxu0 0.0
    %188 = vmatprep.subr.mxu0 0.0
    %189 = vmatpush2.msra.mxu0 0.0
    %190 = vmatprep.subr.mxu0 0.0
    %191 = vmatpush2.msra.mxu0 0.0
    %192 = vmatprep.subr.mxu0 0.0
    %193 = vmatpush2.msra.mxu0 0.0
    %194 = vmatprep.subr.mxu0 0.0
    %195 = vmatpush2.msra.mxu0 0.0
    %196 = vmatprep.subr.mxu0 0.0
    %197 = vmatpush2.msra.mxu0 0.0
    %198 = vmatprep.subr.mxu0 0.0
    %199 = vmatpush2.msra.mxu0 0.0
    %200 = vmatprep.subr.mxu0 0.0
    %201 = vmatpush2.msra.mxu0 0.0
    %202 = vmatprep.subr.mxu0 0.0
    %203 = vmatpush2.msra.mxu0 0.0
    %204 = vmatprep.subr.mxu0 0.0
    %205 = vmatpush2.msra.mxu0 0.0
    %206 = vmatprep.subr.mxu0 0.0
    %207 = vmatpush2.msra.mxu0 0.0
    %208 = vmatprep.subr.mxu0 0.0
    %209 = vmatpush2.msra.mxu0 0.0
    %210 = vmatprep.subr.mxu0 0.0
    %211 = vmatpush2.msra.mxu0 0.0
    %212 = vmatprep.subr.mxu0 0.0
    %213 = vmatpush2.msra.mxu0 0.0
    %214 = vmatprep.subr.mxu0 0.0
    %215 = vmatpush2.msra.mxu0 0.0
    %216 = vmatprep.subr.mxu0 0.0
    %217 = vmatpush2.msra.mxu0 0.0
    %218 = vmatprep.mubr.f32.mxu0 0.0
    %219 = vmatmul.mubr.f32.gmra.mxu0 %v149
    %v220 = vpop.f32.mrf.mxu0
    %v221 = vadd.f32 %v130, %v220
    %v222 = vpop.f32.mrf.mxu0
    %v223 = vadd.f32 %v134, %v222
    %224 = vmatprep.mubr.f32.mxu0 0.0
    %225 = vmatmul.mubr.f32.gmra.mxu0 %v152
    %v226 = vpop.f32.mrf.mxu0
    %v227 = vadd.f32 %v130, %v226
    %v228 = vpop.f32.mrf.mxu0
    %v229 = vadd.f32 %v134, %v228
    %230 = vdwg.mxu0
    %231 = vmatprep.subr.mxu0 0.0
    %232 = vmatpush1.msra.mxu0 0.0
    %233 = vmatprep.subr.mxu0 0.0
    %234 = vmatpush1.msra.mxu0 0.0
    %235 = vmatprep.subr.mxu0 0.0
    %236 = vmatpush1.msra.mxu0 0.0
    %237 = vmatprep.subr.mxu0 0.0
    %238 = vmatpush1.msra.mxu0 0.0
    %239 = vmatprep.subr.mxu0 0.0
    %240 = vmatpush1.msra.mxu0 0.0
    %241 = vmatprep.subr.mxu0 0.0
    %242 = vmatpush1.msra.mxu0 0.0
    %243 = vmatprep.subr.mxu0 0.0
    %244 = vmatpush1.msra.mxu0 0.0
    %245 = vmatprep.subr.mxu0 0.0
    %246 = vmatpush1.msra.mxu0 0.0
    %247 = vmatprep.subr.mxu0 0.0
    %248 = vmatpush1.msra.mxu0 0.0
    %249 = vmatprep.subr.mxu0 0.0
    %250 = vmatpush1.msra.mxu0 0.0
    %251 = vmatprep.subr.mxu0 0.0
    %252 = vmatpush1.msra.mxu0 0.0
    %253 = vmatprep.subr.mxu0 0.0
    %254 = vmatpush1.msra.mxu0 0.0
    %255 = vmatprep.subr.mxu0 %v124
    %256 = vmatpush1.msra.mxu0 %v123
    %257 = vmatprep.subr.mxu0 %v120
    %258 = vmatpush1.msra.mxu0 %v119
    %259 = vmatprep.subr.mxu0 %v116
    %260 = vmatpush1.msra.mxu0 %v115
    %261 = vmatprep.subr.mxu0 %v112
    %262 = vmatpush1.msra.mxu0 %v111
    %263 = vmatprep.subr.mxu0 0.0
    %264 = vmatpush2.msra.mxu0 0.0
    %265 = vmatprep.subr.mxu0 0.0
    %266 = vmatpush2.msra.mxu0 0.0
    %267 = vmatprep.subr.mxu0 0.0
    %268 = vmatpush2.msra.mxu0 0.0
    %269 = vmatprep.subr.mxu0 0.0
    %270 = vmatpush2.msra.mxu0 0.0
    %271 = vmatprep.subr.mxu0 0.0
    %272 = vmatpush2.msra.mxu0 0.0
    %273 = vmatprep.subr.mxu0 0.0
    %274 = vmatpush2.msra.mxu0 0.0
    %275 = vmatprep.subr.mxu0 0.0
    %276 = vmatpush2.msra.mxu0 0.0
    %277 = vmatprep.subr.mxu0 0.0
    %278 = vmatpush2.msra.mxu0 0.0
    %279 = vmatprep.subr.mxu0 0.0
    %280 = vmatpush2.msra.mxu0 0.0
    %281 = vmatprep.subr.mxu0 0.0
    %282 = vmatpush2.msra.mxu0 0.0
    %283 = vmatprep.subr.mxu0 0.0
    %284 = vmatpush2.msra.mxu0 0.0
    %285 = vmatprep.subr.mxu0 0.0
    %286 = vmatpush2.msra.mxu0 0.0
    %287 = vmatprep.subr.mxu0 0.0
    %288 = vmatpush2.msra.mxu0 0.0
    %289 = vmatprep.subr.mxu0 0.0
    %290 = vmatpush2.msra.mxu0 0.0
    %291 = vmatprep.subr.mxu0 0.0
    %292 = vmatpush2.msra.mxu0 0.0
    %293 = vmatprep.subr.mxu0 0.0
    %294 = vmatpush2.msra.mxu0 0.0
    %295 = vmatprep.mubr.f32.mxu0 0.0
    %296 = vmatmul.mubr.f32.gmra.mxu0 %v149
    %v297 = vpop.f32.mrf.mxu0
    %v298 = vadd.f32 %v138, %v297
    %v299 = vpop.f32.mrf.mxu0
    %v300 = vadd.f32 %v142, %v299
    %301 = vmatprep.mubr.f32.mxu0 0.0
    %302 = vmatmul.mubr.f32.gmra.mxu0 %v152
    %v303 = vpop.f32.mrf.mxu0
    %v304 = vadd.f32 %v138, %v303
    %v305 = vpop.f32.mrf.mxu0
    %v306 = vadd.f32 %v142, %v305
    %307 = vdwg.mxu0
    %v308 = vld [vmem:[%s9] sm:$0x3]
    %v309 = vld [vmem:[%s10] sm:$0x3]
    %310 = vmatprep.subr.mxu0 %v106
    %311 = vmatpush1.msra.mxu0 %v105
    %312 = vmatprep.subr.mxu0 %v102
    %313 = vmatpush1.msra.mxu0 %v101
    %314 = vmatprep.subr.mxu0 %v98
    %315 = vmatpush1.msra.mxu0 %v97
    %316 = vmatprep.subr.mxu0 %v94
    %317 = vmatpush1.msra.mxu0 %v93
    %318 = vmatprep.subr.mxu0 %v90
    %319 = vmatpush1.msra.mxu0 %v89
    %320 = vmatprep.subr.mxu0 %v86
    %321 = vmatpush1.msra.mxu0 %v85
    %322 = vmatprep.subr.mxu0 %v82
    %323 = vmatpush1.msra.mxu0 %v81
    %324 = vmatprep.subr.mxu0 %v78
    %325 = vmatpush1.msra.mxu0 %v77
    %326 = vmatprep.subr.mxu0 %v74
    %327 = vmatpush1.msra.mxu0 %v73
    %328 = vmatprep.subr.mxu0 %v70
    %329 = vmatpush1.msra.mxu0 %v69
    %330 = vmatprep.subr.mxu0 %v66
    %331 = vmatpush1.msra.mxu0 %v65
    %332 = vmatprep.subr.mxu0 %v62
    %333 = vmatpush1.msra.mxu0 %v61
    %334 = vmatprep.subr.mxu0 %v58
    %335 = vmatpush1.msra.mxu0 %v57
    %336 = vmatprep.subr.mxu0 %v54
    %337 = vmatpush1.msra.mxu0 %v53
    %338 = vmatprep.subr.mxu0 %v50
    %339 = vmatpush1.msra.mxu0 %v49
    %340 = vmatprep.subr.mxu0 %v46
    %341 = vmatpush1.msra.mxu0 %v45
    %342 = vmatprep.subr.mxu0 0.0
    %343 = vmatpush2.msra.mxu0 0.0
    %344 = vmatprep.subr.mxu0 0.0
    %345 = vmatpush2.msra.mxu0 0.0
    %346 = vmatprep.subr.mxu0 0.0
    %347 = vmatpush2.msra.mxu0 0.0
    %348 = vmatprep.subr.mxu0 0.0
    %349 = vmatpush2.msra.mxu0 0.0
    %350 = vmatprep.subr.mxu0 0.0
    %351 = vmatpush2.msra.mxu0 0.0
    %352 = vmatprep.subr.mxu0 0.0
    %353 = vmatpush2.msra.mxu0 0.0
    %354 = vmatprep.subr.mxu0 0.0
    %355 = vmatpush2.msra.mxu0 0.0
    %356 = vmatprep.subr.mxu0 0.0
    %357 = vmatpush2.msra.mxu0 0.0
    %358 = vmatprep.subr.mxu0 0.0
    %359 = vmatpush2.msra.mxu0 0.0
    %360 = vmatprep.subr.mxu0 0.0
    %361 = vmatpush2.msra.mxu0 0.0
    %362 = vmatprep.subr.mxu0 0.0
    %363 = vmatpush2.msra.mxu0 0.0
    %364 = vmatprep.subr.mxu0 0.0
    %365 = vmatpush2.msra.mxu0 0.0
    %366 = vmatprep.subr.mxu0 0.0
    %367 = vmatpush2.msra.mxu0 0.0
    %368 = vmatprep.subr.mxu0 0.0
    %369 = vmatpush2.msra.mxu0 0.0
    %370 = vmatprep.subr.mxu0 0.0
    %371 = vmatpush2.msra.mxu0 0.0
    %372 = vmatprep.subr.mxu0 0.0
    %373 = vmatpush2.msra.mxu0 0.0
    %374 = vmatprep.mubr.f32.mxu0 0.0
    %375 = vmatmul.mubr.f32.gmra.mxu0 %v308
    %v376 = vpop.f32.mrf.mxu0
    %v377 = vadd.f32 0.0, %v376
    %v378 = vpop.f32.mrf.mxu0
    %v379 = vadd.f32 0.0, %v378
    %380 = vdwg.mxu0
    %381 = vmatprep.subr.mxu0 %v108
    %382 = vmatpush1.msra.mxu0 %v107
    %383 = vmatprep.subr.mxu0 %v104
    %384 = vmatpush1.msra.mxu0 %v103
    %385 = vmatprep.subr.mxu0 %v100
    %386 = vmatpush1.msra.mxu0 %v99
    %387 = vmatprep.subr.mxu0 %v96
    %388 = vmatpush1.msra.mxu0 %v95
    %389 = vmatprep.subr.mxu0 %v92
    %390 = vmatpush1.msra.mxu0 %v91
    %391 = vmatprep.subr.mxu0 %v88
    %392 = vmatpush1.msra.mxu0 %v87
    %393 = vmatprep.subr.mxu0 %v84
    %394 = vmatpush1.msra.mxu0 %v83
    %395 = vmatprep.subr.mxu0 %v80
    %396 = vmatpush1.msra.mxu0 %v79
    %397 = vmatprep.subr.mxu0 %v76
    %398 = vmatpush1.msra.mxu0 %v75
    %399 = vmatprep.subr.mxu0 %v72
    %400 = vmatpush1.msra.mxu0 %v71
    %401 = vmatprep.subr.mxu0 %v68
    %402 = vmatpush1.msra.mxu0 %v67
    %403 = vmatprep.subr.mxu0 %v64
    %404 = vmatpush1.msra.mxu0 %v63
    %405 = vmatprep.subr.mxu0 %v60
    %406 = vmatpush1.msra.mxu0 %v59
    %407 = vmatprep.subr.mxu0 %v56
    %408 = vmatpush1.msra.mxu0 %v55
    %409 = vmatprep.subr.mxu0 %v52
    %410 = vmatpush1.msra.mxu0 %v51
    %411 = vmatprep.subr.mxu0 %v48
    %412 = vmatpush1.msra.mxu0 %v47
    %413 = vmatprep.subr.mxu0 0.0
    %414 = vmatpush2.msra.mxu0 0.0
    %415 = vmatprep.subr.mxu0 0.0
    %416 = vmatpush2.msra.mxu0 0.0
    %417 = vmatprep.subr.mxu0 0.0
    %418 = vmatpush2.msra.mxu0 0.0
    %419 = vmatprep.subr.mxu0 0.0
    %420 = vmatpush2.msra.mxu0 0.0
    %421 = vmatprep.subr.mxu0 0.0
    %422 = vmatpush2.msra.mxu0 0.0
    %423 = vmatprep.subr.mxu0 0.0
    %424 = vmatpush2.msra.mxu0 0.0
    %425 = vmatprep.subr.mxu0 0.0
    %426 = vmatpush2.msra.mxu0 0.0
    %427 = vmatprep.subr.mxu0 0.0
    %428 = vmatpush2.msra.mxu0 0.0
    %429 = vmatprep.subr.mxu0 0.0
    %430 = vmatpush2.msra.mxu0 0.0
    %431 = vmatprep.subr.mxu0 0.0
    %432 = vmatpush2.msra.mxu0 0.0
    %433 = vmatprep.subr.mxu0 0.0
    %434 = vmatpush2.msra.mxu0 0.0
    %435 = vmatprep.subr.mxu0 0.0
    %436 = vmatpush2.msra.mxu0 0.0
    %437 = vmatprep.subr.mxu0 0.0
    %438 = vmatpush2.msra.mxu0 0.0
    %439 = vmatprep.subr.mxu0 0.0
    %440 = vmatpush2.msra.mxu0 0.0
    %441 = vmatprep.subr.mxu0 0.0
    %442 = vmatpush2.msra.mxu0 0.0
    %443 = vmatprep.subr.mxu0 0.0
    %444 = vmatpush2.msra.mxu0 0.0
    %445 = vmatprep.mubr.f32.mxu0 0.0
    %446 = vmatmul.mubr.f32.gmra.mxu0 %v308
    %v447 = vpop.f32.mrf.mxu0
    %v448 = vadd.f32 0.0, %v447
    %v449 = vpop.f32.mrf.mxu0
    %v450 = vadd.f32 0.0, %v449
    %451 = vdwg.mxu0
    %v452 = vadd.f32 %v221, %v377
    %v453 = vadd.f32 %v223, %v379
    %v454 = vadd.f32 %v298, %v448
    %v455 = vadd.f32 %v300, %v450
    %v456 = vxor.u32 %v452, 2147483648
    %v457 = vmul.f32 %v456, 1.442695
    %v458 = vpow.pop %v457
    %v459 = vadd.f32 %v458, 1.0
    %v460 = vrcp.pop %v459
    %v461 = vmul.f32 1.0, %v460
    %v462 = vxor.u32 %v453, 2147483648
    %v463 = vmul.f32 %v462, 1.442695
    %v464 = vpow.pop %v463
    %v465 = vadd.f32 %v464, 1.0
    %v466 = vrcp.pop %v465
    %v467 = vmul.f32 1.0, %v466
    %v468 = vtanh.pop %v454
    %v469 = vxor.u32 %v455, 2147483648
    %v470 = vmul.f32 %v469, 1.442695
    %v471 = vpow.pop %v470
    %v472 = vadd.f32 %v471, 1.0
    %v473 = vrcp.pop %v472
    %v474 = vmul.f32 1.0, %v473
    %v475 = vmul.f32 %v467, %v309
    %v476 = vmul.f32 %v461, %v468
    %v477 = vadd.f32 %v475, %v476
    %v478 = vtanh.pop %v477
    %v479 = vmul.f32 %v474, %v478
    %480 = vmatprep.subr.mxu0 %v106
    %481 = vmatpush1.msra.mxu0 %v105
    %482 = vmatprep.subr.mxu0 %v102
    %483 = vmatpush1.msra.mxu0 %v101
    %484 = vmatprep.subr.mxu0 %v98
    %485 = vmatpush1.msra.mxu0 %v97
    %486 = vmatprep.subr.mxu0 %v94
    %487 = vmatpush1.msra.mxu0 %v93
    %488 = vmatprep.subr.mxu0 %v90
    %489 = vmatpush1.msra.mxu0 %v89
    %490 = vmatprep.subr.mxu0 %v86
    %491 = vmatpush1.msra.mxu0 %v85
    %492 = vmatprep.subr.mxu0 %v82
    %493 = vmatpush1.msra.mxu0 %v81
    %494 = vmatprep.subr.mxu0 %v78
    %495 = vmatpush1.msra.mxu0 %v77
    %496 = vmatprep.subr.mxu0 %v74
    %497 = vmatpush1.msra.mxu0 %v73
    %498 = vmatprep.subr.mxu0 %v70
    %499 = vmatpush1.msra.mxu0 %v69
    %500 = vmatprep.subr.mxu0 %v66
    %501 = vmatpush1.msra.mxu0 %v65
    %502 = vmatprep.subr.mxu0 %v62
    %503 = vmatpush1.msra.mxu0 %v61
    %504 = vmatprep.subr.mxu0 %v58
    %505 = vmatpush1.msra.mxu0 %v57
    %506 = vmatprep.subr.mxu0 %v54
    %507 = vmatpush1.msra.mxu0 %v53
    %508 = vmatprep.subr.mxu0 %v50
    %509 = vmatpush1.msra.mxu0 %v49
    %510 = vmatprep.subr.mxu0 %v46
    %511 = vmatpush1.msra.mxu0 %v45
    %512 = vmatprep.subr.mxu0 0.0
    %513 = vmatpush2.msra.mxu0 0.0
    %514 = vmatprep.subr.mxu0 0.0
    %515 = vmatpush2.msra.mxu0 0.0
    %516 = vmatprep.subr.mxu0 0.0
    %517 = vmatpush2.msra.mxu0 0.0
    %518 = vmatprep.subr.mxu0 0.0
    %519 = vmatpush2.msra.mxu0 0.0
    %520 = vmatprep.subr.mxu0 0.0
    %521 = vmatpush2.msra.mxu0 0.0
    %522 = vmatprep.subr.mxu0 0.0
    %523 = vmatpush2.msra.mxu0 0.0
    %524 = vmatprep.subr.mxu0 0.0
    %525 = vmatpush2.msra.mxu0 0.0
    %526 = vmatprep.subr.mxu0 0.0
    %527 = vmatpush2.msra.mxu0 0.0
    %528 = vmatprep.subr.mxu0 0.0
    %529 = vmatpush2.msra.mxu0 0.0
    %530 = vmatprep.subr.mxu0 0.0
    %531 = vmatpush2.msra.mxu0 0.0
    %532 = vmatprep.subr.mxu0 0.0
    %533 = vmatpush2.msra.mxu0 0.0
    %534 = vmatprep.subr.mxu0 0.0
    %535 = vmatpush2.msra.mxu0 0.0
    %536 = vmatprep.subr.mxu0 0.0
    %537 = vmatpush2.msra.mxu0 0.0
    %538 = vmatprep.subr.mxu0 0.0
    %539 = vmatpush2.msra.mxu0 0.0
    %540 = vmatprep.subr.mxu0 0.0
    %541 = vmatpush2.msra.mxu0 0.0
    %542 = vmatprep.subr.mxu0 0.0
    %543 = vmatpush2.msra.mxu0 0.0
    %544 = vmatprep.mubr.f32.mxu0 0.0
    %545 = vmatmul.mubr.f32.gmra.mxu0 %v479
    %v546 = vpop.f32.mrf.mxu0
    %v547 = vadd.f32 0.0, %v546
    %v548 = vpop.f32.mrf.mxu0
    %v549 = vadd.f32 0.0, %v548
    %550 = vdwg.mxu0
    %551 = vmatprep.subr.mxu0 %v108
    %552 = vmatpush1.msra.mxu0 %v107
    %553 = vmatprep.subr.mxu0 %v104
    %554 = vmatpush1.msra.mxu0 %v103
    %555 = vmatprep.subr.mxu0 %v100
    %556 = vmatpush1.msra.mxu0 %v99
    %557 = vmatprep.subr.mxu0 %v96
    %558 = vmatpush1.msra.mxu0 %v95
    %559 = vmatprep.subr.mxu0 %v92
    %560 = vmatpush1.msra.mxu0 %v91
    %561 = vmatprep.subr.mxu0 %v88
    %562 = vmatpush1.msra.mxu0 %v87
    %563 = vmatprep.subr.mxu0 %v84
    %564 = vmatpush1.msra.mxu0 %v83
    %565 = vmatprep.subr.mxu0 %v80
    %566 = vmatpush1.msra.mxu0 %v79
    %567 = vmatprep.subr.mxu0 %v76
    %568 = vmatpush1.msra.mxu0 %v75
    %569 = vmatprep.subr.mxu0 %v72
    %570 = vmatpush1.msra.mxu0 %v71
    %571 = vmatprep.subr.mxu0 %v68
    %572 = vmatpush1.msra.mxu0 %v67
    %573 = vmatprep.subr.mxu0 %v64
    %574 = vmatpush1.msra.mxu0 %v63
    %575 = vmatprep.subr.mxu0 %v60
    %576 = vmatpush1.msra.mxu0 %v59
    %577 = vmatprep.subr.mxu0 %v56
    %578 = vmatpush1.msra.mxu0 %v55
    %579 = vmatprep.subr.mxu0 %v52
    %580 = vmatpush1.msra.mxu0 %v51
    %581 = vmatprep.subr.mxu0 %v48
    %582 = vmatpush1.msra.mxu0 %v47
    %583 = vmatprep.subr.mxu0 0.0
    %584 = vmatpush2.msra.mxu0 0.0
    %585 = vmatprep.subr.mxu0 0.0
    %586 = vmatpush2.msra.mxu0 0.0
    %587 = vmatprep.subr.mxu0 0.0
    %588 = vmatpush2.msra.mxu0 0.0
    %589 = vmatprep.subr.mxu0 0.0
    %590 = vmatpush2.msra.mxu0 0.0
    %591 = vmatprep.subr.mxu0 0.0
    %592 = vmatpush2.msra.mxu0 0.0
    %593 = vmatprep.subr.mxu0 0.0
    %594 = vmatpush2.msra.mxu0 0.0
    %595 = vmatprep.subr.mxu0 0.0
    %596 = vmatpush2.msra.mxu0 0.0
    %597 = vmatprep.subr.mxu0 0.0
    %598 = vmatpush2.msra.mxu0 0.0
    %599 = vmatprep.subr.mxu0 0.0
    %600 = vmatpush2.msra.mxu0 0.0
    %601 = vmatprep.subr.mxu0 0.0
    %602 = vmatpush2.msra.mxu0 0.0
    %603 = vmatprep.subr.mxu0 0.0
    %604 = vmatpush2.msra.mxu0 0.0
    %605 = vmatprep.subr.mxu0 0.0
    %606 = vmatpush2.msra.mxu0 0.0
    %607 = vmatprep.subr.mxu0 0.0
    %608 = vmatpush2.msra.mxu0 0.0
    %609 = vmatprep.subr.mxu0 0.0
    %610 = vmatpush2.msra.mxu0 0.0
    %611 = vmatprep.subr.mxu0 0.0
    %612 = vmatpush2.msra.mxu0 0.0
    %613 = vmatprep.subr.mxu0 0.0
    %614 = vmatpush2.msra.mxu0 0.0
    %615 = vmatprep.mubr.f32.mxu0 0.0
    %616 = vmatmul.mubr.f32.gmra.mxu0 %v479
    %v617 = vpop.f32.mrf.mxu0
    %v618 = vadd.f32 0.0, %v617
    %v619 = vpop.f32.mrf.mxu0
    %v620 = vadd.f32 0.0, %v619
    %621 = vdwg.mxu0
    %v626 = vrot.slane %v547, 6
    %v627 = vrot.slane %v549, 6
    %v628 = vrot.slane %v618, 6
    %v629 = vrot.slane %v620, 6
    %v634 = vadd.f32 %v221, %v626
    %v635 = vadd.f32 %v223, %v627
    %v636 = vadd.f32 %v298, %v628
    %v637 = vadd.f32 %v300, %v629
    %v638 = vxor.u32 %v634, 2147483648
    %v639 = vmul.f32 %v638, 1.442695
    %v640 = vpow.pop %v639
    %v641 = vadd.f32 %v640, 1.0
    %v642 = vrcp.pop %v641
    %v643 = vmul.f32 1.0, %v642
    %v644 = vxor.u32 %v635, 2147483648
    %v645 = vmul.f32 %v644, 1.442695
    %v646 = vpow.pop %v645
    %v647 = vadd.f32 %v646, 1.0
    %v648 = vrcp.pop %v647
    %v649 = vmul.f32 1.0, %v648
    %v650 = vtanh.pop %v636
    %v651 = vxor.u32 %v637, 2147483648
    %v652 = vmul.f32 %v651, 1.442695
    %v653 = vpow.pop %v652
    %v654 = vadd.f32 %v653, 1.0
    %v655 = vrcp.pop %v654
    %v656 = vmul.f32 1.0, %v655
    %v658 = vrot.slane %v477, 6
    %v660 = vmul.f32 %v649, %v658
    %v661 = vmul.f32 %v643, %v650
    %v662 = vadd.f32 %v660, %v661
    %v663 = vtanh.pop %v662
    %v664 = vmul.f32 %v656, %v663
    %v666 = vrot.slane %v664, 2
    %668 = vmatprep.subr.mxu0 %v106
    %669 = vmatpush1.msra.mxu0 %v105
    %670 = vmatprep.subr.mxu0 %v102
    %671 = vmatpush1.msra.mxu0 %v101
    %672 = vmatprep.subr.mxu0 %v98
    %673 = vmatpush1.msra.mxu0 %v97
    %674 = vmatprep.subr.mxu0 %v94
    %675 = vmatpush1.msra.mxu0 %v93
    %676 = vmatprep.subr.mxu0 %v90
    %677 = vmatpush1.msra.mxu0 %v89
    %678 = vmatprep.subr.mxu0 %v86
    %679 = vmatpush1.msra.mxu0 %v85
    %680 = vmatprep.subr.mxu0 %v82
    %681 = vmatpush1.msra.mxu0 %v81
    %682 = vmatprep.subr.mxu0 %v78
    %683 = vmatpush1.msra.mxu0 %v77
    %684 = vmatprep.subr.mxu0 %v74
    %685 = vmatpush1.msra.mxu0 %v73
    %686 = vmatprep.subr.mxu0 %v70
    %687 = vmatpush1.msra.mxu0 %v69
    %688 = vmatprep.subr.mxu0 %v66
    %689 = vmatpush1.msra.mxu0 %v65
    %690 = vmatprep.subr.mxu0 %v62
    %691 = vmatpush1.msra.mxu0 %v61
    %692 = vmatprep.subr.mxu0 %v58
    %693 = vmatpush1.msra.mxu0 %v57
    %694 = vmatprep.subr.mxu0 %v54
    %695 = vmatpush1.msra.mxu0 %v53
    %696 = vmatprep.subr.mxu0 %v50
    %697 = vmatpush1.msra.mxu0 %v49
    %698 = vmatprep.subr.mxu0 %v46
    %699 = vmatpush1.msra.mxu0 %v45
    %700 = vmatprep.subr.mxu0 0.0
    %701 = vmatpush2.msra.mxu0 0.0
    %702 = vmatprep.subr.mxu0 0.0
    %703 = vmatpush2.msra.mxu0 0.0
    %704 = vmatprep.subr.mxu0 0.0
    %705 = vmatpush2.msra.mxu0 0.0
    %706 = vmatprep.subr.mxu0 0.0
    %707 = vmatpush2.msra.mxu0 0.0
    %708 = vmatprep.subr.mxu0 0.0
    %709 = vmatpush2.msra.mxu0 0.0
    %710 = vmatprep.subr.mxu0 0.0
    %711 = vmatpush2.msra.mxu0 0.0
    %712 = vmatprep.subr.mxu0 0.0
    %713 = vmatpush2.msra.mxu0 0.0
    %714 = vmatprep.subr.mxu0 0.0
    %715 = vmatpush2.msra.mxu0 0.0
    %716 = vmatprep.subr.mxu0 0.0
    %717 = vmatpush2.msra.mxu0 0.0
    %718 = vmatprep.subr.mxu0 0.0
    %719 = vmatpush2.msra.mxu0 0.0
    %720 = vmatprep.subr.mxu0 0.0
    %721 = vmatpush2.msra.mxu0 0.0
    %722 = vmatprep.subr.mxu0 0.0
    %723 = vmatpush2.msra.mxu0 0.0
    %724 = vmatprep.subr.mxu0 0.0
    %725 = vmatpush2.msra.mxu0 0.0
    %726 = vmatprep.subr.mxu0 0.0
    %727 = vmatpush2.msra.mxu0 0.0
    %728 = vmatprep.subr.mxu0 0.0
    %729 = vmatpush2.msra.mxu0 0.0
    %730 = vmatprep.subr.mxu0 0.0
    %731 = vmatpush2.msra.mxu0 0.0
    %732 = vmatprep.mubr.f32.mxu0 0.0
    %733 = vmatmul.mubr.f32.gmra.mxu0 %v666
    %v734 = vpop.f32.mrf.mxu0
    %v735 = vadd.f32 0.0, %v734
    %v736 = vpop.f32.mrf.mxu0
    %v737 = vadd.f32 0.0, %v736
    %738 = vdwg.mxu0
    %739 = vmatprep.subr.mxu0 %v108
    %740 = vmatpush1.msra.mxu0 %v107
    %741 = vmatprep.subr.mxu0 %v104
    %742 = vmatpush1.msra.mxu0 %v103
    %743 = vmatprep.subr.mxu0 %v100
    %744 = vmatpush1.msra.mxu0 %v99
    %745 = vmatprep.subr.mxu0 %v96
    %746 = vmatpush1.msra.mxu0 %v95
    %747 = vmatprep.subr.mxu0 %v92
    %748 = vmatpush1.msra.mxu0 %v91
    %749 = vmatprep.subr.mxu0 %v88
    %750 = vmatpush1.msra.mxu0 %v87
    %751 = vmatprep.subr.mxu0 %v84
    %752 = vmatpush1.msra.mxu0 %v83
    %753 = vmatprep.subr.mxu0 %v80
    %754 = vmatpush1.msra.mxu0 %v79
    %755 = vmatprep.subr.mxu0 %v76
    %756 = vmatpush1.msra.mxu0 %v75
    %757 = vmatprep.subr.mxu0 %v72
    %758 = vmatpush1.msra.mxu0 %v71
    %759 = vmatprep.subr.mxu0 %v68
    %760 = vmatpush1.msra.mxu0 %v67
    %761 = vmatprep.subr.mxu0 %v64
    %762 = vmatpush1.msra.mxu0 %v63
    %763 = vmatprep.subr.mxu0 %v60
    %764 = vmatpush1.msra.mxu0 %v59
    %765 = vmatprep.subr.mxu0 %v56
    %766 = vmatpush1.msra.mxu0 %v55
    %767 = vmatprep.subr.mxu0 %v52
    %768 = vmatpush1.msra.mxu0 %v51
    %769 = vmatprep.subr.mxu0 %v48
    %770 = vmatpush1.msra.mxu0 %v47
    %771 = vmatprep.subr.mxu0 0.0
    %772 = vmatpush2.msra.mxu0 0.0
    %773 = vmatprep.subr.mxu0 0.0
    %774 = vmatpush2.msra.mxu0 0.0
    %775 = vmatprep.subr.mxu0 0.0
    %776 = vmatpush2.msra.mxu0 0.0
    %777 = vmatprep.subr.mxu0 0.0
    %778 = vmatpush2.msra.mxu0 0.0
    %779 = vmatprep.subr.mxu0 0.0
    %780 = vmatpush2.msra.mxu0 0.0
    %781 = vmatprep.subr.mxu0 0.0
    %782 = vmatpush2.msra.mxu0 0.0
    %783 = vmatprep.subr.mxu0 0.0
    %784 = vmatpush2.msra.mxu0 0.0
    %785 = vmatprep.subr.mxu0 0.0
    %786 = vmatpush2.msra.mxu0 0.0
    %787 = vmatprep.subr.mxu0 0.0
    %788 = vmatpush2.msra.mxu0 0.0
    %789 = vmatprep.subr.mxu0 0.0
    %790 = vmatpush2.msra.mxu0 0.0
    %791 = vmatprep.subr.mxu0 0.0
    %792 = vmatpush2.msra.mxu0 0.0
    %793 = vmatprep.subr.mxu0 0.0
    %794 = vmatpush2.msra.mxu0 0.0
    %795 = vmatprep.subr.mxu0 0.0
    %796 = vmatpush2.msra.mxu0 0.0
    %797 = vmatprep.subr.mxu0 0.0
    %798 = vmatpush2.msra.mxu0 0.0
    %799 = vmatprep.subr.mxu0 0.0
    %800 = vmatpush2.msra.mxu0 0.0
    %801 = vmatprep.subr.mxu0 0.0
    %802 = vmatpush2.msra.mxu0 0.0
    %803 = vmatprep.mubr.f32.mxu0 0.0
    %804 = vmatmul.mubr.f32.gmra.mxu0 %v666
    %v805 = vpop.f32.mrf.mxu0
    %v806 = vadd.f32 0.0, %v805
    %v807 = vpop.f32.mrf.mxu0
    %v808 = vadd.f32 0.0, %v807
    %809 = vdwg.mxu0
    %v814 = vrot.slane %v735, 4
    %v815 = vrot.slane %v737, 4
    %v816 = vrot.slane %v806, 4
    %v817 = vrot.slane %v808, 4
    %v822 = vadd.f32 %v221, %v814
    %v823 = vadd.f32 %v223, %v815
    %v824 = vadd.f32 %v298, %v816
    %v825 = vadd.f32 %v300, %v817
    %v826 = vxor.u32 %v822, 2147483648
    %v827 = vmul.f32 %v826, 1.442695
    %v828 = vpow.pop %v827
    %v829 = vadd.f32 %v828, 1.0
    %v830 = vrcp.pop %v829
    %v831 = vmul.f32 1.0, %v830
    %v832 = vxor.u32 %v823, 2147483648
    %v833 = vmul.f32 %v832, 1.442695
    %v834 = vpow.pop %v833
    %v835 = vadd.f32 %v834, 1.0
    %v836 = vrcp.pop %v835
    %v837 = vmul.f32 1.0, %v836
    %v838 = vtanh.pop %v824
    %v839 = vxor.u32 %v825, 2147483648
    %v840 = vmul.f32 %v839, 1.442695
    %v841 = vpow.pop %v840
    %v842 = vadd.f32 %v841, 1.0
    %v843 = vrcp.pop %v842
    %v844 = vmul.f32 1.0, %v843
    %v846 = vrot.slane %v662, 6
    %v848 = vmul.f32 %v837, %v846
    %v849 = vmul.f32 %v831, %v838
    %v850 = vadd.f32 %v848, %v849
    %v851 = vtanh.pop %v850
    %v852 = vmul.f32 %v844, %v851
    %v854 = vrot.slane %v852, 4
    %856 = vmatprep.subr.mxu0 %v106
    %857 = vmatpush1.msra.mxu0 %v105
    %858 = vmatprep.subr.mxu0 %v102
    %859 = vmatpush1.msra.mxu0 %v101
    %860 = vmatprep.subr.mxu0 %v98
    %861 = vmatpush1.msra.mxu0 %v97
    %862 = vmatprep.subr.mxu0 %v94
    %863 = vmatpush1.msra.mxu0 %v93
    %864 = vmatprep.subr.mxu0 %v90
    %865 = vmatpush1.msra.mxu0 %v89
    %866 = vmatprep.subr.mxu0 %v86
    %867 = vmatpush1.msra.mxu0 %v85
    %868 = vmatprep.subr.mxu0 %v82
    %869 = vmatpush1.msra.mxu0 %v81
    %870 = vmatprep.subr.mxu0 %v78
    %871 = vmatpush1.msra.mxu0 %v77
    %872 = vmatprep.subr.mxu0 %v74
    %873 = vmatpush1.msra.mxu0 %v73
    %874 = vmatprep.subr.mxu0 %v70
    %875 = vmatpush1.msra.mxu0 %v69
    %876 = vmatprep.subr.mxu0 %v66
    %877 = vmatpush1.msra.mxu0 %v65
    %878 = vmatprep.subr.mxu0 %v62
    %879 = vmatpush1.msra.mxu0 %v61
    %880 = vmatprep.subr.mxu0 %v58
    %881 = vmatpush1.msra.mxu0 %v57
    %882 = vmatprep.subr.mxu0 %v54
    %883 = vmatpush1.msra.mxu0 %v53
    %884 = vmatprep.subr.mxu0 %v50
    %885 = vmatpush1.msra.mxu0 %v49
    %886 = vmatprep.subr.mxu0 %v46
    %887 = vmatpush1.msra.mxu0 %v45
    %888 = vmatprep.subr.mxu0 0.0
    %889 = vmatpush2.msra.mxu0 0.0
    %890 = vmatprep.subr.mxu0 0.0
    %891 = vmatpush2.msra.mxu0 0.0
    %892 = vmatprep.subr.mxu0 0.0
    %893 = vmatpush2.msra.mxu0 0.0
    %894 = vmatprep.subr.mxu0 0.0
    %895 = vmatpush2.msra.mxu0 0.0
    %896 = vmatprep.subr.mxu0 0.0
    %897 = vmatpush2.msra.mxu0 0.0
    %898 = vmatprep.subr.mxu0 0.0
    %899 = vmatpush2.msra.mxu0 0.0
    %900 = vmatprep.subr.mxu0 0.0
    %901 = vmatpush2.msra.mxu0 0.0
    %902 = vmatprep.subr.mxu0 0.0
    %903 = vmatpush2.msra.mxu0 0.0
    %904 = vmatprep.subr.mxu0 0.0
    %905 = vmatpush2.msra.mxu0 0.0
    %906 = vmatprep.subr.mxu0 0.0
    %907 = vmatpush2.msra.mxu0 0.0
    %908 = vmatprep.subr.mxu0 0.0
    %909 = vmatpush2.msra.mxu0 0.0
    %910 = vmatprep.subr.mxu0 0.0
    %911 = vmatpush2.msra.mxu0 0.0
    %912 = vmatprep.subr.mxu0 0.0
    %913 = vmatpush2.msra.mxu0 0.0
    %914 = vmatprep.subr.mxu0 0.0
    %915 = vmatpush2.msra.mxu0 0.0
    %916 = vmatprep.subr.mxu0 0.0
    %917 = vmatpush2.msra.mxu0 0.0
    %918 = vmatprep.subr.mxu0 0.0
    %919 = vmatpush2.msra.mxu0 0.0
    %920 = vmatprep.mubr.f32.mxu0 0.0
    %921 = vmatmul.mubr.f32.gmra.mxu0 %v854
    %v922 = vpop.f32.mrf.mxu0
    %v923 = vadd.f32 0.0, %v922
    %v924 = vpop.f32.mrf.mxu0
    %v925 = vadd.f32 0.0, %v924
    %926 = vdwg.mxu0
    %927 = vmatprep.subr.mxu0 %v108
    %928 = vmatpush1.msra.mxu0 %v107
    %929 = vmatprep.subr.mxu0 %v104
    %930 = vmatpush1.msra.mxu0 %v103
    %931 = vmatprep.subr.mxu0 %v100
    %932 = vmatpush1.msra.mxu0 %v99
    %933 = vmatprep.subr.mxu0 %v96
    %934 = vmatpush1.msra.mxu0 %v95
    %935 = vmatprep.subr.mxu0 %v92
    %936 = vmatpush1.msra.mxu0 %v91
    %937 = vmatprep.subr.mxu0 %v88
    %938 = vmatpush1.msra.mxu0 %v87
    %939 = vmatprep.subr.mxu0 %v84
    %940 = vmatpush1.msra.mxu0 %v83
    %941 = vmatprep.subr.mxu0 %v80
    %942 = vmatpush1.msra.mxu0 %v79
    %943 = vmatprep.subr.mxu0 %v76
    %944 = vmatpush1.msra.mxu0 %v75
    %945 = vmatprep.subr.mxu0 %v72
    %946 = vmatpush1.msra.mxu0 %v71
    %947 = vmatprep.subr.mxu0 %v68
    %948 = vmatpush1.msra.mxu0 %v67
    %949 = vmatprep.subr.mxu0 %v64
    %950 = vmatpush1.msra.mxu0 %v63
    %951 = vmatprep.subr.mxu0 %v60
    %952 = vmatpush1.msra.mxu0 %v59
    %953 = vmatprep.subr.mxu0 %v56
    %954 = vmatpush1.msra.mxu0 %v55
    %955 = vmatprep.subr.mxu0 %v52
    %956 = vmatpush1.msra.mxu0 %v51
    %957 = vmatprep.subr.mxu0 %v48
    %958 = vmatpush1.msra.mxu0 %v47
    %959 = vmatprep.subr.mxu0 0.0
    %960 = vmatpush2.msra.mxu0 0.0
    %961 = vmatprep.subr.mxu0 0.0
    %962 = vmatpush2.msra.mxu0 0.0
    %963 = vmatprep.subr.mxu0 0.0
    %964 = vmatpush2.msra.mxu0 0.0
    %965 = vmatprep.subr.mxu0 0.0
    %966 = vmatpush2.msra.mxu0 0.0
    %967 = vmatprep.subr.mxu0 0.0
    %968 = vmatpush2.msra.mxu0 0.0
    %969 = vmatprep.subr.mxu0 0.0
    %970 = vmatpush2.msra.mxu0 0.0
    %971 = vmatprep.subr.mxu0 0.0
    %972 = vmatpush2.msra.mxu0 0.0
    %973 = vmatprep.subr.mxu0 0.0
    %974 = vmatpush2.msra.mxu0 0.0
    %975 = vmatprep.subr.mxu0 0.0
    %976 = vmatpush2.msra.mxu0 0.0
    %977 = vmatprep.subr.mxu0 0.0
    %978 = vmatpush2.msra.mxu0 0.0
    %979 = vmatprep.subr.mxu0 0.0
    %980 = vmatpush2.msra.mxu0 0.0
    %981 = vmatprep.subr.mxu0 0.0
    %982 = vmatpush2.msra.mxu0 0.0
    %983 = vmatprep.subr.mxu0 0.0
    %984 = vmatpush2.msra.mxu0 0.0
    %985 = vmatprep.subr.mxu0 0.0
    %986 = vmatpush2.msra.mxu0 0.0
    %987 = vmatprep.subr.mxu0 0.0
    %988 = vmatpush2.msra.mxu0 0.0
    %989 = vmatprep.subr.mxu0 0.0
    %990 = vmatpush2.msra.mxu0 0.0
    %991 = vmatprep.mubr.f32.mxu0 0.0
    %992 = vmatmul.mubr.f32.gmra.mxu0 %v854
    %v993 = vpop.f32.mrf.mxu0
    %v994 = vadd.f32 0.0, %v993
    %v995 = vpop.f32.mrf.mxu0
    %v996 = vadd.f32 0.0, %v995
    %997 = vdwg.mxu0
    %v1002 = vrot.slane %v923, 2
    %v1003 = vrot.slane %v925, 2
    %v1004 = vrot.slane %v994, 2
    %v1005 = vrot.slane %v996, 2
    %v1010 = vadd.f32 %v221, %v1002
    %v1011 = vadd.f32 %v223, %v1003
    %v1012 = vadd.f32 %v298, %v1004
    %v1013 = vadd.f32 %v300, %v1005
    %v1014 = vxor.u32 %v1010, 2147483648
    %v1015 = vmul.f32 %v1014, 1.442695
    %v1016 = vpow.pop %v1015
    %v1017 = vadd.f32 %v1016, 1.0
    %v1018 = vrcp.pop %v1017
    %v1019 = vmul.f32 1.0, %v1018
    %v1020 = vxor.u32 %v1011, 2147483648
    %v1021 = vmul.f32 %v1020, 1.442695
    %v1022 = vpow.pop %v1021
    %v1023 = vadd.f32 %v1022, 1.0
    %v1024 = vrcp.pop %v1023
    %v1025 = vmul.f32 1.0, %v1024
    %v1026 = vtanh.pop %v1012
    %v1027 = vxor.u32 %v1013, 2147483648
    %v1028 = vmul.f32 %v1027, 1.442695
    %v1029 = vpow.pop %v1028
    %v1030 = vadd.f32 %v1029, 1.0
    %v1031 = vrcp.pop %v1030
    %v1032 = vmul.f32 1.0, %v1031
    %v1034 = vrot.slane %v850, 6
    %v1036 = vmul.f32 %v1025, %v1034
    %v1037 = vmul.f32 %v1019, %v1026
    %v1038 = vadd.f32 %v1036, %v1037
    %v1039 = vtanh.pop %v1038
    %v1040 = vmul.f32 %v1032, %v1039
    %v1042 = vrot.slane %v1040, 6
    %1044 = vmatprep.subr.mxu0 %v106
    %1045 = vmatpush1.msra.mxu0 %v105
    %1046 = vmatprep.subr.mxu0 %v102
    %1047 = vmatpush1.msra.mxu0 %v101
    %1048 = vmatprep.subr.mxu0 %v98
    %1049 = vmatpush1.msra.mxu0 %v97
    %1050 = vmatprep.subr.mxu0 %v94
    %1051 = vmatpush1.msra.mxu0 %v93
    %1052 = vmatprep.subr.mxu0 %v90
    %1053 = vmatpush1.msra.mxu0 %v89
    %1054 = vmatprep.subr.mxu0 %v86
    %1055 = vmatpush1.msra.mxu0 %v85
    %1056 = vmatprep.subr.mxu0 %v82
    %1057 = vmatpush1.msra.mxu0 %v81
    %1058 = vmatprep.subr.mxu0 %v78
    %1059 = vmatpush1.msra.mxu0 %v77
    %1060 = vmatprep.subr.mxu0 %v74
    %1061 = vmatpush1.msra.mxu0 %v73
    %1062 = vmatprep.subr.mxu0 %v70
    %1063 = vmatpush1.msra.mxu0 %v69
    %1064 = vmatprep.subr.mxu0 %v66
    %1065 = vmatpush1.msra.mxu0 %v65
    %1066 = vmatprep.subr.mxu0 %v62
    %1067 = vmatpush1.msra.mxu0 %v61
    %1068 = vmatprep.subr.mxu0 %v58
    %1069 = vmatpush1.msra.mxu0 %v57
    %1070 = vmatprep.subr.mxu0 %v54
    %1071 = vmatpush1.msra.mxu0 %v53
    %1072 = vmatprep.subr.mxu0 %v50
    %1073 = vmatpush1.msra.mxu0 %v49
    %1074 = vmatprep.subr.mxu0 %v46
    %1075 = vmatpush1.msra.mxu0 %v45
    %1076 = vmatprep.subr.mxu0 0.0
    %1077 = vmatpush2.msra.mxu0 0.0
    %1078 = vmatprep.subr.mxu0 0.0
    %1079 = vmatpush2.msra.mxu0 0.0
    %1080 = vmatprep.subr.mxu0 0.0
    %1081 = vmatpush2.msra.mxu0 0.0
    %1082 = vmatprep.subr.mxu0 0.0
    %1083 = vmatpush2.msra.mxu0 0.0
    %1084 = vmatprep.subr.mxu0 0.0
    %1085 = vmatpush2.msra.mxu0 0.0
    %1086 = vmatprep.subr.mxu0 0.0
    %1087 = vmatpush2.msra.mxu0 0.0
    %1088 = vmatprep.subr.mxu0 0.0
    %1089 = vmatpush2.msra.mxu0 0.0
    %1090 = vmatprep.subr.mxu0 0.0
    %1091 = vmatpush2.msra.mxu0 0.0
    %1092 = vmatprep.subr.mxu0 0.0
    %1093 = vmatpush2.msra.mxu0 0.0
    %1094 = vmatprep.subr.mxu0 0.0
    %1095 = vmatpush2.msra.mxu0 0.0
    %1096 = vmatprep.subr.mxu0 0.0
    %1097 = vmatpush2.msra.mxu0 0.0
    %1098 = vmatprep.subr.mxu0 0.0
    %1099 = vmatpush2.msra.mxu0 0.0
    %1100 = vmatprep.subr.mxu0 0.0
    %1101 = vmatpush2.msra.mxu0 0.0
    %1102 = vmatprep.subr.mxu0 0.0
    %1103 = vmatpush2.msra.mxu0 0.0
    %1104 = vmatprep.subr.mxu0 0.0
    %1105 = vmatpush2.msra.mxu0 0.0
    %1106 = vmatprep.subr.mxu0 0.0
    %1107 = vmatpush2.msra.mxu0 0.0
    %1108 = vmatprep.mubr.f32.mxu0 0.0
    %1109 = vmatmul.mubr.f32.gmra.mxu0 %v1042
    %v1110 = vpop.f32.mrf.mxu0
    %v1111 = vadd.f32 0.0, %v1110
    %v1112 = vpop.f32.mrf.mxu0
    %v1113 = vadd.f32 0.0, %v1112
    %1114 = vdwg.mxu0
    %1115 = vmatprep.subr.mxu0 %v108
    %1116 = vmatpush1.msra.mxu0 %v107
    %1117 = vmatprep.subr.mxu0 %v104
    %1118 = vmatpush1.msra.mxu0 %v103
    %1119 = vmatprep.subr.mxu0 %v100
    %1120 = vmatpush1.msra.mxu0 %v99
    %1121 = vmatprep.subr.mxu0 %v96
    %1122 = vmatpush1.msra.mxu0 %v95
    %1123 = vmatprep.subr.mxu0 %v92
    %1124 = vmatpush1.msra.mxu0 %v91
    %1125 = vmatprep.subr.mxu0 %v88
    %1126 = vmatpush1.msra.mxu0 %v87
    %1127 = vmatprep.subr.mxu0 %v84
    %1128 = vmatpush1.msra.mxu0 %v83
    %1129 = vmatprep.subr.mxu0 %v80
    %1130 = vmatpush1.msra.mxu0 %v79
    %1131 = vmatprep.subr.mxu0 %v76
    %1132 = vmatpush1.msra.mxu0 %v75
    %1133 = vmatprep.subr.mxu0 %v72
    %1134 = vmatpush1.msra.mxu0 %v71
    %1135 = vmatprep.subr.mxu0 %v68
    %1136 = vmatpush1.msra.mxu0 %v67
    %1137 = vmatprep.subr.mxu0 %v64
    %1138 = vmatpush1.msra.mxu0 %v63
    %1139 = vmatprep.subr.mxu0 %v60
    %1140 = vmatpush1.msra.mxu0 %v59
    %1141 = vmatprep.subr.mxu0 %v56
    %1142 = vmatpush1.msra.mxu0 %v55
    %1143 = vmatprep.subr.mxu0 %v52
    %1144 = vmatpush1.msra.mxu0 %v51
    %1145 = vmatprep.subr.mxu0 %v48
    %1146 = vmatpush1.msra.mxu0 %v47
    %1147 = vmatprep.subr.mxu0 0.0
    %1148 = vmatpush2.msra.mxu0 0.0
    %1149 = vmatprep.subr.mxu0 0.0
    %1150 = vmatpush2.msra.mxu0 0.0
    %1151 = vmatprep.subr.mxu0 0.0
    %1152 = vmatpush2.msra.mxu0 0.0
    %1153 = vmatprep.subr.mxu0 0.0
    %1154 = vmatpush2.msra.mxu0 0.0
    %1155 = vmatprep.subr.mxu0 0.0
    %1156 = vmatpush2.msra.mxu0 0.0
    %1157 = vmatprep.subr.mxu0 0.0
    %1158 = vmatpush2.msra.mxu0 0.0
    %1159 = vmatprep.subr.mxu0 0.0
    %1160 = vmatpush2.msra.mxu0 0.0
    %1161 = vmatprep.subr.mxu0 0.0
    %1162 = vmatpush2.msra.mxu0 0.0
    %1163 = vmatprep.subr.mxu0 0.0
    %1164 = vmatpush2.msra.mxu0 0.0
    %1165 = vmatprep.subr.mxu0 0.0
    %1166 = vmatpush2.msra.mxu0 0.0
    %1167 = vmatprep.subr.mxu0 0.0
    %1168 = vmatpush2.msra.mxu0 0.0
    %1169 = vmatprep.subr.mxu0 0.0
    %1170 = vmatpush2.msra.mxu0 0.0
    %1171 = vmatprep.subr.mxu0 0.0
    %1172 = vmatpush2.msra.mxu0 0.0
    %1173 = vmatprep.subr.mxu0 0.0
    %1174 = vmatpush2.msra.mxu0 0.0
    %1175 = vmatprep.subr.mxu0 0.0
    %1176 = vmatpush2.msra.mxu0 0.0
    %1177 = vmatprep.subr.mxu0 0.0
    %1178 = vmatpush2.msra.mxu0 0.0
    %1179 = vmatprep.mubr.f32.mxu0 0.0
    %1180 = vmatmul.mubr.f32.gmra.mxu0 %v1042
    %v1181 = vpop.f32.mrf.mxu0
    %v1182 = vadd.f32 0.0, %v1181
    %v1183 = vpop.f32.mrf.mxu0
    %v1184 = vadd.f32 0.0, %v1183
    %1185 = vdwg.mxu0
    %v1186 = vadd.f32 %v227, %v1111
    %v1187 = vadd.f32 %v229, %v1113
    %v1188 = vadd.f32 %v304, %v1182
    %v1189 = vadd.f32 %v306, %v1184
    %v1190 = vxor.u32 %v1186, 2147483648
    %v1191 = vmul.f32 %v1190, 1.442695
    %v1192 = vpow.pop %v1191
    %v1193 = vadd.f32 %v1192, 1.0
    %v1194 = vrcp.pop %v1193
    %v1195 = vmul.f32 1.0, %v1194
    %v1196 = vxor.u32 %v1187, 2147483648
    %v1197 = vmul.f32 %v1196, 1.442695
    %v1198 = vpow.pop %v1197
    %v1199 = vadd.f32 %v1198, 1.0
    %v1200 = vrcp.pop %v1199
    %v1201 = vmul.f32 1.0, %v1200
    %v1202 = vtanh.pop %v1188
    %v1203 = vxor.u32 %v1189, 2147483648
    %v1204 = vmul.f32 %v1203, 1.442695
    %v1205 = vpow.pop %v1204
    %v1206 = vadd.f32 %v1205, 1.0
    %v1207 = vrcp.pop %v1206
    %v1208 = vmul.f32 1.0, %v1207
    %v1210 = vrot.slane %v1038, 6
    %v1212 = vmul.f32 %v1201, %v1210
    %v1213 = vmul.f32 %v1195, %v1202
    %v1214 = vadd.f32 %v1212, %v1213
    %v1215 = vtanh.pop %v1214
    %v1216 = vmul.f32 %v1208, %v1215
    %1217 = vmatprep.subr.mxu0 %v106
    %1218 = vmatpush1.msra.mxu0 %v105
    %1219 = vmatprep.subr.mxu0 %v102
    %1220 = vmatpush1.msra.mxu0 %v101
    %1221 = vmatprep.subr.mxu0 %v98
    %1222 = vmatpush1.msra.mxu0 %v97
    %1223 = vmatprep.subr.mxu0 %v94
    %1224 = vmatpush1.msra.mxu0 %v93
    %1225 = vmatprep.subr.mxu0 %v90
    %1226 = vmatpush1.msra.mxu0 %v89
    %1227 = vmatprep.subr.mxu0 %v86
    %1228 = vmatpush1.msra.mxu0 %v85
    %1229 = vmatprep.subr.mxu0 %v82
    %1230 = vmatpush1.msra.mxu0 %v81
    %1231 = vmatprep.subr.mxu0 %v78
    %1232 = vmatpush1.msra.mxu0 %v77
    %1233 = vmatprep.subr.mxu0 %v74
    %1234 = vmatpush1.msra.mxu0 %v73
    %1235 = vmatprep.subr.mxu0 %v70
    %1236 = vmatpush1.msra.mxu0 %v69
    %1237 = vmatprep.subr.mxu0 %v66
    %1238 = vmatpush1.msra.mxu0 %v65
    %1239 = vmatprep.subr.mxu0 %v62
    %1240 = vmatpush1.msra.mxu0 %v61
    %1241 = vmatprep.subr.mxu0 %v58
    %1242 = vmatpush1.msra.mxu0 %v57
    %1243 = vmatprep.subr.mxu0 %v54
    %1244 = vmatpush1.msra.mxu0 %v53
    %1245 = vmatprep.subr.mxu0 %v50
    %1246 = vmatpush1.msra.mxu0 %v49
    %1247 = vmatprep.subr.mxu0 %v46
    %1248 = vmatpush1.msra.mxu0 %v45
    %1249 = vmatprep.subr.mxu0 0.0
    %1250 = vmatpush2.msra.mxu0 0.0
    %1251 = vmatprep.subr.mxu0 0.0
    %1252 = vmatpush2.msra.mxu0 0.0
    %1253 = vmatprep.subr.mxu0 0.0
    %1254 = vmatpush2.msra.mxu0 0.0
    %1255 = vmatprep.subr.mxu0 0.0
    %1256 = vmatpush2.msra.mxu0 0.0
    %1257 = vmatprep.subr.mxu0 0.0
    %1258 = vmatpush2.msra.mxu0 0.0
    %1259 = vmatprep.subr.mxu0 0.0
    %1260 = vmatpush2.msra.mxu0 0.0
    %1261 = vmatprep.subr.mxu0 0.0
    %1262 = vmatpush2.msra.mxu0 0.0
    %1263 = vmatprep.subr.mxu0 0.0
    %1264 = vmatpush2.msra.mxu0 0.0
    %1265 = vmatprep.subr.mxu0 0.0
    %1266 = vmatpush2.msra.mxu0 0.0
    %1267 = vmatprep.subr.mxu0 0.0
    %1268 = vmatpush2.msra.mxu0 0.0
    %1269 = vmatprep.subr.mxu0 0.0
    %1270 = vmatpush2.msra.mxu0 0.0
    %1271 = vmatprep.subr.mxu0 0.0
    %1272 = vmatpush2.msra.mxu0 0.0
    %1273 = vmatprep.subr.mxu0 0.0
    %1274 = vmatpush2.msra.mxu0 0.0
    %1275 = vmatprep.subr.mxu0 0.0
    %1276 = vmatpush2.msra.mxu0 0.0
    %1277 = vmatprep.subr.mxu0 0.0
    %1278 = vmatpush2.msra.mxu0 0.0
    %1279 = vmatprep.subr.mxu0 0.0
    %1280 = vmatpush2.msra.mxu0 0.0
    %1281 = vmatprep.mubr.f32.mxu0 0.0
    %1282 = vmatmul.mubr.f32.gmra.mxu0 %v1216
    %v1283 = vpop.f32.mrf.mxu0
    %v1284 = vadd.f32 0.0, %v1283
    %v1285 = vpop.f32.mrf.mxu0
    %v1286 = vadd.f32 0.0, %v1285
    %1287 = vdwg.mxu0
    %1288 = vmatprep.subr.mxu0 %v108
    %1289 = vmatpush1.msra.mxu0 %v107
    %1290 = vmatprep.subr.mxu0 %v104
    %1291 = vmatpush1.msra.mxu0 %v103
    %1292 = vmatprep.subr.mxu0 %v100
    %1293 = vmatpush1.msra.mxu0 %v99
    %1294 = vmatprep.subr.mxu0 %v96
    %1295 = vmatpush1.msra.mxu0 %v95
    %1296 = vmatprep.subr.mxu0 %v92
    %1297 = vmatpush1.msra.mxu0 %v91
    %1298 = vmatprep.subr.mxu0 %v88
    %1299 = vmatpush1.msra.mxu0 %v87
    %1300 = vmatprep.subr.mxu0 %v84
    %1301 = vmatpush1.msra.mxu0 %v83
    %1302 = vmatprep.subr.mxu0 %v80
    %1303 = vmatpush1.msra.mxu0 %v79
    %1304 = vmatprep.subr.mxu0 %v76
    %1305 = vmatpush1.msra.mxu0 %v75
    %1306 = vmatprep.subr.mxu0 %v72
    %1307 = vmatpush1.msra.mxu0 %v71
    %1308 = vmatprep.subr.mxu0 %v68
    %1309 = vmatpush1.msra.mxu0 %v67
    %1310 = vmatprep.subr.mxu0 %v64
    %1311 = vmatpush1.msra.mxu0 %v63
    %1312 = vmatprep.subr.mxu0 %v60
    %1313 = vmatpush1.msra.mxu0 %v59
    %1314 = vmatprep.subr.mxu0 %v56
    %1315 = vmatpush1.msra.mxu0 %v55
    %1316 = vmatprep.subr.mxu0 %v52
    %1317 = vmatpush1.msra.mxu0 %v51
    %1318 = vmatprep.subr.mxu0 %v48
    %1319 = vmatpush1.msra.mxu0 %v47
    %1320 = vmatprep.subr.mxu0 0.0
    %1321 = vmatpush2.msra.mxu0 0.0
    %1322 = vmatprep.subr.mxu0 0.0
    %1323 = vmatpush2.msra.mxu0 0.0
    %1324 = vmatprep.subr.mxu0 0.0
    %1325 = vmatpush2.msra.mxu0 0.0
    %1326 = vmatprep.subr.mxu0 0.0
    %1327 = vmatpush2.msra.mxu0 0.0
    %1328 = vmatprep.subr.mxu0 0.0
    %1329 = vmatpush2.msra.mxu0 0.0
    %1330 = vmatprep.subr.mxu0 0.0
    %1331 = vmatpush2.msra.mxu0 0.0
    %1332 = vmatprep.subr.mxu0 0.0
    %1333 = vmatpush2.msra.mxu0 0.0
    %1334 = vmatprep.subr.mxu0 0.0
    %1335 = vmatpush2.msra.mxu0 0.0
    %1336 = vmatprep.subr.mxu0 0.0
    %1337 = vmatpush2.msra.mxu0 0.0
    %1338 = vmatprep.subr.mxu0 0.0
    %1339 = vmatpush2.msra.mxu0 0.0
    %1340 = vmatprep.subr.mxu0 0.0
    %1341 = vmatpush2.msra.mxu0 0.0
    %1342 = vmatprep.subr.mxu0 0.0
    %1343 = vmatpush2.msra.mxu0 0.0
    %1344 = vmatprep.subr.mxu0 0.0
    %1345 = vmatpush2.msra.mxu0 0.0
    %1346 = vmatprep.subr.mxu0 0.0
    %1347 = vmatpush2.msra.mxu0 0.0
    %1348 = vmatprep.subr.mxu0 0.0
    %1349 = vmatpush2.msra.mxu0 0.0
    %1350 = vmatprep.subr.mxu0 0.0
    %1351 = vmatpush2.msra.mxu0 0.0
    %1352 = vmatprep.mubr.f32.mxu0 0.0
    %1353 = vmatmul.mubr.f32.gmra.mxu0 %v1216
    %v1354 = vpop.f32.mrf.mxu0
    %v1355 = vadd.f32 0.0, %v1354
    %v1356 = vpop.f32.mrf.mxu0
    %v1357 = vadd.f32 0.0, %v1356
    %1358 = vdwg.mxu0
    %v1363 = vrot.slane %v1284, 6
    %v1364 = vrot.slane %v1286, 6
    %v1365 = vrot.slane %v1355, 6
    %v1366 = vrot.slane %v1357, 6
    %v1371 = vadd.f32 %v227, %v1363
    %v1372 = vadd.f32 %v229, %v1364
    %v1373 = vadd.f32 %v304, %v1365
    %v1374 = vadd.f32 %v306, %v1366
    %v1375 = vxor.u32 %v1371, 2147483648
    %v1376 = vmul.f32 %v1375, 1.442695
    %v1377 = vpow.pop %v1376
    %v1378 = vadd.f32 %v1377, 1.0
    %v1379 = vrcp.pop %v1378
    %v1380 = vmul.f32 1.0, %v1379
    %v1381 = vxor.u32 %v1372, 2147483648
    %v1382 = vmul.f32 %v1381, 1.442695
    %v1383 = vpow.pop %v1382
    %v1384 = vadd.f32 %v1383, 1.0
    %v1385 = vrcp.pop %v1384
    %v1386 = vmul.f32 1.0, %v1385
    %v1387 = vtanh.pop %v1373
    %v1388 = vxor.u32 %v1374, 2147483648
    %v1389 = vmul.f32 %v1388, 1.442695
    %v1390 = vpow.pop %v1389
    %v1391 = vadd.f32 %v1390, 1.0
    %v1392 = vrcp.pop %v1391
    %v1393 = vmul.f32 1.0, %v1392
    %v1395 = vrot.slane %v1214, 6
    %v1397 = vmul.f32 %v1386, %v1395
    %v1398 = vmul.f32 %v1380, %v1387
    %v1399 = vadd.f32 %v1397, %v1398
    %v1400 = vtanh.pop %v1399
    %v1401 = vmul.f32 %v1393, %v1400
    %v1403 = vrot.slane %v1401, 2
    %1405 = vmatprep.subr.mxu0 %v106
    %1406 = vmatpush1.msra.mxu0 %v105
    %1407 = vmatprep.subr.mxu0 %v102
    %1408 = vmatpush1.msra.mxu0 %v101
    %1409 = vmatprep.subr.mxu0 %v98
    %1410 = vmatpush1.msra.mxu0 %v97
    %1411 = vmatprep.subr.mxu0 %v94
    %1412 = vmatpush1.msra.mxu0 %v93
    %1413 = vmatprep.subr.mxu0 %v90
    %1414 = vmatpush1.msra.mxu0 %v89
    %1415 = vmatprep.subr.mxu0 %v86
    %1416 = vmatpush1.msra.mxu0 %v85
    %1417 = vmatprep.subr.mxu0 %v82
    %1418 = vmatpush1.msra.mxu0 %v81
    %1419 = vmatprep.subr.mxu0 %v78
    %1420 = vmatpush1.msra.mxu0 %v77
    %1421 = vmatprep.subr.mxu0 %v74
    %1422 = vmatpush1.msra.mxu0 %v73
    %1423 = vmatprep.subr.mxu0 %v70
    %1424 = vmatpush1.msra.mxu0 %v69
    %1425 = vmatprep.subr.mxu0 %v66
    %1426 = vmatpush1.msra.mxu0 %v65
    %1427 = vmatprep.subr.mxu0 %v62
    %1428 = vmatpush1.msra.mxu0 %v61
    %1429 = vmatprep.subr.mxu0 %v58
    %1430 = vmatpush1.msra.mxu0 %v57
    %1431 = vmatprep.subr.mxu0 %v54
    %1432 = vmatpush1.msra.mxu0 %v53
    %1433 = vmatprep.subr.mxu0 %v50
    %1434 = vmatpush1.msra.mxu0 %v49
    %1435 = vmatprep.subr.mxu0 %v46
    %1436 = vmatpush1.msra.mxu0 %v45
    %1437 = vmatprep.subr.mxu0 0.0
    %1438 = vmatpush2.msra.mxu0 0.0
    %1439 = vmatprep.subr.mxu0 0.0
    %1440 = vmatpush2.msra.mxu0 0.0
    %1441 = vmatprep.subr.mxu0 0.0
    %1442 = vmatpush2.msra.mxu0 0.0
    %1443 = vmatprep.subr.mxu0 0.0
    %1444 = vmatpush2.msra.mxu0 0.0
    %1445 = vmatprep.subr.mxu0 0.0
    %1446 = vmatpush2.msra.mxu0 0.0
    %1447 = vmatprep.subr.mxu0 0.0
    %1448 = vmatpush2.msra.mxu0 0.0
    %1449 = vmatprep.subr.mxu0 0.0
    %1450 = vmatpush2.msra.mxu0 0.0
    %1451 = vmatprep.subr.mxu0 0.0
    %1452 = vmatpush2.msra.mxu0 0.0
    %1453 = vmatprep.subr.mxu0 0.0
    %1454 = vmatpush2.msra.mxu0 0.0
    %1455 = vmatprep.subr.mxu0 0.0
    %1456 = vmatpush2.msra.mxu0 0.0
    %1457 = vmatprep.subr.mxu0 0.0
    %1458 = vmatpush2.msra.mxu0 0.0
    %1459 = vmatprep.subr.mxu0 0.0
    %1460 = vmatpush2.msra.mxu0 0.0
    %1461 = vmatprep.subr.mxu0 0.0
    %1462 = vmatpush2.msra.mxu0 0.0
    %1463 = vmatprep.subr.mxu0 0.0
    %1464 = vmatpush2.msra.mxu0 0.0
    %1465 = vmatprep.subr.mxu0 0.0
    %1466 = vmatpush2.msra.mxu0 0.0
    %1467 = vmatprep.subr.mxu0 0.0
    %1468 = vmatpush2.msra.mxu0 0.0
    %1469 = vmatprep.mubr.f32.mxu0 0.0
    %1470 = vmatmul.mubr.f32.gmra.mxu0 %v1403
    %v1471 = vpop.f32.mrf.mxu0
    %v1472 = vadd.f32 0.0, %v1471
    %v1473 = vpop.f32.mrf.mxu0
    %v1474 = vadd.f32 0.0, %v1473
    %1475 = vdwg.mxu0
    %1476 = vmatprep.subr.mxu0 %v108
    %1477 = vmatpush1.msra.mxu0 %v107
    %1478 = vmatprep.subr.mxu0 %v104
    %1479 = vmatpush1.msra.mxu0 %v103
    %1480 = vmatprep.subr.mxu0 %v100
    %1481 = vmatpush1.msra.mxu0 %v99
    %1482 = vmatprep.subr.mxu0 %v96
    %1483 = vmatpush1.msra.mxu0 %v95
    %1484 = vmatprep.subr.mxu0 %v92
    %1485 = vmatpush1.msra.mxu0 %v91
    %1486 = vmatprep.subr.mxu0 %v88
    %1487 = vmatpush1.msra.mxu0 %v87
    %1488 = vmatprep.subr.mxu0 %v84
    %1489 = vmatpush1.msra.mxu0 %v83
    %1490 = vmatprep.subr.mxu0 %v80
    %1491 = vmatpush1.msra.mxu0 %v79
    %1492 = vmatprep.subr.mxu0 %v76
    %1493 = vmatpush1.msra.mxu0 %v75
    %1494 = vmatprep.subr.mxu0 %v72
    %1495 = vmatpush1.msra.mxu0 %v71
    %1496 = vmatprep.subr.mxu0 %v68
    %1497 = vmatpush1.msra.mxu0 %v67
    %1498 = vmatprep.subr.mxu0 %v64
    %1499 = vmatpush1.msra.mxu0 %v63
    %1500 = vmatprep.subr.mxu0 %v60
    %1501 = vmatpush1.msra.mxu0 %v59
    %1502 = vmatprep.subr.mxu0 %v56
    %1503 = vmatpush1.msra.mxu0 %v55
    %1504 = vmatprep.subr.mxu0 %v52
    %1505 = vmatpush1.msra.mxu0 %v51
    %1506 = vmatprep.subr.mxu0 %v48
    %1507 = vmatpush1.msra.mxu0 %v47
    %1508 = vmatprep.subr.mxu0 0.0
    %1509 = vmatpush2.msra.mxu0 0.0
    %1510 = vmatprep.subr.mxu0 0.0
    %1511 = vmatpush2.msra.mxu0 0.0
    %1512 = vmatprep.subr.mxu0 0.0
    %1513 = vmatpush2.msra.mxu0 0.0
    %1514 = vmatprep.subr.mxu0 0.0
    %1515 = vmatpush2.msra.mxu0 0.0
    %1516 = vmatprep.subr.mxu0 0.0
    %1517 = vmatpush2.msra.mxu0 0.0
    %1518 = vmatprep.subr.mxu0 0.0
    %1519 = vmatpush2.msra.mxu0 0.0
    %1520 = vmatprep.subr.mxu0 0.0
    %1521 = vmatpush2.msra.mxu0 0.0
    %1522 = vmatprep.subr.mxu0 0.0
    %1523 = vmatpush2.msra.mxu0 0.0
    %1524 = vmatprep.subr.mxu0 0.0
    %1525 = vmatpush2.msra.mxu0 0.0
    %1526 = vmatprep.subr.mxu0 0.0
    %1527 = vmatpush2.msra.mxu0 0.0
    %1528 = vmatprep.subr.mxu0 0.0
    %1529 = vmatpush2.msra.mxu0 0.0
    %1530 = vmatprep.subr.mxu0 0.0
    %1531 = vmatpush2.msra.mxu0 0.0
    %1532 = vmatprep.subr.mxu0 0.0
    %1533 = vmatpush2.msra.mxu0 0.0
    %1534 = vmatprep.subr.mxu0 0.0
    %1535 = vmatpush2.msra.mxu0 0.0
    %1536 = vmatprep.subr.mxu0 0.0
    %1537 = vmatpush2.msra.mxu0 0.0
    %1538 = vmatprep.subr.mxu0 0.0
    %1539 = vmatpush2.msra.mxu0 0.0
    %1540 = vmatprep.mubr.f32.mxu0 0.0
    %1541 = vmatmul.mubr.f32.gmra.mxu0 %v1403
    %v1542 = vpop.f32.mrf.mxu0
    %v1543 = vadd.f32 0.0, %v1542
    %v1544 = vpop.f32.mrf.mxu0
    %v1545 = vadd.f32 0.0, %v1544
    %1546 = vdwg.mxu0
    %v1551 = vrot.slane %v1472, 4
    %v1552 = vrot.slane %v1474, 4
    %v1553 = vrot.slane %v1543, 4
    %v1554 = vrot.slane %v1545, 4
    %v1559 = vadd.f32 %v227, %v1551
    %v1560 = vadd.f32 %v229, %v1552
    %v1561 = vadd.f32 %v304, %v1553
    %v1562 = vadd.f32 %v306, %v1554
    %v1563 = vxor.u32 %v1559, 2147483648
    %v1564 = vmul.f32 %v1563, 1.442695
    %v1565 = vpow.pop %v1564
    %v1566 = vadd.f32 %v1565, 1.0
    %v1567 = vrcp.pop %v1566
    %v1568 = vmul.f32 1.0, %v1567
    %v1569 = vxor.u32 %v1560, 2147483648
    %v1570 = vmul.f32 %v1569, 1.442695
    %v1571 = vpow.pop %v1570
    %v1572 = vadd.f32 %v1571, 1.0
    %v1573 = vrcp.pop %v1572
    %v1574 = vmul.f32 1.0, %v1573
    %v1575 = vtanh.pop %v1561
    %v1576 = vxor.u32 %v1562, 2147483648
    %v1577 = vmul.f32 %v1576, 1.442695
    %v1578 = vpow.pop %v1577
    %v1579 = vadd.f32 %v1578, 1.0
    %v1580 = vrcp.pop %v1579
    %v1581 = vmul.f32 1.0, %v1580
    %v1583 = vrot.slane %v1399, 6
    %v1585 = vmul.f32 %v1574, %v1583
    %v1586 = vmul.f32 %v1568, %v1575
    %v1587 = vadd.f32 %v1585, %v1586
    %v1588 = vtanh.pop %v1587
    %v1589 = vmul.f32 %v1581, %v1588
    %v1591 = vrot.slane %v1589, 4
    %1593 = vmatprep.subr.mxu0 %v106
    %1594 = vmatpush1.msra.mxu0 %v105
    %1595 = vmatprep.subr.mxu0 %v102
    %1596 = vmatpush1.msra.mxu0 %v101
    %1597 = vmatprep.subr.mxu0 %v98
    %1598 = vmatpush1.msra.mxu0 %v97
    %1599 = vmatprep.subr.mxu0 %v94
    %1600 = vmatpush1.msra.mxu0 %v93
    %1601 = vmatprep.subr.mxu0 %v90
    %1602 = vmatpush1.msra.mxu0 %v89
    %1603 = vmatprep.subr.mxu0 %v86
    %1604 = vmatpush1.msra.mxu0 %v85
    %1605 = vmatprep.subr.mxu0 %v82
    %1606 = vmatpush1.msra.mxu0 %v81
    %1607 = vmatprep.subr.mxu0 %v78
    %1608 = vmatpush1.msra.mxu0 %v77
    %1609 = vmatprep.subr.mxu0 %v74
    %1610 = vmatpush1.msra.mxu0 %v73
    %1611 = vmatprep.subr.mxu0 %v70
    %1612 = vmatpush1.msra.mxu0 %v69
    %1613 = vmatprep.subr.mxu0 %v66
    %1614 = vmatpush1.msra.mxu0 %v65
    %1615 = vmatprep.subr.mxu0 %v62
    %1616 = vmatpush1.msra.mxu0 %v61
    %1617 = vmatprep.subr.mxu0 %v58
    %1618 = vmatpush1.msra.mxu0 %v57
    %1619 = vmatprep.subr.mxu0 %v54
    %1620 = vmatpush1.msra.mxu0 %v53
    %1621 = vmatprep.subr.mxu0 %v50
    %1622 = vmatpush1.msra.mxu0 %v49
    %1623 = vmatprep.subr.mxu0 %v46
    %1624 = vmatpush1.msra.mxu0 %v45
    %1625 = vmatprep.subr.mxu0 0.0
    %1626 = vmatpush2.msra.mxu0 0.0
    %1627 = vmatprep.subr.mxu0 0.0
    %1628 = vmatpush2.msra.mxu0 0.0
    %1629 = vmatprep.subr.mxu0 0.0
    %1630 = vmatpush2.msra.mxu0 0.0
    %1631 = vmatprep.subr.mxu0 0.0
    %1632 = vmatpush2.msra.mxu0 0.0
    %1633 = vmatprep.subr.mxu0 0.0
    %1634 = vmatpush2.msra.mxu0 0.0
    %1635 = vmatprep.subr.mxu0 0.0
    %1636 = vmatpush2.msra.mxu0 0.0
    %1637 = vmatprep.subr.mxu0 0.0
    %1638 = vmatpush2.msra.mxu0 0.0
    %1639 = vmatprep.subr.mxu0 0.0
    %1640 = vmatpush2.msra.mxu0 0.0
    %1641 = vmatprep.subr.mxu0 0.0
    %1642 = vmatpush2.msra.mxu0 0.0
    %1643 = vmatprep.subr.mxu0 0.0
    %1644 = vmatpush2.msra.mxu0 0.0
    %1645 = vmatprep.subr.mxu0 0.0
    %1646 = vmatpush2.msra.mxu0 0.0
    %1647 = vmatprep.subr.mxu0 0.0
    %1648 = vmatpush2.msra.mxu0 0.0
    %1649 = vmatprep.subr.mxu0 0.0
    %1650 = vmatpush2.msra.mxu0 0.0
    %1651 = vmatprep.subr.mxu0 0.0
    %1652 = vmatpush2.msra.mxu0 0.0
    %1653 = vmatprep.subr.mxu0 0.0
    %1654 = vmatpush2.msra.mxu0 0.0
    %1655 = vmatprep.subr.mxu0 0.0
    %1656 = vmatpush2.msra.mxu0 0.0
    %1657 = vmatprep.mubr.f32.mxu0 0.0
    %1658 = vmatmul.mubr.f32.gmra.mxu0 %v1591
    %v1659 = vpop.f32.mrf.mxu0
    %v1660 = vadd.f32 0.0, %v1659
    %v1661 = vpop.f32.mrf.mxu0
    %v1662 = vadd.f32 0.0, %v1661
    %1663 = vdwg.mxu0
    %1664 = vmatprep.subr.mxu0 %v108
    %1665 = vmatpush1.msra.mxu0 %v107
    %1666 = vmatprep.subr.mxu0 %v104
    %1667 = vmatpush1.msra.mxu0 %v103
    %1668 = vmatprep.subr.mxu0 %v100
    %1669 = vmatpush1.msra.mxu0 %v99
    %1670 = vmatprep.subr.mxu0 %v96
    %1671 = vmatpush1.msra.mxu0 %v95
    %1672 = vmatprep.subr.mxu0 %v92
    %1673 = vmatpush1.msra.mxu0 %v91
    %1674 = vmatprep.subr.mxu0 %v88
    %1675 = vmatpush1.msra.mxu0 %v87
    %1676 = vmatprep.subr.mxu0 %v84
    %1677 = vmatpush1.msra.mxu0 %v83
    %1678 = vmatprep.subr.mxu0 %v80
    %1679 = vmatpush1.msra.mxu0 %v79
    %1680 = vmatprep.subr.mxu0 %v76
    %1681 = vmatpush1.msra.mxu0 %v75
    %1682 = vmatprep.subr.mxu0 %v72
    %1683 = vmatpush1.msra.mxu0 %v71
    %1684 = vmatprep.subr.mxu0 %v68
    %1685 = vmatpush1.msra.mxu0 %v67
    %1686 = vmatprep.subr.mxu0 %v64
    %1687 = vmatpush1.msra.mxu0 %v63
    %1688 = vmatprep.subr.mxu0 %v60
    %1689 = vmatpush1.msra.mxu0 %v59
    %1690 = vmatprep.subr.mxu0 %v56
    %1691 = vmatpush1.msra.mxu0 %v55
    %1692 = vmatprep.subr.mxu0 %v52
    %1693 = vmatpush1.msra.mxu0 %v51
    %1694 = vmatprep.subr.mxu0 %v48
    %1695 = vmatpush1.msra.mxu0 %v47
    %1696 = vmatprep.subr.mxu0 0.0
    %1697 = vmatpush2.msra.mxu0 0.0
    %1698 = vmatprep.subr.mxu0 0.0
    %1699 = vmatpush2.msra.mxu0 0.0
    %1700 = vmatprep.subr.mxu0 0.0
    %1701 = vmatpush2.msra.mxu0 0.0
    %1702 = vmatprep.subr.mxu0 0.0
    %1703 = vmatpush2.msra.mxu0 0.0
    %1704 = vmatprep.subr.mxu0 0.0
    %1705 = vmatpush2.msra.mxu0 0.0
    %1706 = vmatprep.subr.mxu0 0.0
    %1707 = vmatpush2.msra.mxu0 0.0
    %1708 = vmatprep.subr.mxu0 0.0
    %1709 = vmatpush2.msra.mxu0 0.0
    %1710 = vmatprep.subr.mxu0 0.0
    %1711 = vmatpush2.msra.mxu0 0.0
    %1712 = vmatprep.subr.mxu0 0.0
    %1713 = vmatpush2.msra.mxu0 0.0
    %1714 = vmatprep.subr.mxu0 0.0
    %1715 = vmatpush2.msra.mxu0 0.0
    %1716 = vmatprep.subr.mxu0 0.0
    %1717 = vmatpush2.msra.mxu0 0.0
    %1718 = vmatprep.subr.mxu0 0.0
    %1719 = vmatpush2.msra.mxu0 0.0
    %1720 = vmatprep.subr.mxu0 0.0
    %1721 = vmatpush2.msra.mxu0 0.0
    %1722 = vmatprep.subr.mxu0 0.0
    %1723 = vmatpush2.msra.mxu0 0.0
    %1724 = vmatprep.subr.mxu0 0.0
    %1725 = vmatpush2.msra.mxu0 0.0
    %1726 = vmatprep.subr.mxu0 0.0
    %1727 = vmatpush2.msra.mxu0 0.0
    %1728 = vmatprep.mubr.f32.mxu0 0.0
    %1729 = vmatmul.mubr.f32.gmra.mxu0 %v1591
    %v1730 = vpop.f32.mrf.mxu0
    %v1731 = vadd.f32 0.0, %v1730
    %v1732 = vpop.f32.mrf.mxu0
    %v1733 = vadd.f32 0.0, %v1732
    %1734 = vdwg.mxu0
    %v1739 = vrot.slane %v1660, 2
    %v1740 = vrot.slane %v1662, 2
    %v1741 = vrot.slane %v1731, 2
    %v1742 = vrot.slane %v1733, 2
    %v1747 = vadd.f32 %v227, %v1739
    %v1748 = vadd.f32 %v229, %v1740
    %v1749 = vadd.f32 %v304, %v1741
    %v1750 = vadd.f32 %v306, %v1742
    %v1751 = vxor.u32 %v1747, 2147483648
    %v1752 = vmul.f32 %v1751, 1.442695
    %v1753 = vpow.pop %v1752
    %v1754 = vadd.f32 %v1753, 1.0
    %v1755 = vrcp.pop %v1754
    %v1756 = vmul.f32 1.0, %v1755
    %v1757 = vxor.u32 %v1748, 2147483648
    %v1758 = vmul.f32 %v1757, 1.442695
    %v1759 = vpow.pop %v1758
    %v1760 = vadd.f32 %v1759, 1.0
    %v1761 = vrcp.pop %v1760
    %v1762 = vmul.f32 1.0, %v1761
    %v1763 = vtanh.pop %v1749
    %v1764 = vxor.u32 %v1750, 2147483648
    %v1765 = vmul.f32 %v1764, 1.442695
    %v1766 = vpow.pop %v1765
    %v1767 = vadd.f32 %v1766, 1.0
    %v1768 = vrcp.pop %v1767
    %v1769 = vmul.f32 1.0, %v1768
    %v1771 = vrot.slane %v1587, 6
    %v1773 = vmul.f32 %v1762, %v1771
    %v1774 = vmul.f32 %v1756, %v1763
    %v1775 = vadd.f32 %v1773, %v1774
    %v1776 = vtanh.pop %v1775
    %v1777 = vmul.f32 %v1769, %v1776
    %vm1778 = vcmask 523270
    %1779 = vst.msk [vmem:[#allocation4 - $0x6] sm:$0xc0] %vm1778, %v1777
    %1780 = vst.msk [vmem:[#allocation6 - $0x6] sm:$0xc0] %vm1778, %v1775
    %vm1781 = vcmask 1041408
    %v1782 = vsel %vm1781, %v479, %v664
    %vm1783 = vcmask 1043456
    %v1784 = vsel %vm1783, %v1782, %v852
    %vm1785 = vcmask 1045504
    %v1786 = vsel %vm1785, %v1784, %v1040
    %v1787 = vsel %vm1781, %v1216, %v1401
    %v1788 = vsel %vm1783, %v1787, %v1589
    %v1789 = vsel %vm1785, %v1788, %v1777
    %v1790 = vld [vmem:[%s5] sm:$0xff]
    %v1791 = vld [vmem:[%s5 + $0x8] sm:$0xff]
    %v1792 = vld [vmem:[%s5 + $0x10] sm:$0xff]
    %v1793 = vld [vmem:[%s5 + $0x18] sm:$0xff]
    %v1794 = vld [vmem:[%s5 + $0x20] sm:$0xff]
    %v1795 = vld [vmem:[%s5 + $0x28] sm:$0xff]
    %v1796 = vld [vmem:[%s5 + $0x30] sm:$0xff]
    %v1797 = vld [vmem:[%s5 + $0x38] sm:$0xff]
    %v1798 = vld [vmem:[%s5 + $0x40] sm:$0xff]
    %v1799 = vld [vmem:[%s5 + $0x48] sm:$0xff]
    %v1800 = vld [vmem:[%s5 + $0x50] sm:$0xff]
    %v1801 = vld [vmem:[%s5 + $0x58] sm:$0xff]
    %v1802 = vld [vmem:[%s5 + $0x60] sm:$0xff]
    %v1803 = vld [vmem:[%s5 + $0x68] sm:$0xff]
    %v1804 = vld [vmem:[%s5 + $0x70] sm:$0xff]
    %v1805 = vld [vmem:[%s5 + $0x78] sm:$0xff]
    %v1806 = vld [vmem:[%s5 + $0x80] sm:$0xff]
    %v1807 = vld [vmem:[%s5 + $0x88] sm:$0xff]
    %v1808 = vld [vmem:[%s5 + $0x90] sm:$0xff]
    %v1809 = vld [vmem:[%s5 + $0x98] sm:$0xff]
    %v1810 = vld [vmem:[%s5 + $0xa0] sm:$0xff]
    %v1811 = vld [vmem:[%s5 + $0xa8] sm:$0xff]
    %v1812 = vld [vmem:[%s5 + $0xb0] sm:$0xff]
    %v1813 = vld [vmem:[%s5 + $0xb8] sm:$0xff]
    %v1814 = vld [vmem:[%s5 + $0xc0] sm:$0xff]
    %v1815 = vld [vmem:[%s5 + $0xc8] sm:$0xff]
    %v1816 = vld [vmem:[%s5 + $0xd0] sm:$0xff]
    %v1817 = vld [vmem:[%s5 + $0xd8] sm:$0xff]
    %v1818 = vld [vmem:[%s5 + $0xe0] sm:$0xff]
    %v1819 = vld [vmem:[%s5 + $0xe8] sm:$0xff]
    %v1820 = vld [vmem:[%s5 + $0xf0] sm:$0xff]
    %v1821 = vld [vmem:[%s5 + $0xf8] sm:$0xff]
    %v1822 = vld [vmem:[%s5 + $0x100] sm:$0xff]
    %v1823 = vld [vmem:[%s5 + $0x108] sm:$0xff]
    %v1824 = vld [vmem:[%s5 + $0x110] sm:$0xff]
    %v1825 = vld [vmem:[%s5 + $0x118] sm:$0xff]
    %v1826 = vld [vmem:[%s5 + $0x120] sm:$0xff]
    %v1827 = vld [vmem:[%s5 + $0x128] sm:$0xff]
    %v1828 = vld [vmem:[%s5 + $0x130] sm:$0xff]
    %v1829 = vld [vmem:[%s5 + $0x138] sm:$0xff]
    %v1830 = vld [vmem:[%s5 + $0x140] sm:$0xff]
    %v1831 = vld [vmem:[%s5 + $0x148] sm:$0xff]
    %v1832 = vld [vmem:[%s5 + $0x150] sm:$0xff]
    %v1833 = vld [vmem:[%s5 + $0x158] sm:$0xff]
    %v1834 = vld [vmem:[%s5 + $0x160] sm:$0xff]
    %v1835 = vld [vmem:[%s5 + $0x168] sm:$0xff]
    %v1836 = vld [vmem:[%s5 + $0x170] sm:$0xff]
    %v1837 = vld [vmem:[%s5 + $0x178] sm:$0xff]
    %v1838 = vld [vmem:[%s5 + $0x180] sm:$0xff]
    %v1839 = vld [vmem:[%s5 + $0x188] sm:$0xff]
    %v1840 = vld [vmem:[%s5 + $0x190] sm:$0xff]
    %v1841 = vld [vmem:[%s5 + $0x198] sm:$0xff]
    %v1842 = vld [vmem:[%s5 + $0x1a0] sm:$0xff]
    %v1843 = vld [vmem:[%s5 + $0x1a8] sm:$0xff]
    %v1844 = vld [vmem:[%s5 + $0x1b0] sm:$0xff]
    %v1845 = vld [vmem:[%s5 + $0x1b8] sm:$0xff]
    %v1846 = vld [vmem:[%s5 + $0x1c0] sm:$0xff]
    %v1847 = vld [vmem:[%s5 + $0x1c8] sm:$0xff]
    %v1848 = vld [vmem:[%s5 + $0x1d0] sm:$0xff]
    %v1849 = vld [vmem:[%s5 + $0x1d8] sm:$0xff]
    %v1850 = vld [vmem:[%s5 + $0x1e0] sm:$0xff]
    %v1851 = vld [vmem:[%s5 + $0x1e8] sm:$0xff]
    %v1852 = vld [vmem:[%s5 + $0x1f0] sm:$0xff]
    %v1853 = vld [vmem:[%s5 + $0x1f8] sm:$0xff]
    %v1854 = vld [vmem:[%s4] sm:$0xff]
    %v1855 = vld [vmem:[%s4 + $0x8] sm:$0xff]
    %v1856 = vld [vmem:[%s4 + $0x10] sm:$0xff]
    %v1857 = vld [vmem:[%s4 + $0x18] sm:$0xff]
    %v1858 = vld [vmem:[%s4 + $0x20] sm:$0xff]
    %v1859 = vld [vmem:[%s4 + $0x28] sm:$0xff]
    %v1860 = vld [vmem:[%s4 + $0x30] sm:$0xff]
    %v1861 = vld [vmem:[%s4 + $0x38] sm:$0xff]
    %v1862 = vld [vmem:[%s4 + $0x40] sm:$0xff]
    %v1863 = vld [vmem:[%s4 + $0x48] sm:$0xff]
    %v1864 = vld [vmem:[%s4 + $0x50] sm:$0xff]
    %v1865 = vld [vmem:[%s4 + $0x58] sm:$0xff]
    %v1866 = vld [vmem:[%s4 + $0x60] sm:$0xff]
    %v1867 = vld [vmem:[%s4 + $0x68] sm:$0xff]
    %v1868 = vld [vmem:[%s4 + $0x70] sm:$0xff]
    %v1869 = vld [vmem:[%s4 + $0x78] sm:$0xff]
    %v1870 = vld [vmem:[%s4 + $0x80] sm:$0xff]
    %v1871 = vld [vmem:[%s4 + $0x88] sm:$0xff]
    %v1872 = vld [vmem:[%s4 + $0x90] sm:$0xff]
    %v1873 = vld [vmem:[%s4 + $0x98] sm:$0xff]
    %v1874 = vld [vmem:[%s4 + $0xa0] sm:$0xff]
    %v1875 = vld [vmem:[%s4 + $0xa8] sm:$0xff]
    %v1876 = vld [vmem:[%s4 + $0xb0] sm:$0xff]
    %v1877 = vld [vmem:[%s4 + $0xb8] sm:$0xff]
    %v1878 = vld [vmem:[%s4 + $0xc0] sm:$0xff]
    %v1879 = vld [vmem:[%s4 + $0xc8] sm:$0xff]
    %v1880 = vld [vmem:[%s4 + $0xd0] sm:$0xff]
    %v1881 = vld [vmem:[%s4 + $0xd8] sm:$0xff]
    %v1882 = vld [vmem:[%s4 + $0xe0] sm:$0xff]
    %v1883 = vld [vmem:[%s4 + $0xe8] sm:$0xff]
    %v1884 = vld [vmem:[%s4 + $0xf0] sm:$0xff]
    %v1885 = vld [vmem:[%s4 + $0xf8] sm:$0xff]
    %v1886 = vld [vmem:[%s4 + $0x100] sm:$0xff]
    %v1887 = vld [vmem:[%s4 + $0x108] sm:$0xff]
    %v1888 = vld [vmem:[%s4 + $0x110] sm:$0xff]
    %v1889 = vld [vmem:[%s4 + $0x118] sm:$0xff]
    %v1890 = vld [vmem:[%s4 + $0x120] sm:$0xff]
    %v1891 = vld [vmem:[%s4 + $0x128] sm:$0xff]
    %v1892 = vld [vmem:[%s4 + $0x130] sm:$0xff]
    %v1893 = vld [vmem:[%s4 + $0x138] sm:$0xff]
    %v1894 = vld [vmem:[%s4 + $0x140] sm:$0xff]
    %v1895 = vld [vmem:[%s4 + $0x148] sm:$0xff]
    %v1896 = vld [vmem:[%s4 + $0x150] sm:$0xff]
    %v1897 = vld [vmem:[%s4 + $0x158] sm:$0xff]
    %v1898 = vld [vmem:[%s4 + $0x160] sm:$0xff]
    %v1899 = vld [vmem:[%s4 + $0x168] sm:$0xff]
    %v1900 = vld [vmem:[%s4 + $0x170] sm:$0xff]
    %v1901 = vld [vmem:[%s4 + $0x178] sm:$0xff]
    %v1902 = vld [vmem:[%s4 + $0x180] sm:$0xff]
    %v1903 = vld [vmem:[%s4 + $0x188] sm:$0xff]
    %v1904 = vld [vmem:[%s4 + $0x190] sm:$0xff]
    %v1905 = vld [vmem:[%s4 + $0x198] sm:$0xff]
    %v1906 = vld [vmem:[%s4 + $0x1a0] sm:$0xff]
    %v1907 = vld [vmem:[%s4 + $0x1a8] sm:$0xff]
    %v1908 = vld [vmem:[%s4 + $0x1b0] sm:$0xff]
    %v1909 = vld [vmem:[%s4 + $0x1b8] sm:$0xff]
    %v1910 = vld [vmem:[%s4 + $0x1c0] sm:$0xff]
    %v1911 = vld [vmem:[%s4 + $0x1c8] sm:$0xff]
    %v1912 = vld [vmem:[%s4 + $0x1d0] sm:$0xff]
    %v1913 = vld [vmem:[%s4 + $0x1d8] sm:$0xff]
    %v1914 = vld [vmem:[%s4 + $0x1e0] sm:$0xff]
    %v1915 = vld [vmem:[%s4 + $0x1e8] sm:$0xff]
    %v1916 = vld [vmem:[%s4 + $0x1f0] sm:$0xff]
    %v1917 = vld [vmem:[%s4 + $0x1f8] sm:$0xff]
    %v1918 = vld [vmem:[%s6] sm:$0xf]
    %v1920 = vlaneseq
    %v1921 = vshrl.u32 %v1920, 7
    %v1922 = vsub.s32 0, %v1921
    %v1923 = vrot.slane %v1918, %v1922
    %v1924 = vlaneseq
    %v1925 = vshrl.u32 %v1924, 7
    %v1926 = vsub.s32 1, %v1925
    %v1927 = vrot.slane %v1918, %v1926
    %v1928 = vlaneseq
    %v1929 = vshrl.u32 %v1928, 7
    %v1930 = vsub.s32 2, %v1929
    %v1931 = vrot.slane %v1918, %v1930
    %v1932 = vlaneseq
    %v1933 = vshrl.u32 %v1932, 7
    %v1934 = vsub.s32 3, %v1933
    %v1935 = vrot.slane %v1918, %v1934
    %1940 = vmatprep.subr.mxu0 %v1915
    %1941 = vmatpush1.msra.mxu0 %v1914
    %1942 = vmatprep.subr.mxu0 %v1911
    %1943 = vmatpush1.msra.mxu0 %v1910
    %1944 = vmatprep.subr.mxu0 %v1907
    %1945 = vmatpush1.msra.mxu0 %v1906
    %1946 = vmatprep.subr.mxu0 %v1903
    %1947 = vmatpush1.msra.mxu0 %v1902
    %1948 = vmatprep.subr.mxu0 %v1899
    %1949 = vmatpush1.msra.mxu0 %v1898
    %1950 = vmatprep.subr.mxu0 %v1895
    %1951 = vmatpush1.msra.mxu0 %v1894
    %1952 = vmatprep.subr.mxu0 %v1891
    %1953 = vmatpush1.msra.mxu0 %v1890
    %1954 = vmatprep.subr.mxu0 %v1887
    %1955 = vmatpush1.msra.mxu0 %v1886
    %1956 = vmatprep.subr.mxu0 %v1883
    %1957 = vmatpush1.msra.mxu0 %v1882
    %1958 = vmatprep.subr.mxu0 %v1879
    %1959 = vmatpush1.msra.mxu0 %v1878
    %1960 = vmatprep.subr.mxu0 %v1875
    %1961 = vmatpush1.msra.mxu0 %v1874
    %1962 = vmatprep.subr.mxu0 %v1871
    %1963 = vmatpush1.msra.mxu0 %v1870
    %1964 = vmatprep.subr.mxu0 %v1867
    %1965 = vmatpush1.msra.mxu0 %v1866
    %1966 = vmatprep.subr.mxu0 %v1863
    %1967 = vmatpush1.msra.mxu0 %v1862
    %1968 = vmatprep.subr.mxu0 %v1859
    %1969 = vmatpush1.msra.mxu0 %v1858
    %1970 = vmatprep.subr.mxu0 %v1855
    %1971 = vmatpush1.msra.mxu0 %v1854
    %1972 = vmatprep.subr.mxu0 0.0
    %1973 = vmatpush2.msra.mxu0 0.0
    %1974 = vmatprep.subr.mxu0 0.0
    %1975 = vmatpush2.msra.mxu0 0.0
    %1976 = vmatprep.subr.mxu0 0.0
    %1977 = vmatpush2.msra.mxu0 0.0
    %1978 = vmatprep.subr.mxu0 0.0
    %1979 = vmatpush2.msra.mxu0 0.0
    %1980 = vmatprep.subr.mxu0 0.0
    %1981 = vmatpush2.msra.mxu0 0.0
    %1982 = vmatprep.subr.mxu0 0.0
    %1983 = vmatpush2.msra.mxu0 0.0
    %1984 = vmatprep.subr.mxu0 0.0
    %1985 = vmatpush2.msra.mxu0 0.0
    %1986 = vmatprep.subr.mxu0 0.0
    %1987 = vmatpush2.msra.mxu0 0.0
    %1988 = vmatprep.subr.mxu0 0.0
    %1989 = vmatpush2.msra.mxu0 0.0
    %1990 = vmatprep.subr.mxu0 0.0
    %1991 = vmatpush2.msra.mxu0 0.0
    %1992 = vmatprep.subr.mxu0 0.0
    %1993 = vmatpush2.msra.mxu0 0.0
    %1994 = vmatprep.subr.mxu0 0.0
    %1995 = vmatpush2.msra.mxu0 0.0
    %1996 = vmatprep.subr.mxu0 0.0
    %1997 = vmatpush2.msra.mxu0 0.0
    %1998 = vmatprep.subr.mxu0 0.0
    %1999 = vmatpush2.msra.mxu0 0.0
    %2000 = vmatprep.subr.mxu0 0.0
    %2001 = vmatpush2.msra.mxu0 0.0
    %2002 = vmatprep.subr.mxu0 0.0
    %2003 = vmatpush2.msra.mxu0 0.0
    %2004 = vmatprep.mubr.f32.mxu0 0.0
    %2005 = vmatmul.mubr.f32.gmra.mxu0 %v1786
    %v2006 = vpop.f32.mrf.mxu0
    %v2007 = vadd.f32 %v1923, %v2006
    %v2008 = vpop.f32.mrf.mxu0
    %v2009 = vadd.f32 %v1927, %v2008
    %2010 = vmatprep.mubr.f32.mxu0 0.0
    %2011 = vmatmul.mubr.f32.gmra.mxu0 %v1789
    %v2012 = vpop.f32.mrf.mxu0
    %v2013 = vadd.f32 %v1923, %v2012
    %v2014 = vpop.f32.mrf.mxu0
    %v2015 = vadd.f32 %v1927, %v2014
    %2016 = vdwg.mxu0
    %2017 = vmatprep.subr.mxu0 %v1917
    %2018 = vmatpush1.msra.mxu0 %v1916
    %2019 = vmatprep.subr.mxu0 %v1913
    %2020 = vmatpush1.msra.mxu0 %v1912
    %2021 = vmatprep.subr.mxu0 %v1909
    %2022 = vmatpush1.msra.mxu0 %v1908
    %2023 = vmatprep.subr.mxu0 %v1905
    %2024 = vmatpush1.msra.mxu0 %v1904
    %2025 = vmatprep.subr.mxu0 %v1901
    %2026 = vmatpush1.msra.mxu0 %v1900
    %2027 = vmatprep.subr.mxu0 %v1897
    %2028 = vmatpush1.msra.mxu0 %v1896
    %2029 = vmatprep.subr.mxu0 %v1893
    %2030 = vmatpush1.msra.mxu0 %v1892
    %2031 = vmatprep.subr.mxu0 %v1889
    %2032 = vmatpush1.msra.mxu0 %v1888
    %2033 = vmatprep.subr.mxu0 %v1885
    %2034 = vmatpush1.msra.mxu0 %v1884
    %2035 = vmatprep.subr.mxu0 %v1881
    %2036 = vmatpush1.msra.mxu0 %v1880
    %2037 = vmatprep.subr.mxu0 %v1877
    %2038 = vmatpush1.msra.mxu0 %v1876
    %2039 = vmatprep.subr.mxu0 %v1873
    %2040 = vmatpush1.msra.mxu0 %v1872
    %2041 = vmatprep.subr.mxu0 %v1869
    %2042 = vmatpush1.msra.mxu0 %v1868
    %2043 = vmatprep.subr.mxu0 %v1865
    %2044 = vmatpush1.msra.mxu0 %v1864
    %2045 = vmatprep.subr.mxu0 %v1861
    %2046 = vmatpush1.msra.mxu0 %v1860
    %2047 = vmatprep.subr.mxu0 %v1857
    %2048 = vmatpush1.msra.mxu0 %v1856
    %2049 = vmatprep.subr.mxu0 0.0
    %2050 = vmatpush2.msra.mxu0 0.0
    %2051 = vmatprep.subr.mxu0 0.0
    %2052 = vmatpush2.msra.mxu0 0.0
    %2053 = vmatprep.subr.mxu0 0.0
    %2054 = vmatpush2.msra.mxu0 0.0
    %2055 = vmatprep.subr.mxu0 0.0
    %2056 = vmatpush2.msra.mxu0 0.0
    %2057 = vmatprep.subr.mxu0 0.0
    %2058 = vmatpush2.msra.mxu0 0.0
    %2059 = vmatprep.subr.mxu0 0.0
    %2060 = vmatpush2.msra.mxu0 0.0
    %2061 = vmatprep.subr.mxu0 0.0
    %2062 = vmatpush2.msra.mxu0 0.0
    %2063 = vmatprep.subr.mxu0 0.0
    %2064 = vmatpush2.msra.mxu0 0.0
    %2065 = vmatprep.subr.mxu0 0.0
    %2066 = vmatpush2.msra.mxu0 0.0
    %2067 = vmatprep.subr.mxu0 0.0
    %2068 = vmatpush2.msra.mxu0 0.0
    %2069 = vmatprep.subr.mxu0 0.0
    %2070 = vmatpush2.msra.mxu0 0.0
    %2071 = vmatprep.subr.mxu0 0.0
    %2072 = vmatpush2.msra.mxu0 0.0
    %2073 = vmatprep.subr.mxu0 0.0
    %2074 = vmatpush2.msra.mxu0 0.0
    %2075 = vmatprep.subr.mxu0 0.0
    %2076 = vmatpush2.msra.mxu0 0.0
    %2077 = vmatprep.subr.mxu0 0.0
    %2078 = vmatpush2.msra.mxu0 0.0
    %2079 = vmatprep.subr.mxu0 0.0
    %2080 = vmatpush2.msra.mxu0 0.0
    %2081 = vmatprep.mubr.f32.mxu0 0.0
    %2082 = vmatmul.mubr.f32.gmra.mxu0 %v1786
    %v2083 = vpop.f32.mrf.mxu0
    %v2084 = vadd.f32 %v1931, %v2083
    %v2085 = vpop.f32.mrf.mxu0
    %v2086 = vadd.f32 %v1935, %v2085
    %2087 = vmatprep.mubr.f32.mxu0 0.0
    %2088 = vmatmul.mubr.f32.gmra.mxu0 %v1789
    %v2089 = vpop.f32.mrf.mxu0
    %v2090 = vadd.f32 %v1931, %v2089
    %v2091 = vpop.f32.mrf.mxu0
    %v2092 = vadd.f32 %v1935, %v2091
    %2093 = vdwg.mxu0
    %s2094 = scalar_lea.vmem %s9, 2
    %v2095 = vld [vmem:[%s2094] sm:$0x3]
    %s2096 = scalar_lea.vmem %s10, 2
    %v2097 = vld [vmem:[%s2096] sm:$0x3]
    %2098 = vmatprep.subr.mxu0 %v1851
    %2099 = vmatpush1.msra.mxu0 %v1850
    %2100 = vmatprep.subr.mxu0 %v1847
    %2101 = vmatpush1.msra.mxu0 %v1846
    %2102 = vmatprep.subr.mxu0 %v1843
    %2103 = vmatpush1.msra.mxu0 %v1842
    %2104 = vmatprep.subr.mxu0 %v1839
    %2105 = vmatpush1.msra.mxu0 %v1838
    %2106 = vmatprep.subr.mxu0 %v1835
    %2107 = vmatpush1.msra.mxu0 %v1834
    %2108 = vmatprep.subr.mxu0 %v1831
    %2109 = vmatpush1.msra.mxu0 %v1830
    %2110 = vmatprep.subr.mxu0 %v1827
    %2111 = vmatpush1.msra.mxu0 %v1826
    %2112 = vmatprep.subr.mxu0 %v1823
    %2113 = vmatpush1.msra.mxu0 %v1822
    %2114 = vmatprep.subr.mxu0 %v1819
    %2115 = vmatpush1.msra.mxu0 %v1818
    %2116 = vmatprep.subr.mxu0 %v1815
    %2117 = vmatpush1.msra.mxu0 %v1814
    %2118 = vmatprep.subr.mxu0 %v1811
    %2119 = vmatpush1.msra.mxu0 %v1810
    %2120 = vmatprep.subr.mxu0 %v1807
    %2121 = vmatpush1.msra.mxu0 %v1806
    %2122 = vmatprep.subr.mxu0 %v1803
    %2123 = vmatpush1.msra.mxu0 %v1802
    %2124 = vmatprep.subr.mxu0 %v1799
    %2125 = vmatpush1.msra.mxu0 %v1798
    %2126 = vmatprep.subr.mxu0 %v1795
    %2127 = vmatpush1.msra.mxu0 %v1794
    %2128 = vmatprep.subr.mxu0 %v1791
    %2129 = vmatpush1.msra.mxu0 %v1790
    %2130 = vmatprep.subr.mxu0 0.0
    %2131 = vmatpush2.msra.mxu0 0.0
    %2132 = vmatprep.subr.mxu0 0.0
    %2133 = vmatpush2.msra.mxu0 0.0
    %2134 = vmatprep.subr.mxu0 0.0
    %2135 = vmatpush2.msra.mxu0 0.0
    %2136 = vmatprep.subr.mxu0 0.0
    %2137 = vmatpush2.msra.mxu0 0.0
    %2138 = vmatprep.subr.mxu0 0.0
    %2139 = vmatpush2.msra.mxu0 0.0
    %2140 = vmatprep.subr.mxu0 0.0
    %2141 = vmatpush2.msra.mxu0 0.0
    %2142 = vmatprep.subr.mxu0 0.0
    %2143 = vmatpush2.msra.mxu0 0.0
    %2144 = vmatprep.subr.mxu0 0.0
    %2145 = vmatpush2.msra.mxu0 0.0
    %2146 = vmatprep.subr.mxu0 0.0
    %2147 = vmatpush2.msra.mxu0 0.0
    %2148 = vmatprep.subr.mxu0 0.0
    %2149 = vmatpush2.msra.mxu0 0.0
    %2150 = vmatprep.subr.mxu0 0.0
    %2151 = vmatpush2.msra.mxu0 0.0
    %2152 = vmatprep.subr.mxu0 0.0
    %2153 = vmatpush2.msra.mxu0 0.0
    %2154 = vmatprep.subr.mxu0 0.0
    %2155 = vmatpush2.msra.mxu0 0.0
    %2156 = vmatprep.subr.mxu0 0.0
    %2157 = vmatpush2.msra.mxu0 0.0
    %2158 = vmatprep.subr.mxu0 0.0
    %2159 = vmatpush2.msra.mxu0 0.0
    %2160 = vmatprep.subr.mxu0 0.0
    %2161 = vmatpush2.msra.mxu0 0.0
    %2162 = vmatprep.mubr.f32.mxu0 0.0
    %2163 = vmatmul.mubr.f32.gmra.mxu0 %v2095
    %v2164 = vpop.f32.mrf.mxu0
    %v2165 = vadd.f32 0.0, %v2164
    %v2166 = vpop.f32.mrf.mxu0
    %v2167 = vadd.f32 0.0, %v2166
    %2168 = vdwg.mxu0
    %2169 = vmatprep.subr.mxu0 %v1853
    %2170 = vmatpush1.msra.mxu0 %v1852
    %2171 = vmatprep.subr.mxu0 %v1849
    %2172 = vmatpush1.msra.mxu0 %v1848
    %2173 = vmatprep.subr.mxu0 %v1845
    %2174 = vmatpush1.msra.mxu0 %v1844
    %2175 = vmatprep.subr.mxu0 %v1841
    %2176 = vmatpush1.msra.mxu0 %v1840
    %2177 = vmatprep.subr.mxu0 %v1837
    %2178 = vmatpush1.msra.mxu0 %v1836
    %2179 = vmatprep.subr.mxu0 %v1833
    %2180 = vmatpush1.msra.mxu0 %v1832
    %2181 = vmatprep.subr.mxu0 %v1829
    %2182 = vmatpush1.msra.mxu0 %v1828
    %2183 = vmatprep.subr.mxu0 %v1825
    %2184 = vmatpush1.msra.mxu0 %v1824
    %2185 = vmatprep.subr.mxu0 %v1821
    %2186 = vmatpush1.msra.mxu0 %v1820
    %2187 = vmatprep.subr.mxu0 %v1817
    %2188 = vmatpush1.msra.mxu0 %v1816
    %2189 = vmatprep.subr.mxu0 %v1813
    %2190 = vmatpush1.msra.mxu0 %v1812
    %2191 = vmatprep.subr.mxu0 %v1809
    %2192 = vmatpush1.msra.mxu0 %v1808
    %2193 = vmatprep.subr.mxu0 %v1805
    %2194 = vmatpush1.msra.mxu0 %v1804
    %2195 = vmatprep.subr.mxu0 %v1801
    %2196 = vmatpush1.msra.mxu0 %v1800
    %2197 = vmatprep.subr.mxu0 %v1797
    %2198 = vmatpush1.msra.mxu0 %v1796
    %2199 = vmatprep.subr.mxu0 %v1793
    %2200 = vmatpush1.msra.mxu0 %v1792
    %2201 = vmatprep.subr.mxu0 0.0
    %2202 = vmatpush2.msra.mxu0 0.0
    %2203 = vmatprep.subr.mxu0 0.0
    %2204 = vmatpush2.msra.mxu0 0.0
    %2205 = vmatprep.subr.mxu0 0.0
    %2206 = vmatpush2.msra.mxu0 0.0
    %2207 = vmatprep.subr.mxu0 0.0
    %2208 = vmatpush2.msra.mxu0 0.0
    %2209 = vmatprep.subr.mxu0 0.0
    %2210 = vmatpush2.msra.mxu0 0.0
    %2211 = vmatprep.subr.mxu0 0.0
    %2212 = vmatpush2.msra.mxu0 0.0
    %2213 = vmatprep.subr.mxu0 0.0
    %2214 = vmatpush2.msra.mxu0 0.0
    %2215 = vmatprep.subr.mxu0 0.0
    %2216 = vmatpush2.msra.mxu0 0.0
    %2217 = vmatprep.subr.mxu0 0.0
    %2218 = vmatpush2.msra.mxu0 0.0
    %2219 = vmatprep.subr.mxu0 0.0
    %2220 = vmatpush2.msra.mxu0 0.0
    %2221 = vmatprep.subr.mxu0 0.0
    %2222 = vmatpush2.msra.mxu0 0.0
    %2223 = vmatprep.subr.mxu0 0.0
    %2224 = vmatpush2.msra.mxu0 0.0
    %2225 = vmatprep.subr.mxu0 0.0
    %2226 = vmatpush2.msra.mxu0 0.0
    %2227 = vmatprep.subr.mxu0 0.0
    %2228 = vmatpush2.msra.mxu0 0.0
    %2229 = vmatprep.subr.mxu0 0.0
    %2230 = vmatpush2.msra.mxu0 0.0
    %2231 = vmatprep.subr.mxu0 0.0
    %2232 = vmatpush2.msra.mxu0 0.0
    %2233 = vmatprep.mubr.f32.mxu0 0.0
    %2234 = vmatmul.mubr.f32.gmra.mxu0 %v2095
    %v2235 = vpop.f32.mrf.mxu0
    %v2236 = vadd.f32 0.0, %v2235
    %v2237 = vpop.f32.mrf.mxu0
    %v2238 = vadd.f32 0.0, %v2237
    %2239 = vdwg.mxu0
    %v2240 = vadd.f32 %v2007, %v2165
    %v2241 = vadd.f32 %v2009, %v2167
    %v2242 = vadd.f32 %v2084, %v2236
    %v2243 = vadd.f32 %v2086, %v2238
    %v2244 = vxor.u32 %v2240, 2147483648
    %v2245 = vmul.f32 %v2244, 1.442695
    %v2246 = vpow.pop %v2245
    %v2247 = vadd.f32 %v2246, 1.0
    %v2248 = vrcp.pop %v2247
    %v2249 = vmul.f32 1.0, %v2248
    %v2250 = vxor.u32 %v2241, 2147483648
    %v2251 = vmul.f32 %v2250, 1.442695
    %v2252 = vpow.pop %v2251
    %v2253 = vadd.f32 %v2252, 1.0
    %v2254 = vrcp.pop %v2253
    %v2255 = vmul.f32 1.0, %v2254
    %v2256 = vtanh.pop %v2242
    %v2257 = vxor.u32 %v2243, 2147483648
    %v2258 = vmul.f32 %v2257, 1.442695
    %v2259 = vpow.pop %v2258
    %v2260 = vadd.f32 %v2259, 1.0
    %v2261 = vrcp.pop %v2260
    %v2262 = vmul.f32 1.0, %v2261
    %v2263 = vmul.f32 %v2255, %v2097
    %v2264 = vmul.f32 %v2249, %v2256
    %v2265 = vadd.f32 %v2263, %v2264
    %v2266 = vtanh.pop %v2265
    %v2267 = vmul.f32 %v2262, %v2266
    %2268 = vmatprep.subr.mxu0 %v1851
    %2269 = vmatpush1.msra.mxu0 %v1850
    %2270 = vmatprep.subr.mxu0 %v1847
    %2271 = vmatpush1.msra.mxu0 %v1846
    %2272 = vmatprep.subr.mxu0 %v1843
    %2273 = vmatpush1.msra.mxu0 %v1842
    %2274 = vmatprep.subr.mxu0 %v1839
    %2275 = vmatpush1.msra.mxu0 %v1838
    %2276 = vmatprep.subr.mxu0 %v1835
    %2277 = vmatpush1.msra.mxu0 %v1834
    %2278 = vmatprep.subr.mxu0 %v1831
    %2279 = vmatpush1.msra.mxu0 %v1830
    %2280 = vmatprep.subr.mxu0 %v1827
    %2281 = vmatpush1.msra.mxu0 %v1826
    %2282 = vmatprep.subr.mxu0 %v1823
    %2283 = vmatpush1.msra.mxu0 %v1822
    %2284 = vmatprep.subr.mxu0 %v1819
    %2285 = vmatpush1.msra.mxu0 %v1818
    %2286 = vmatprep.subr.mxu0 %v1815
    %2287 = vmatpush1.msra.mxu0 %v1814
    %2288 = vmatprep.subr.mxu0 %v1811
    %2289 = vmatpush1.msra.mxu0 %v1810
    %2290 = vmatprep.subr.mxu0 %v1807
    %2291 = vmatpush1.msra.mxu0 %v1806
    %2292 = vmatprep.subr.mxu0 %v1803
    %2293 = vmatpush1.msra.mxu0 %v1802
    %2294 = vmatprep.subr.mxu0 %v1799
    %2295 = vmatpush1.msra.mxu0 %v1798
    %2296 = vmatprep.subr.mxu0 %v1795
    %2297 = vmatpush1.msra.mxu0 %v1794
    %2298 = vmatprep.subr.mxu0 %v1791
    %2299 = vmatpush1.msra.mxu0 %v1790
    %2300 = vmatprep.subr.mxu0 0.0
    %2301 = vmatpush2.msra.mxu0 0.0
    %2302 = vmatprep.subr.mxu0 0.0
    %2303 = vmatpush2.msra.mxu0 0.0
    %2304 = vmatprep.subr.mxu0 0.0
    %2305 = vmatpush2.msra.mxu0 0.0
    %2306 = vmatprep.subr.mxu0 0.0
    %2307 = vmatpush2.msra.mxu0 0.0
    %2308 = vmatprep.subr.mxu0 0.0
    %2309 = vmatpush2.msra.mxu0 0.0
    %2310 = vmatprep.subr.mxu0 0.0
    %2311 = vmatpush2.msra.mxu0 0.0
    %2312 = vmatprep.subr.mxu0 0.0
    %2313 = vmatpush2.msra.mxu0 0.0
    %2314 = vmatprep.subr.mxu0 0.0
    %2315 = vmatpush2.msra.mxu0 0.0
    %2316 = vmatprep.subr.mxu0 0.0
    %2317 = vmatpush2.msra.mxu0 0.0
    %2318 = vmatprep.subr.mxu0 0.0
    %2319 = vmatpush2.msra.mxu0 0.0
    %2320 = vmatprep.subr.mxu0 0.0
    %2321 = vmatpush2.msra.mxu0 0.0
    %2322 = vmatprep.subr.mxu0 0.0
    %2323 = vmatpush2.msra.mxu0 0.0
    %2324 = vmatprep.subr.mxu0 0.0
    %2325 = vmatpush2.msra.mxu0 0.0
    %2326 = vmatprep.subr.mxu0 0.0
    %2327 = vmatpush2.msra.mxu0 0.0
    %2328 = vmatprep.subr.mxu0 0.0
    %2329 = vmatpush2.msra.mxu0 0.0
    %2330 = vmatprep.subr.mxu0 0.0
    %2331 = vmatpush2.msra.mxu0 0.0
    %2332 = vmatprep.mubr.f32.mxu0 0.0
    %2333 = vmatmul.mubr.f32.gmra.mxu0 %v2267
    %v2334 = vpop.f32.mrf.mxu0
    %v2335 = vadd.f32 0.0, %v2334
    %v2336 = vpop.f32.mrf.mxu0
    %v2337 = vadd.f32 0.0, %v2336
    %2338 = vdwg.mxu0
    %2339 = vmatprep.subr.mxu0 %v1853
    %2340 = vmatpush1.msra.mxu0 %v1852
    %2341 = vmatprep.subr.mxu0 %v1849
    %2342 = vmatpush1.msra.mxu0 %v1848
    %2343 = vmatprep.subr.mxu0 %v1845
    %2344 = vmatpush1.msra.mxu0 %v1844
    %2345 = vmatprep.subr.mxu0 %v1841
    %2346 = vmatpush1.msra.mxu0 %v1840
    %2347 = vmatprep.subr.mxu0 %v1837
    %2348 = vmatpush1.msra.mxu0 %v1836
    %2349 = vmatprep.subr.mxu0 %v1833
    %2350 = vmatpush1.msra.mxu0 %v1832
    %2351 = vmatprep.subr.mxu0 %v1829
    %2352 = vmatpush1.msra.mxu0 %v1828
    %2353 = vmatprep.subr.mxu0 %v1825
    %2354 = vmatpush1.msra.mxu0 %v1824
    %2355 = vmatprep.subr.mxu0 %v1821
    %2356 = vmatpush1.msra.mxu0 %v1820
    %2357 = vmatprep.subr.mxu0 %v1817
    %2358 = vmatpush1.msra.mxu0 %v1816
    %2359 = vmatprep.subr.mxu0 %v1813
    %2360 = vmatpush1.msra.mxu0 %v1812
    %2361 = vmatprep.subr.mxu0 %v1809
    %2362 = vmatpush1.msra.mxu0 %v1808
    %2363 = vmatprep.subr.mxu0 %v1805
    %2364 = vmatpush1.msra.mxu0 %v1804
    %2365 = vmatprep.subr.mxu0 %v1801
    %2366 = vmatpush1.msra.mxu0 %v1800
    %2367 = vmatprep.subr.mxu0 %v1797
    %2368 = vmatpush1.msra.mxu0 %v1796
    %2369 = vmatprep.subr.mxu0 %v1793
    %2370 = vmatpush1.msra.mxu0 %v1792
    %2371 = vmatprep.subr.mxu0 0.0
    %2372 = vmatpush2.msra.mxu0 0.0
    %2373 = vmatprep.subr.mxu0 0.0
    %2374 = vmatpush2.msra.mxu0 0.0
    %2375 = vmatprep.subr.mxu0 0.0
    %2376 = vmatpush2.msra.mxu0 0.0
    %2377 = vmatprep.subr.mxu0 0.0
    %2378 = vmatpush2.msra.mxu0 0.0
    %2379 = vmatprep.subr.mxu0 0.0
    %2380 = vmatpush2.msra.mxu0 0.0
    %2381 = vmatprep.subr.mxu0 0.0
    %2382 = vmatpush2.msra.mxu0 0.0
    %2383 = vmatprep.subr.mxu0 0.0
    %2384 = vmatpush2.msra.mxu0 0.0
    %2385 = vmatprep.subr.mxu0 0.0
    %2386 = vmatpush2.msra.mxu0 0.0
    %2387 = vmatprep.subr.mxu0 0.0
    %2388 = vmatpush2.msra.mxu0 0.0
    %2389 = vmatprep.subr.mxu0 0.0
    %2390 = vmatpush2.msra.mxu0 0.0
    %2391 = vmatprep.subr.mxu0 0.0
    %2392 = vmatpush2.msra.mxu0 0.0
    %2393 = vmatprep.subr.mxu0 0.0
    %2394 = vmatpush2.msra.mxu0 0.0
    %2395 = vmatprep.subr.mxu0 0.0
    %2396 = vmatpush2.msra.mxu0 0.0
    %2397 = vmatprep.subr.mxu0 0.0
    %2398 = vmatpush2.msra.mxu0 0.0
    %2399 = vmatprep.subr.mxu0 0.0
    %2400 = vmatpush2.msra.mxu0 0.0
    %2401 = vmatprep.subr.mxu0 0.0
    %2402 = vmatpush2.msra.mxu0 0.0
    %2403 = vmatprep.mubr.f32.mxu0 0.0
    %2404 = vmatmul.mubr.f32.gmra.mxu0 %v2267
    %v2405 = vpop.f32.mrf.mxu0
    %v2406 = vadd.f32 0.0, %v2405
    %v2407 = vpop.f32.mrf.mxu0
    %v2408 = vadd.f32 0.0, %v2407
    %2409 = vdwg.mxu0
    %v2414 = vrot.slane %v2335, 6
    %v2415 = vrot.slane %v2337, 6
    %v2416 = vrot.slane %v2406, 6
    %v2417 = vrot.slane %v2408, 6
    %v2422 = vadd.f32 %v2007, %v2414
    %v2423 = vadd.f32 %v2009, %v2415
    %v2424 = vadd.f32 %v2084, %v2416
    %v2425 = vadd.f32 %v2086, %v2417
    %v2426 = vxor.u32 %v2422, 2147483648
    %v2427 = vmul.f32 %v2426, 1.442695
    %v2428 = vpow.pop %v2427
    %v2429 = vadd.f32 %v2428, 1.0
    %v2430 = vrcp.pop %v2429
    %v2431 = vmul.f32 1.0, %v2430
    %v2432 = vxor.u32 %v2423, 2147483648
    %v2433 = vmul.f32 %v2432, 1.442695
    %v2434 = vpow.pop %v2433
    %v2435 = vadd.f32 %v2434, 1.0
    %v2436 = vrcp.pop %v2435
    %v2437 = vmul.f32 1.0, %v2436
    %v2438 = vtanh.pop %v2424
    %v2439 = vxor.u32 %v2425, 2147483648
    %v2440 = vmul.f32 %v2439, 1.442695
    %v2441 = vpow.pop %v2440
    %v2442 = vadd.f32 %v2441, 1.0
    %v2443 = vrcp.pop %v2442
    %v2444 = vmul.f32 1.0, %v2443
    %v2446 = vrot.slane %v2265, 6
    %v2448 = vmul.f32 %v2437, %v2446
    %v2449 = vmul.f32 %v2431, %v2438
    %v2450 = vadd.f32 %v2448, %v2449
    %v2451 = vtanh.pop %v2450
    %v2452 = vmul.f32 %v2444, %v2451
    %v2454 = vrot.slane %v2452, 2
    %2456 = vmatprep.subr.mxu0 %v1851
    %2457 = vmatpush1.msra.mxu0 %v1850
    %2458 = vmatprep.subr.mxu0 %v1847
    %2459 = vmatpush1.msra.mxu0 %v1846
    %2460 = vmatprep.subr.mxu0 %v1843
    %2461 = vmatpush1.msra.mxu0 %v1842
    %2462 = vmatprep.subr.mxu0 %v1839
    %2463 = vmatpush1.msra.mxu0 %v1838
    %2464 = vmatprep.subr.mxu0 %v1835
    %2465 = vmatpush1.msra.mxu0 %v1834
    %2466 = vmatprep.subr.mxu0 %v1831
    %2467 = vmatpush1.msra.mxu0 %v1830
    %2468 = vmatprep.subr.mxu0 %v1827
    %2469 = vmatpush1.msra.mxu0 %v1826
    %2470 = vmatprep.subr.mxu0 %v1823
    %2471 = vmatpush1.msra.mxu0 %v1822
    %2472 = vmatprep.subr.mxu0 %v1819
    %2473 = vmatpush1.msra.mxu0 %v1818
    %2474 = vmatprep.subr.mxu0 %v1815
    %2475 = vmatpush1.msra.mxu0 %v1814
    %2476 = vmatprep.subr.mxu0 %v1811
    %2477 = vmatpush1.msra.mxu0 %v1810
    %2478 = vmatprep.subr.mxu0 %v1807
    %2479 = vmatpush1.msra.mxu0 %v1806
    %2480 = vmatprep.subr.mxu0 %v1803
    %2481 = vmatpush1.msra.mxu0 %v1802
    %2482 = vmatprep.subr.mxu0 %v1799
    %2483 = vmatpush1.msra.mxu0 %v1798
    %2484 = vmatprep.subr.mxu0 %v1795
    %2485 = vmatpush1.msra.mxu0 %v1794
    %2486 = vmatprep.subr.mxu0 %v1791
    %2487 = vmatpush1.msra.mxu0 %v1790
    %2488 = vmatprep.subr.mxu0 0.0
    %2489 = vmatpush2.msra.mxu0 0.0
    %2490 = vmatprep.subr.mxu0 0.0
    %2491 = vmatpush2.msra.mxu0 0.0
    %2492 = vmatprep.subr.mxu0 0.0
    %2493 = vmatpush2.msra.mxu0 0.0
    %2494 = vmatprep.subr.mxu0 0.0
    %2495 = vmatpush2.msra.mxu0 0.0
    %2496 = vmatprep.subr.mxu0 0.0
    %2497 = vmatpush2.msra.mxu0 0.0
    %2498 = vmatprep.subr.mxu0 0.0
    %2499 = vmatpush2.msra.mxu0 0.0
    %2500 = vmatprep.subr.mxu0 0.0
    %2501 = vmatpush2.msra.mxu0 0.0
    %2502 = vmatprep.subr.mxu0 0.0
    %2503 = vmatpush2.msra.mxu0 0.0
    %2504 = vmatprep.subr.mxu0 0.0
    %2505 = vmatpush2.msra.mxu0 0.0
    %2506 = vmatprep.subr.mxu0 0.0
    %2507 = vmatpush2.msra.mxu0 0.0
    %2508 = vmatprep.subr.mxu0 0.0
    %2509 = vmatpush2.msra.mxu0 0.0
    %2510 = vmatprep.subr.mxu0 0.0
    %2511 = vmatpush2.msra.mxu0 0.0
    %2512 = vmatprep.subr.mxu0 0.0
    %2513 = vmatpush2.msra.mxu0 0.0
    %2514 = vmatprep.subr.mxu0 0.0
    %2515 = vmatpush2.msra.mxu0 0.0
    %2516 = vmatprep.subr.mxu0 0.0
    %2517 = vmatpush2.msra.mxu0 0.0
    %2518 = vmatprep.subr.mxu0 0.0
    %2519 = vmatpush2.msra.mxu0 0.0
    %2520 = vmatprep.mubr.f32.mxu0 0.0
    %2521 = vmatmul.mubr.f32.gmra.mxu0 %v2454
    %v2522 = vpop.f32.mrf.mxu0
    %v2523 = vadd.f32 0.0, %v2522
    %v2524 = vpop.f32.mrf.mxu0
    %v2525 = vadd.f32 0.0, %v2524
    %2526 = vdwg.mxu0
    %2527 = vmatprep.subr.mxu0 %v1853
    %2528 = vmatpush1.msra.mxu0 %v1852
    %2529 = vmatprep.subr.mxu0 %v1849
    %2530 = vmatpush1.msra.mxu0 %v1848
    %2531 = vmatprep.subr.mxu0 %v1845
    %2532 = vmatpush1.msra.mxu0 %v1844
    %2533 = vmatprep.subr.mxu0 %v1841
    %2534 = vmatpush1.msra.mxu0 %v1840
    %2535 = vmatprep.subr.mxu0 %v1837
    %2536 = vmatpush1.msra.mxu0 %v1836
    %2537 = vmatprep.subr.mxu0 %v1833
    %2538 = vmatpush1.msra.mxu0 %v1832
    %2539 = vmatprep.subr.mxu0 %v1829
    %2540 = vmatpush1.msra.mxu0 %v1828
    %2541 = vmatprep.subr.mxu0 %v1825
    %2542 = vmatpush1.msra.mxu0 %v1824
    %2543 = vmatprep.subr.mxu0 %v1821
    %2544 = vmatpush1.msra.mxu0 %v1820
    %2545 = vmatprep.subr.mxu0 %v1817
    %2546 = vmatpush1.msra.mxu0 %v1816
    %2547 = vmatprep.subr.mxu0 %v1813
    %2548 = vmatpush1.msra.mxu0 %v1812
    %2549 = vmatprep.subr.mxu0 %v1809
    %2550 = vmatpush1.msra.mxu0 %v1808
    %2551 = vmatprep.subr.mxu0 %v1805
    %2552 = vmatpush1.msra.mxu0 %v1804
    %2553 = vmatprep.subr.mxu0 %v1801
    %2554 = vmatpush1.msra.mxu0 %v1800
    %2555 = vmatprep.subr.mxu0 %v1797
    %2556 = vmatpush1.msra.mxu0 %v1796
    %2557 = vmatprep.subr.mxu0 %v1793
    %2558 = vmatpush1.msra.mxu0 %v1792
    %2559 = vmatprep.subr.mxu0 0.0
    %2560 = vmatpush2.msra.mxu0 0.0
    %2561 = vmatprep.subr.mxu0 0.0
    %2562 = vmatpush2.msra.mxu0 0.0
    %2563 = vmatprep.subr.mxu0 0.0
    %2564 = vmatpush2.msra.mxu0 0.0
    %2565 = vmatprep.subr.mxu0 0.0
    %2566 = vmatpush2.msra.mxu0 0.0
    %2567 = vmatprep.subr.mxu0 0.0
    %2568 = vmatpush2.msra.mxu0 0.0
    %2569 = vmatprep.subr.mxu0 0.0
    %2570 = vmatpush2.msra.mxu0 0.0
    %2571 = vmatprep.subr.mxu0 0.0
    %2572 = vmatpush2.msra.mxu0 0.0
    %2573 = vmatprep.subr.mxu0 0.0
    %2574 = vmatpush2.msra.mxu0 0.0
    %2575 = vmatprep.subr.mxu0 0.0
    %2576 = vmatpush2.msra.mxu0 0.0
    %2577 = vmatprep.subr.mxu0 0.0
    %2578 = vmatpush2.msra.mxu0 0.0
    %2579 = vmatprep.subr.mxu0 0.0
    %2580 = vmatpush2.msra.mxu0 0.0
    %2581 = vmatprep.subr.mxu0 0.0
    %2582 = vmatpush2.msra.mxu0 0.0
    %2583 = vmatprep.subr.mxu0 0.0
    %2584 = vmatpush2.msra.mxu0 0.0
    %2585 = vmatprep.subr.mxu0 0.0
    %2586 = vmatpush2.msra.mxu0 0.0
    %2587 = vmatprep.subr.mxu0 0.0
    %2588 = vmatpush2.msra.mxu0 0.0
    %2589 = vmatprep.subr.mxu0 0.0
    %2590 = vmatpush2.msra.mxu0 0.0
    %2591 = vmatprep.mubr.f32.mxu0 0.0
    %2592 = vmatmul.mubr.f32.gmra.mxu0 %v2454
    %v2593 = vpop.f32.mrf.mxu0
    %v2594 = vadd.f32 0.0, %v2593
    %v2595 = vpop.f32.mrf.mxu0
    %v2596 = vadd.f32 0.0, %v2595
    %2597 = vdwg.mxu0
    %v2602 = vrot.slane %v2523, 4
    %v2603 = vrot.slane %v2525, 4
    %v2604 = vrot.slane %v2594, 4
    %v2605 = vrot.slane %v2596, 4
    %v2610 = vadd.f32 %v2007, %v2602
    %v2611 = vadd.f32 %v2009, %v2603
    %v2612 = vadd.f32 %v2084, %v2604
    %v2613 = vadd.f32 %v2086, %v2605
    %v2614 = vxor.u32 %v2610, 2147483648
    %v2615 = vmul.f32 %v2614, 1.442695
    %v2616 = vpow.pop %v2615
    %v2617 = vadd.f32 %v2616, 1.0
    %v2618 = vrcp.pop %v2617
    %v2619 = vmul.f32 1.0, %v2618
    %v2620 = vxor.u32 %v2611, 2147483648
    %v2621 = vmul.f32 %v2620, 1.442695
    %v2622 = vpow.pop %v2621
    %v2623 = vadd.f32 %v2622, 1.0
    %v2624 = vrcp.pop %v2623
    %v2625 = vmul.f32 1.0, %v2624
    %v2626 = vtanh.pop %v2612
    %v2627 = vxor.u32 %v2613, 2147483648
    %v2628 = vmul.f32 %v2627, 1.442695
    %v2629 = vpow.pop %v2628
    %v2630 = vadd.f32 %v2629, 1.0
    %v2631 = vrcp.pop %v2630
    %v2632 = vmul.f32 1.0, %v2631
    %v2634 = vrot.slane %v2450, 6
    %v2636 = vmul.f32 %v2625, %v2634
    %v2637 = vmul.f32 %v2619, %v2626
    %v2638 = vadd.f32 %v2636, %v2637
    %v2639 = vtanh.pop %v2638
    %v2640 = vmul.f32 %v2632, %v2639
    %v2642 = vrot.slane %v2640, 4
    %2644 = vmatprep.subr.mxu0 %v1851
    %2645 = vmatpush1.msra.mxu0 %v1850
    %2646 = vmatprep.subr.mxu0 %v1847
    %2647 = vmatpush1.msra.mxu0 %v1846
    %2648 = vmatprep.subr.mxu0 %v1843
    %2649 = vmatpush1.msra.mxu0 %v1842
    %2650 = vmatprep.subr.mxu0 %v1839
    %2651 = vmatpush1.msra.mxu0 %v1838
    %2652 = vmatprep.subr.mxu0 %v1835
    %2653 = vmatpush1.msra.mxu0 %v1834
    %2654 = vmatprep.subr.mxu0 %v1831
    %2655 = vmatpush1.msra.mxu0 %v1830
    %2656 = vmatprep.subr.mxu0 %v1827
    %2657 = vmatpush1.msra.mxu0 %v1826
    %2658 = vmatprep.subr.mxu0 %v1823
    %2659 = vmatpush1.msra.mxu0 %v1822
    %2660 = vmatprep.subr.mxu0 %v1819
    %2661 = vmatpush1.msra.mxu0 %v1818
    %2662 = vmatprep.subr.mxu0 %v1815
    %2663 = vmatpush1.msra.mxu0 %v1814
    %2664 = vmatprep.subr.mxu0 %v1811
    %2665 = vmatpush1.msra.mxu0 %v1810
    %2666 = vmatprep.subr.mxu0 %v1807
    %2667 = vmatpush1.msra.mxu0 %v1806
    %2668 = vmatprep.subr.mxu0 %v1803
    %2669 = vmatpush1.msra.mxu0 %v1802
    %2670 = vmatprep.subr.mxu0 %v1799
    %2671 = vmatpush1.msra.mxu0 %v1798
    %2672 = vmatprep.subr.mxu0 %v1795
    %2673 = vmatpush1.msra.mxu0 %v1794
    %2674 = vmatprep.subr.mxu0 %v1791
    %2675 = vmatpush1.msra.mxu0 %v1790
    %2676 = vmatprep.subr.mxu0 0.0
    %2677 = vmatpush2.msra.mxu0 0.0
    %2678 = vmatprep.subr.mxu0 0.0
    %2679 = vmatpush2.msra.mxu0 0.0
    %2680 = vmatprep.subr.mxu0 0.0
    %2681 = vmatpush2.msra.mxu0 0.0
    %2682 = vmatprep.subr.mxu0 0.0
    %2683 = vmatpush2.msra.mxu0 0.0
    %2684 = vmatprep.subr.mxu0 0.0
    %2685 = vmatpush2.msra.mxu0 0.0
    %2686 = vmatprep.subr.mxu0 0.0
    %2687 = vmatpush2.msra.mxu0 0.0
    %2688 = vmatprep.subr.mxu0 0.0
    %2689 = vmatpush2.msra.mxu0 0.0
    %2690 = vmatprep.subr.mxu0 0.0
    %2691 = vmatpush2.msra.mxu0 0.0
    %2692 = vmatprep.subr.mxu0 0.0
    %2693 = vmatpush2.msra.mxu0 0.0
    %2694 = vmatprep.subr.mxu0 0.0
    %2695 = vmatpush2.msra.mxu0 0.0
    %2696 = vmatprep.subr.mxu0 0.0
    %2697 = vmatpush2.msra.mxu0 0.0
    %2698 = vmatprep.subr.mxu0 0.0
    %2699 = vmatpush2.msra.mxu0 0.0
    %2700 = vmatprep.subr.mxu0 0.0
    %2701 = vmatpush2.msra.mxu0 0.0
    %2702 = vmatprep.subr.mxu0 0.0
    %2703 = vmatpush2.msra.mxu0 0.0
    %2704 = vmatprep.subr.mxu0 0.0
    %2705 = vmatpush2.msra.mxu0 0.0
    %2706 = vmatprep.subr.mxu0 0.0
    %2707 = vmatpush2.msra.mxu0 0.0
    %2708 = vmatprep.mubr.f32.mxu0 0.0
    %2709 = vmatmul.mubr.f32.gmra.mxu0 %v2642
    %v2710 = vpop.f32.mrf.mxu0
    %v2711 = vadd.f32 0.0, %v2710
    %v2712 = vpop.f32.mrf.mxu0
    %v2713 = vadd.f32 0.0, %v2712
    %2714 = vdwg.mxu0
    %2715 = vmatprep.subr.mxu0 %v1853
    %2716 = vmatpush1.msra.mxu0 %v1852
    %2717 = vmatprep.subr.mxu0 %v1849
    %2718 = vmatpush1.msra.mxu0 %v1848
    %2719 = vmatprep.subr.mxu0 %v1845
    %2720 = vmatpush1.msra.mxu0 %v1844
    %2721 = vmatprep.subr.mxu0 %v1841
    %2722 = vmatpush1.msra.mxu0 %v1840
    %2723 = vmatprep.subr.mxu0 %v1837
    %2724 = vmatpush1.msra.mxu0 %v1836
    %2725 = vmatprep.subr.mxu0 %v1833
    %2726 = vmatpush1.msra.mxu0 %v1832
    %2727 = vmatprep.subr.mxu0 %v1829
    %2728 = vmatpush1.msra.mxu0 %v1828
    %2729 = vmatprep.subr.mxu0 %v1825
    %2730 = vmatpush1.msra.mxu0 %v1824
    %2731 = vmatprep.subr.mxu0 %v1821
    %2732 = vmatpush1.msra.mxu0 %v1820
    %2733 = vmatprep.subr.mxu0 %v1817
    %2734 = vmatpush1.msra.mxu0 %v1816
    %2735 = vmatprep.subr.mxu0 %v1813
    %2736 = vmatpush1.msra.mxu0 %v1812
    %2737 = vmatprep.subr.mxu0 %v1809
    %2738 = vmatpush1.msra.mxu0 %v1808
    %2739 = vmatprep.subr.mxu0 %v1805
    %2740 = vmatpush1.msra.mxu0 %v1804
    %2741 = vmatprep.subr.mxu0 %v1801
    %2742 = vmatpush1.msra.mxu0 %v1800
    %2743 = vmatprep.subr.mxu0 %v1797
    %2744 = vmatpush1.msra.mxu0 %v1796
    %2745 = vmatprep.subr.mxu0 %v1793
    %2746 = vmatpush1.msra.mxu0 %v1792
    %2747 = vmatprep.subr.mxu0 0.0
    %2748 = vmatpush2.msra.mxu0 0.0
    %2749 = vmatprep.subr.mxu0 0.0
    %2750 = vmatpush2.msra.mxu0 0.0
    %2751 = vmatprep.subr.mxu0 0.0
    %2752 = vmatpush2.msra.mxu0 0.0
    %2753 = vmatprep.subr.mxu0 0.0
    %2754 = vmatpush2.msra.mxu0 0.0
    %2755 = vmatprep.subr.mxu0 0.0
    %2756 = vmatpush2.msra.mxu0 0.0
    %2757 = vmatprep.subr.mxu0 0.0
    %2758 = vmatpush2.msra.mxu0 0.0
    %2759 = vmatprep.subr.mxu0 0.0
    %2760 = vmatpush2.msra.mxu0 0.0
    %2761 = vmatprep.subr.mxu0 0.0
    %2762 = vmatpush2.msra.mxu0 0.0
    %2763 = vmatprep.subr.mxu0 0.0
    %2764 = vmatpush2.msra.mxu0 0.0
    %2765 = vmatprep.subr.mxu0 0.0
    %2766 = vmatpush2.msra.mxu0 0.0
    %2767 = vmatprep.subr.mxu0 0.0
    %2768 = vmatpush2.msra.mxu0 0.0
    %2769 = vmatprep.subr.mxu0 0.0
    %2770 = vmatpush2.msra.mxu0 0.0
    %2771 = vmatprep.subr.mxu0 0.0
    %2772 = vmatpush2.msra.mxu0 0.0
    %2773 = vmatprep.subr.mxu0 0.0
    %2774 = vmatpush2.msra.mxu0 0.0
    %2775 = vmatprep.subr.mxu0 0.0
    %2776 = vmatpush2.msra.mxu0 0.0
    %2777 = vmatprep.subr.mxu0 0.0
    %2778 = vmatpush2.msra.mxu0 0.0
    %2779 = vmatprep.mubr.f32.mxu0 0.0
    %2780 = vmatmul.mubr.f32.gmra.mxu0 %v2642
    %v2781 = vpop.f32.mrf.mxu0
    %v2782 = vadd.f32 0.0, %v2781
    %v2783 = vpop.f32.mrf.mxu0
    %v2784 = vadd.f32 0.0, %v2783
    %2785 = vdwg.mxu0
    %v2790 = vrot.slane %v2711, 2
    %v2791 = vrot.slane %v2713, 2
    %v2792 = vrot.slane %v2782, 2
    %v2793 = vrot.slane %v2784, 2
    %v2798 = vadd.f32 %v2007, %v2790
    %v2799 = vadd.f32 %v2009, %v2791
    %v2800 = vadd.f32 %v2084, %v2792
    %v2801 = vadd.f32 %v2086, %v2793
    %v2802 = vxor.u32 %v2798, 2147483648
    %v2803 = vmul.f32 %v2802, 1.442695
    %v2804 = vpow.pop %v2803
    %v2805 = vadd.f32 %v2804, 1.0
    %v2806 = vrcp.pop %v2805
    %v2807 = vmul.f32 1.0, %v2806
    %v2808 = vxor.u32 %v2799, 2147483648
    %v2809 = vmul.f32 %v2808, 1.442695
    %v2810 = vpow.pop %v2809
    %v2811 = vadd.f32 %v2810, 1.0
    %v2812 = vrcp.pop %v2811
    %v2813 = vmul.f32 1.0, %v2812
    %v2814 = vtanh.pop %v2800
    %v2815 = vxor.u32 %v2801, 2147483648
    %v2816 = vmul.f32 %v2815, 1.442695
    %v2817 = vpow.pop %v2816
    %v2818 = vadd.f32 %v2817, 1.0
    %v2819 = vrcp.pop %v2818
    %v2820 = vmul.f32 1.0, %v2819
    %v2822 = vrot.slane %v2638, 6
    %v2824 = vmul.f32 %v2813, %v2822
    %v2825 = vmul.f32 %v2807, %v2814
    %v2826 = vadd.f32 %v2824, %v2825
    %v2827 = vtanh.pop %v2826
    %v2828 = vmul.f32 %v2820, %v2827
    %v2830 = vrot.slane %v2828, 6
    %2832 = vmatprep.subr.mxu0 %v1851
    %2833 = vmatpush1.msra.mxu0 %v1850
    %2834 = vmatprep.subr.mxu0 %v1847
    %2835 = vmatpush1.msra.mxu0 %v1846
    %2836 = vmatprep.subr.mxu0 %v1843
    %2837 = vmatpush1.msra.mxu0 %v1842
    %2838 = vmatprep.subr.mxu0 %v1839
    %2839 = vmatpush1.msra.mxu0 %v1838
    %2840 = vmatprep.subr.mxu0 %v1835
    %2841 = vmatpush1.msra.mxu0 %v1834
    %2842 = vmatprep.subr.mxu0 %v1831
    %2843 = vmatpush1.msra.mxu0 %v1830
    %2844 = vmatprep.subr.mxu0 %v1827
    %2845 = vmatpush1.msra.mxu0 %v1826
    %2846 = vmatprep.subr.mxu0 %v1823
    %2847 = vmatpush1.msra.mxu0 %v1822
    %2848 = vmatprep.subr.mxu0 %v1819
    %2849 = vmatpush1.msra.mxu0 %v1818
    %2850 = vmatprep.subr.mxu0 %v1815
    %2851 = vmatpush1.msra.mxu0 %v1814
    %2852 = vmatprep.subr.mxu0 %v1811
    %2853 = vmatpush1.msra.mxu0 %v1810
    %2854 = vmatprep.subr.mxu0 %v1807
    %2855 = vmatpush1.msra.mxu0 %v1806
    %2856 = vmatprep.subr.mxu0 %v1803
    %2857 = vmatpush1.msra.mxu0 %v1802
    %2858 = vmatprep.subr.mxu0 %v1799
    %2859 = vmatpush1.msra.mxu0 %v1798
    %2860 = vmatprep.subr.mxu0 %v1795
    %2861 = vmatpush1.msra.mxu0 %v1794
    %2862 = vmatprep.subr.mxu0 %v1791
    %2863 = vmatpush1.msra.mxu0 %v1790
    %2864 = vmatprep.subr.mxu0 0.0
    %2865 = vmatpush2.msra.mxu0 0.0
    %2866 = vmatprep.subr.mxu0 0.0
    %2867 = vmatpush2.msra.mxu0 0.0
    %2868 = vmatprep.subr.mxu0 0.0
    %2869 = vmatpush2.msra.mxu0 0.0
    %2870 = vmatprep.subr.mxu0 0.0
    %2871 = vmatpush2.msra.mxu0 0.0
    %2872 = vmatprep.subr.mxu0 0.0
    %2873 = vmatpush2.msra.mxu0 0.0
    %2874 = vmatprep.subr.mxu0 0.0
    %2875 = vmatpush2.msra.mxu0 0.0
    %2876 = vmatprep.subr.mxu0 0.0
    %2877 = vmatpush2.msra.mxu0 0.0
    %2878 = vmatprep.subr.mxu0 0.0
    %2879 = vmatpush2.msra.mxu0 0.0
    %2880 = vmatprep.subr.mxu0 0.0
    %2881 = vmatpush2.msra.mxu0 0.0
    %2882 = vmatprep.subr.mxu0 0.0
    %2883 = vmatpush2.msra.mxu0 0.0
    %2884 = vmatprep.subr.mxu0 0.0
    %2885 = vmatpush2.msra.mxu0 0.0
    %2886 = vmatprep.subr.mxu0 0.0
    %2887 = vmatpush2.msra.mxu0 0.0
    %2888 = vmatprep.subr.mxu0 0.0
    %2889 = vmatpush2.msra.mxu0 0.0
    %2890 = vmatprep.subr.mxu0 0.0
    %2891 = vmatpush2.msra.mxu0 0.0
    %2892 = vmatprep.subr.mxu0 0.0
    %2893 = vmatpush2.msra.mxu0 0.0
    %2894 = vmatprep.subr.mxu0 0.0
    %2895 = vmatpush2.msra.mxu0 0.0
    %2896 = vmatprep.mubr.f32.mxu0 0.0
    %2897 = vmatmul.mubr.f32.gmra.mxu0 %v2830
    %v2898 = vpop.f32.mrf.mxu0
    %v2899 = vadd.f32 0.0, %v2898
    %v2900 = vpop.f32.mrf.mxu0
    %v2901 = vadd.f32 0.0, %v2900
    %2902 = vdwg.mxu0
    %2903 = vmatprep.subr.mxu0 %v1853
    %2904 = vmatpush1.msra.mxu0 %v1852
    %2905 = vmatprep.subr.mxu0 %v1849
    %2906 = vmatpush1.msra.mxu0 %v1848
    %2907 = vmatprep.subr.mxu0 %v1845
    %2908 = vmatpush1.msra.mxu0 %v1844
    %2909 = vmatprep.subr.mxu0 %v1841
    %2910 = vmatpush1.msra.mxu0 %v1840
    %2911 = vmatprep.subr.mxu0 %v1837
    %2912 = vmatpush1.msra.mxu0 %v1836
    %2913 = vmatprep.subr.mxu0 %v1833
    %2914 = vmatpush1.msra.mxu0 %v1832
    %2915 = vmatprep.subr.mxu0 %v1829
    %2916 = vmatpush1.msra.mxu0 %v1828
    %2917 = vmatprep.subr.mxu0 %v1825
    %2918 = vmatpush1.msra.mxu0 %v1824
    %2919 = vmatprep.subr.mxu0 %v1821
    %2920 = vmatpush1.msra.mxu0 %v1820
    %2921 = vmatprep.subr.mxu0 %v1817
    %2922 = vmatpush1.msra.mxu0 %v1816
    %2923 = vmatprep.subr.mxu0 %v1813
    %2924 = vmatpush1.msra.mxu0 %v1812
    %2925 = vmatprep.subr.mxu0 %v1809
    %2926 = vmatpush1.msra.mxu0 %v1808
    %2927 = vmatprep.subr.mxu0 %v1805
    %2928 = vmatpush1.msra.mxu0 %v1804
    %2929 = vmatprep.subr.mxu0 %v1801
    %2930 = vmatpush1.msra.mxu0 %v1800
    %2931 = vmatprep.subr.mxu0 %v1797
    %2932 = vmatpush1.msra.mxu0 %v1796
    %2933 = vmatprep.subr.mxu0 %v1793
    %2934 = vmatpush1.msra.mxu0 %v1792
    %2935 = vmatprep.subr.mxu0 0.0
    %2936 = vmatpush2.msra.mxu0 0.0
    %2937 = vmatprep.subr.mxu0 0.0
    %2938 = vmatpush2.msra.mxu0 0.0
    %2939 = vmatprep.subr.mxu0 0.0
    %2940 = vmatpush2.msra.mxu0 0.0
    %2941 = vmatprep.subr.mxu0 0.0
    %2942 = vmatpush2.msra.mxu0 0.0
    %2943 = vmatprep.subr.mxu0 0.0
    %2944 = vmatpush2.msra.mxu0 0.0
    %2945 = vmatprep.subr.mxu0 0.0
    %2946 = vmatpush2.msra.mxu0 0.0
    %2947 = vmatprep.subr.mxu0 0.0
    %2948 = vmatpush2.msra.mxu0 0.0
    %2949 = vmatprep.subr.mxu0 0.0
    %2950 = vmatpush2.msra.mxu0 0.0
    %2951 = vmatprep.subr.mxu0 0.0
    %2952 = vmatpush2.msra.mxu0 0.0
    %2953 = vmatprep.subr.mxu0 0.0
    %2954 = vmatpush2.msra.mxu0 0.0
    %2955 = vmatprep.subr.mxu0 0.0
    %2956 = vmatpush2.msra.mxu0 0.0
    %2957 = vmatprep.subr.mxu0 0.0
    %2958 = vmatpush2.msra.mxu0 0.0
    %2959 = vmatprep.subr.mxu0 0.0
    %2960 = vmatpush2.msra.mxu0 0.0
    %2961 = vmatprep.subr.mxu0 0.0
    %2962 = vmatpush2.msra.mxu0 0.0
    %2963 = vmatprep.subr.mxu0 0.0
    %2964 = vmatpush2.msra.mxu0 0.0
    %2965 = vmatprep.subr.mxu0 0.0
    %2966 = vmatpush2.msra.mxu0 0.0
    %2967 = vmatprep.mubr.f32.mxu0 0.0
    %2968 = vmatmul.mubr.f32.gmra.mxu0 %v2830
    %v2969 = vpop.f32.mrf.mxu0
    %v2970 = vadd.f32 0.0, %v2969
    %v2971 = vpop.f32.mrf.mxu0
    %v2972 = vadd.f32 0.0, %v2971
    %2973 = vdwg.mxu0
    %v2974 = vadd.f32 %v2013, %v2899
    %v2975 = vadd.f32 %v2015, %v2901
    %v2976 = vadd.f32 %v2090, %v2970
    %v2977 = vadd.f32 %v2092, %v2972
    %v2978 = vxor.u32 %v2974, 2147483648
    %v2979 = vmul.f32 %v2978, 1.442695
    %v2980 = vpow.pop %v2979
    %v2981 = vadd.f32 %v2980, 1.0
    %v2982 = vrcp.pop %v2981
    %v2983 = vmul.f32 1.0, %v2982
    %v2984 = vxor.u32 %v2975, 2147483648
    %v2985 = vmul.f32 %v2984, 1.442695
    %v2986 = vpow.pop %v2985
    %v2987 = vadd.f32 %v2986, 1.0
    %v2988 = vrcp.pop %v2987
    %v2989 = vmul.f32 1.0, %v2988
    %v2990 = vtanh.pop %v2976
    %v2991 = vxor.u32 %v2977, 2147483648
    %v2992 = vmul.f32 %v2991, 1.442695
    %v2993 = vpow.pop %v2992
    %v2994 = vadd.f32 %v2993, 1.0
    %v2995 = vrcp.pop %v2994
    %v2996 = vmul.f32 1.0, %v2995
    %v2998 = vrot.slane %v2826, 6
    %v3000 = vmul.f32 %v2989, %v2998
    %v3001 = vmul.f32 %v2983, %v2990
    %v3002 = vadd.f32 %v3000, %v3001
    %v3003 = vtanh.pop %v3002
    %v3004 = vmul.f32 %v2996, %v3003
    %3005 = vmatprep.subr.mxu0 %v1851
    %3006 = vmatpush1.msra.mxu0 %v1850
    %3007 = vmatprep.subr.mxu0 %v1847
    %3008 = vmatpush1.msra.mxu0 %v1846
    %3009 = vmatprep.subr.mxu0 %v1843
    %3010 = vmatpush1.msra.mxu0 %v1842
    %3011 = vmatprep.subr.mxu0 %v1839
    %3012 = vmatpush1.msra.mxu0 %v1838
    %3013 = vmatprep.subr.mxu0 %v1835
    %3014 = vmatpush1.msra.mxu0 %v1834
    %3015 = vmatprep.subr.mxu0 %v1831
    %3016 = vmatpush1.msra.mxu0 %v1830
    %3017 = vmatprep.subr.mxu0 %v1827
    %3018 = vmatpush1.msra.mxu0 %v1826
    %3019 = vmatprep.subr.mxu0 %v1823
    %3020 = vmatpush1.msra.mxu0 %v1822
    %3021 = vmatprep.subr.mxu0 %v1819
    %3022 = vmatpush1.msra.mxu0 %v1818
    %3023 = vmatprep.subr.mxu0 %v1815
    %3024 = vmatpush1.msra.mxu0 %v1814
    %3025 = vmatprep.subr.mxu0 %v1811
    %3026 = vmatpush1.msra.mxu0 %v1810
    %3027 = vmatprep.subr.mxu0 %v1807
    %3028 = vmatpush1.msra.mxu0 %v1806
    %3029 = vmatprep.subr.mxu0 %v1803
    %3030 = vmatpush1.msra.mxu0 %v1802
    %3031 = vmatprep.subr.mxu0 %v1799
    %3032 = vmatpush1.msra.mxu0 %v1798
    %3033 = vmatprep.subr.mxu0 %v1795
    %3034 = vmatpush1.msra.mxu0 %v1794
    %3035 = vmatprep.subr.mxu0 %v1791
    %3036 = vmatpush1.msra.mxu0 %v1790
    %3037 = vmatprep.subr.mxu0 0.0
    %3038 = vmatpush2.msra.mxu0 0.0
    %3039 = vmatprep.subr.mxu0 0.0
    %3040 = vmatpush2.msra.mxu0 0.0
    %3041 = vmatprep.subr.mxu0 0.0
    %3042 = vmatpush2.msra.mxu0 0.0
    %3043 = vmatprep.subr.mxu0 0.0
    %3044 = vmatpush2.msra.mxu0 0.0
    %3045 = vmatprep.subr.mxu0 0.0
    %3046 = vmatpush2.msra.mxu0 0.0
    %3047 = vmatprep.subr.mxu0 0.0
    %3048 = vmatpush2.msra.mxu0 0.0
    %3049 = vmatprep.subr.mxu0 0.0
    %3050 = vmatpush2.msra.mxu0 0.0
    %3051 = vmatprep.subr.mxu0 0.0
    %3052 = vmatpush2.msra.mxu0 0.0
    %3053 = vmatprep.subr.mxu0 0.0
    %3054 = vmatpush2.msra.mxu0 0.0
    %3055 = vmatprep.subr.mxu0 0.0
    %3056 = vmatpush2.msra.mxu0 0.0
    %3057 = vmatprep.subr.mxu0 0.0
    %3058 = vmatpush2.msra.mxu0 0.0
    %3059 = vmatprep.subr.mxu0 0.0
    %3060 = vmatpush2.msra.mxu0 0.0
    %3061 = vmatprep.subr.mxu0 0.0
    %3062 = vmatpush2.msra.mxu0 0.0
    %3063 = vmatprep.subr.mxu0 0.0
    %3064 = vmatpush2.msra.mxu0 0.0
    %3065 = vmatprep.subr.mxu0 0.0
    %3066 = vmatpush2.msra.mxu0 0.0
    %3067 = vmatprep.subr.mxu0 0.0
    %3068 = vmatpush2.msra.mxu0 0.0
    %3069 = vmatprep.mubr.f32.mxu0 0.0
    %3070 = vmatmul.mubr.f32.gmra.mxu0 %v3004
    %v3071 = vpop.f32.mrf.mxu0
    %v3072 = vadd.f32 0.0, %v3071
    %v3073 = vpop.f32.mrf.mxu0
    %v3074 = vadd.f32 0.0, %v3073
    %3075 = vdwg.mxu0
    %3076 = vmatprep.subr.mxu0 %v1853
    %3077 = vmatpush1.msra.mxu0 %v1852
    %3078 = vmatprep.subr.mxu0 %v1849
    %3079 = vmatpush1.msra.mxu0 %v1848
    %3080 = vmatprep.subr.mxu0 %v1845
    %3081 = vmatpush1.msra.mxu0 %v1844
    %3082 = vmatprep.subr.mxu0 %v1841
    %3083 = vmatpush1.msra.mxu0 %v1840
    %3084 = vmatprep.subr.mxu0 %v1837
    %3085 = vmatpush1.msra.mxu0 %v1836
    %3086 = vmatprep.subr.mxu0 %v1833
    %3087 = vmatpush1.msra.mxu0 %v1832
    %3088 = vmatprep.subr.mxu0 %v1829
    %3089 = vmatpush1.msra.mxu0 %v1828
    %3090 = vmatprep.subr.mxu0 %v1825
    %3091 = vmatpush1.msra.mxu0 %v1824
    %3092 = vmatprep.subr.mxu0 %v1821
    %3093 = vmatpush1.msra.mxu0 %v1820
    %3094 = vmatprep.subr.mxu0 %v1817
    %3095 = vmatpush1.msra.mxu0 %v1816
    %3096 = vmatprep.subr.mxu0 %v1813
    %3097 = vmatpush1.msra.mxu0 %v1812
    %3098 = vmatprep.subr.mxu0 %v1809
    %3099 = vmatpush1.msra.mxu0 %v1808
    %3100 = vmatprep.subr.mxu0 %v1805
    %3101 = vmatpush1.msra.mxu0 %v1804
    %3102 = vmatprep.subr.mxu0 %v1801
    %3103 = vmatpush1.msra.mxu0 %v1800
    %3104 = vmatprep.subr.mxu0 %v1797
    %3105 = vmatpush1.msra.mxu0 %v1796
    %3106 = vmatprep.subr.mxu0 %v1793
    %3107 = vmatpush1.msra.mxu0 %v1792
    %3108 = vmatprep.subr.mxu0 0.0
    %3109 = vmatpush2.msra.mxu0 0.0
    %3110 = vmatprep.subr.mxu0 0.0
    %3111 = vmatpush2.msra.mxu0 0.0
    %3112 = vmatprep.subr.mxu0 0.0
    %3113 = vmatpush2.msra.mxu0 0.0
    %3114 = vmatprep.subr.mxu0 0.0
    %3115 = vmatpush2.msra.mxu0 0.0
    %3116 = vmatprep.subr.mxu0 0.0
    %3117 = vmatpush2.msra.mxu0 0.0
    %3118 = vmatprep.subr.mxu0 0.0
    %3119 = vmatpush2.msra.mxu0 0.0
    %3120 = vmatprep.subr.mxu0 0.0
    %3121 = vmatpush2.msra.mxu0 0.0
    %3122 = vmatprep.subr.mxu0 0.0
    %3123 = vmatpush2.msra.mxu0 0.0
    %3124 = vmatprep.subr.mxu0 0.0
    %3125 = vmatpush2.msra.mxu0 0.0
    %3126 = vmatprep.subr.mxu0 0.0
    %3127 = vmatpush2.msra.mxu0 0.0
    %3128 = vmatprep.subr.mxu0 0.0
    %3129 = vmatpush2.msra.mxu0 0.0
    %3130 = vmatprep.subr.mxu0 0.0
    %3131 = vmatpush2.msra.mxu0 0.0
    %3132 = vmatprep.subr.mxu0 0.0
    %3133 = vmatpush2.msra.mxu0 0.0
    %3134 = vmatprep.subr.mxu0 0.0
    %3135 = vmatpush2.msra.mxu0 0.0
    %3136 = vmatprep.subr.mxu0 0.0
    %3137 = vmatpush2.msra.mxu0 0.0
    %3138 = vmatprep.subr.mxu0 0.0
    %3139 = vmatpush2.msra.mxu0 0.0
    %3140 = vmatprep.mubr.f32.mxu0 0.0
    %3141 = vmatmul.mubr.f32.gmra.mxu0 %v3004
    %v3142 = vpop.f32.mrf.mxu0
    %v3143 = vadd.f32 0.0, %v3142
    %v3144 = vpop.f32.mrf.mxu0
    %v3145 = vadd.f32 0.0, %v3144
    %3146 = vdwg.mxu0
    %v3151 = vrot.slane %v3072, 6
    %v3152 = vrot.slane %v3074, 6
    %v3153 = vrot.slane %v3143, 6
    %v3154 = vrot.slane %v3145, 6
    %v3159 = vadd.f32 %v2013, %v3151
    %v3160 = vadd.f32 %v2015, %v3152
    %v3161 = vadd.f32 %v2090, %v3153
    %v3162 = vadd.f32 %v2092, %v3154
    %v3163 = vxor.u32 %v3159, 2147483648
    %v3164 = vmul.f32 %v3163, 1.442695
    %v3165 = vpow.pop %v3164
    %v3166 = vadd.f32 %v3165, 1.0
    %v3167 = vrcp.pop %v3166
    %v3168 = vmul.f32 1.0, %v3167
    %v3169 = vxor.u32 %v3160, 2147483648
    %v3170 = vmul.f32 %v3169, 1.442695
    %v3171 = vpow.pop %v3170
    %v3172 = vadd.f32 %v3171, 1.0
    %v3173 = vrcp.pop %v3172
    %v3174 = vmul.f32 1.0, %v3173
    %v3175 = vtanh.pop %v3161
    %v3176 = vxor.u32 %v3162, 2147483648
    %v3177 = vmul.f32 %v3176, 1.442695
    %v3178 = vpow.pop %v3177
    %v3179 = vadd.f32 %v3178, 1.0
    %v3180 = vrcp.pop %v3179
    %v3181 = vmul.f32 1.0, %v3180
    %v3183 = vrot.slane %v3002, 6
    %v3185 = vmul.f32 %v3174, %v3183
    %v3186 = vmul.f32 %v3168, %v3175
    %v3187 = vadd.f32 %v3185, %v3186
    %v3188 = vtanh.pop %v3187
    %v3189 = vmul.f32 %v3181, %v3188
    %v3191 = vrot.slane %v3189, 2
    %3193 = vmatprep.subr.mxu0 %v1851
    %3194 = vmatpush1.msra.mxu0 %v1850
    %3195 = vmatprep.subr.mxu0 %v1847
    %3196 = vmatpush1.msra.mxu0 %v1846
    %3197 = vmatprep.subr.mxu0 %v1843
    %3198 = vmatpush1.msra.mxu0 %v1842
    %3199 = vmatprep.subr.mxu0 %v1839
    %3200 = vmatpush1.msra.mxu0 %v1838
    %3201 = vmatprep.subr.mxu0 %v1835
    %3202 = vmatpush1.msra.mxu0 %v1834
    %3203 = vmatprep.subr.mxu0 %v1831
    %3204 = vmatpush1.msra.mxu0 %v1830
    %3205 = vmatprep.subr.mxu0 %v1827
    %3206 = vmatpush1.msra.mxu0 %v1826
    %3207 = vmatprep.subr.mxu0 %v1823
    %3208 = vmatpush1.msra.mxu0 %v1822
    %3209 = vmatprep.subr.mxu0 %v1819
    %3210 = vmatpush1.msra.mxu0 %v1818
    %3211 = vmatprep.subr.mxu0 %v1815
    %3212 = vmatpush1.msra.mxu0 %v1814
    %3213 = vmatprep.subr.mxu0 %v1811
    %3214 = vmatpush1.msra.mxu0 %v1810
    %3215 = vmatprep.subr.mxu0 %v1807
    %3216 = vmatpush1.msra.mxu0 %v1806
    %3217 = vmatprep.subr.mxu0 %v1803
    %3218 = vmatpush1.msra.mxu0 %v1802
    %3219 = vmatprep.subr.mxu0 %v1799
    %3220 = vmatpush1.msra.mxu0 %v1798
    %3221 = vmatprep.subr.mxu0 %v1795
    %3222 = vmatpush1.msra.mxu0 %v1794
    %3223 = vmatprep.subr.mxu0 %v1791
    %3224 = vmatpush1.msra.mxu0 %v1790
    %3225 = vmatprep.subr.mxu0 0.0
    %3226 = vmatpush2.msra.mxu0 0.0
    %3227 = vmatprep.subr.mxu0 0.0
    %3228 = vmatpush2.msra.mxu0 0.0
    %3229 = vmatprep.subr.mxu0 0.0
    %3230 = vmatpush2.msra.mxu0 0.0
    %3231 = vmatprep.subr.mxu0 0.0
    %3232 = vmatpush2.msra.mxu0 0.0
    %3233 = vmatprep.subr.mxu0 0.0
    %3234 = vmatpush2.msra.mxu0 0.0
    %3235 = vmatprep.subr.mxu0 0.0
    %3236 = vmatpush2.msra.mxu0 0.0
    %3237 = vmatprep.subr.mxu0 0.0
    %3238 = vmatpush2.msra.mxu0 0.0
    %3239 = vmatprep.subr.mxu0 0.0
    %3240 = vmatpush2.msra.mxu0 0.0
    %3241 = vmatprep.subr.mxu0 0.0
    %3242 = vmatpush2.msra.mxu0 0.0
    %3243 = vmatprep.subr.mxu0 0.0
    %3244 = vmatpush2.msra.mxu0 0.0
    %3245 = vmatprep.subr.mxu0 0.0
    %3246 = vmatpush2.msra.mxu0 0.0
    %3247 = vmatprep.subr.mxu0 0.0
    %3248 = vmatpush2.msra.mxu0 0.0
    %3249 = vmatprep.subr.mxu0 0.0
    %3250 = vmatpush2.msra.mxu0 0.0
    %3251 = vmatprep.subr.mxu0 0.0
    %3252 = vmatpush2.msra.mxu0 0.0
    %3253 = vmatprep.subr.mxu0 0.0
    %3254 = vmatpush2.msra.mxu0 0.0
    %3255 = vmatprep.subr.mxu0 0.0
    %3256 = vmatpush2.msra.mxu0 0.0
    %3257 = vmatprep.mubr.f32.mxu0 0.0
    %3258 = vmatmul.mubr.f32.gmra.mxu0 %v3191
    %v3259 = vpop.f32.mrf.mxu0
    %v3260 = vadd.f32 0.0, %v3259
    %v3261 = vpop.f32.mrf.mxu0
    %v3262 = vadd.f32 0.0, %v3261
    %3263 = vdwg.mxu0
    %3264 = vmatprep.subr.mxu0 %v1853
    %3265 = vmatpush1.msra.mxu0 %v1852
    %3266 = vmatprep.subr.mxu0 %v1849
    %3267 = vmatpush1.msra.mxu0 %v1848
    %3268 = vmatprep.subr.mxu0 %v1845
    %3269 = vmatpush1.msra.mxu0 %v1844
    %3270 = vmatprep.subr.mxu0 %v1841
    %3271 = vmatpush1.msra.mxu0 %v1840
    %3272 = vmatprep.subr.mxu0 %v1837
    %3273 = vmatpush1.msra.mxu0 %v1836
    %3274 = vmatprep.subr.mxu0 %v1833
    %3275 = vmatpush1.msra.mxu0 %v1832
    %3276 = vmatprep.subr.mxu0 %v1829
    %3277 = vmatpush1.msra.mxu0 %v1828
    %3278 = vmatprep.subr.mxu0 %v1825
    %3279 = vmatpush1.msra.mxu0 %v1824
    %3280 = vmatprep.subr.mxu0 %v1821
    %3281 = vmatpush1.msra.mxu0 %v1820
    %3282 = vmatprep.subr.mxu0 %v1817
    %3283 = vmatpush1.msra.mxu0 %v1816
    %3284 = vmatprep.subr.mxu0 %v1813
    %3285 = vmatpush1.msra.mxu0 %v1812
    %3286 = vmatprep.subr.mxu0 %v1809
    %3287 = vmatpush1.msra.mxu0 %v1808
    %3288 = vmatprep.subr.mxu0 %v1805
    %3289 = vmatpush1.msra.mxu0 %v1804
    %3290 = vmatprep.subr.mxu0 %v1801
    %3291 = vmatpush1.msra.mxu0 %v1800
    %3292 = vmatprep.subr.mxu0 %v1797
    %3293 = vmatpush1.msra.mxu0 %v1796
    %3294 = vmatprep.subr.mxu0 %v1793
    %3295 = vmatpush1.msra.mxu0 %v1792
    %3296 = vmatprep.subr.mxu0 0.0
    %3297 = vmatpush2.msra.mxu0 0.0
    %3298 = vmatprep.subr.mxu0 0.0
    %3299 = vmatpush2.msra.mxu0 0.0
    %3300 = vmatprep.subr.mxu0 0.0
    %3301 = vmatpush2.msra.mxu0 0.0
    %3302 = vmatprep.subr.mxu0 0.0
    %3303 = vmatpush2.msra.mxu0 0.0
    %3304 = vmatprep.subr.mxu0 0.0
    %3305 = vmatpush2.msra.mxu0 0.0
    %3306 = vmatprep.subr.mxu0 0.0
    %3307 = vmatpush2.msra.mxu0 0.0
    %3308 = vmatprep.subr.mxu0 0.0
    %3309 = vmatpush2.msra.mxu0 0.0
    %3310 = vmatprep.subr.mxu0 0.0
    %3311 = vmatpush2.msra.mxu0 0.0
    %3312 = vmatprep.subr.mxu0 0.0
    %3313 = vmatpush2.msra.mxu0 0.0
    %3314 = vmatprep.subr.mxu0 0.0
    %3315 = vmatpush2.msra.mxu0 0.0
    %3316 = vmatprep.subr.mxu0 0.0
    %3317 = vmatpush2.msra.mxu0 0.0
    %3318 = vmatprep.subr.mxu0 0.0
    %3319 = vmatpush2.msra.mxu0 0.0
    %3320 = vmatprep.subr.mxu0 0.0
    %3321 = vmatpush2.msra.mxu0 0.0
    %3322 = vmatprep.subr.mxu0 0.0
    %3323 = vmatpush2.msra.mxu0 0.0
    %3324 = vmatprep.subr.mxu0 0.0
    %3325 = vmatpush2.msra.mxu0 0.0
    %3326 = vmatprep.subr.mxu0 0.0
    %3327 = vmatpush2.msra.mxu0 0.0
    %3328 = vmatprep.mubr.f32.mxu0 0.0
    %3329 = vmatmul.mubr.f32.gmra.mxu0 %v3191
    %v3330 = vpop.f32.mrf.mxu0
    %v3331 = vadd.f32 0.0, %v3330
    %v3332 = vpop.f32.mrf.mxu0
    %v3333 = vadd.f32 0.0, %v3332
    %3334 = vdwg.mxu0
    %v3339 = vrot.slane %v3260, 4
    %v3340 = vrot.slane %v3262, 4
    %v3341 = vrot.slane %v3331, 4
    %v3342 = vrot.slane %v3333, 4
    %v3347 = vadd.f32 %v2013, %v3339
    %v3348 = vadd.f32 %v2015, %v3340
    %v3349 = vadd.f32 %v2090, %v3341
    %v3350 = vadd.f32 %v2092, %v3342
    %v3351 = vxor.u32 %v3347, 2147483648
    %v3352 = vmul.f32 %v3351, 1.442695
    %v3353 = vpow.pop %v3352
    %v3354 = vadd.f32 %v3353, 1.0
    %v3355 = vrcp.pop %v3354
    %v3356 = vmul.f32 1.0, %v3355
    %v3357 = vxor.u32 %v3348, 2147483648
    %v3358 = vmul.f32 %v3357, 1.442695
    %v3359 = vpow.pop %v3358
    %v3360 = vadd.f32 %v3359, 1.0
    %v3361 = vrcp.pop %v3360
    %v3362 = vmul.f32 1.0, %v3361
    %v3363 = vtanh.pop %v3349
    %v3364 = vxor.u32 %v3350, 2147483648
    %v3365 = vmul.f32 %v3364, 1.442695
    %v3366 = vpow.pop %v3365
    %v3367 = vadd.f32 %v3366, 1.0
    %v3368 = vrcp.pop %v3367
    %v3369 = vmul.f32 1.0, %v3368
    %v3371 = vrot.slane %v3187, 6
    %v3373 = vmul.f32 %v3362, %v3371
    %v3374 = vmul.f32 %v3356, %v3363
    %v3375 = vadd.f32 %v3373, %v3374
    %v3376 = vtanh.pop %v3375
    %v3377 = vmul.f32 %v3369, %v3376
    %v3379 = vrot.slane %v3377, 4
    %3381 = vmatprep.subr.mxu0 %v1851
    %3382 = vmatpush1.msra.mxu0 %v1850
    %3383 = vmatprep.subr.mxu0 %v1847
    %3384 = vmatpush1.msra.mxu0 %v1846
    %3385 = vmatprep.subr.mxu0 %v1843
    %3386 = vmatpush1.msra.mxu0 %v1842
    %3387 = vmatprep.subr.mxu0 %v1839
    %3388 = vmatpush1.msra.mxu0 %v1838
    %3389 = vmatprep.subr.mxu0 %v1835
    %3390 = vmatpush1.msra.mxu0 %v1834
    %3391 = vmatprep.subr.mxu0 %v1831
    %3392 = vmatpush1.msra.mxu0 %v1830
    %3393 = vmatprep.subr.mxu0 %v1827
    %3394 = vmatpush1.msra.mxu0 %v1826
    %3395 = vmatprep.subr.mxu0 %v1823
    %3396 = vmatpush1.msra.mxu0 %v1822
    %3397 = vmatprep.subr.mxu0 %v1819
    %3398 = vmatpush1.msra.mxu0 %v1818
    %3399 = vmatprep.subr.mxu0 %v1815
    %3400 = vmatpush1.msra.mxu0 %v1814
    %3401 = vmatprep.subr.mxu0 %v1811
    %3402 = vmatpush1.msra.mxu0 %v1810
    %3403 = vmatprep.subr.mxu0 %v1807
    %3404 = vmatpush1.msra.mxu0 %v1806
    %3405 = vmatprep.subr.mxu0 %v1803
    %3406 = vmatpush1.msra.mxu0 %v1802
    %3407 = vmatprep.subr.mxu0 %v1799
    %3408 = vmatpush1.msra.mxu0 %v1798
    %3409 = vmatprep.subr.mxu0 %v1795
    %3410 = vmatpush1.msra.mxu0 %v1794
    %3411 = vmatprep.subr.mxu0 %v1791
    %3412 = vmatpush1.msra.mxu0 %v1790
    %3413 = vmatprep.subr.mxu0 0.0
    %3414 = vmatpush2.msra.mxu0 0.0
    %3415 = vmatprep.subr.mxu0 0.0
    %3416 = vmatpush2.msra.mxu0 0.0
    %3417 = vmatprep.subr.mxu0 0.0
    %3418 = vmatpush2.msra.mxu0 0.0
    %3419 = vmatprep.subr.mxu0 0.0
    %3420 = vmatpush2.msra.mxu0 0.0
    %3421 = vmatprep.subr.mxu0 0.0
    %3422 = vmatpush2.msra.mxu0 0.0
    %3423 = vmatprep.subr.mxu0 0.0
    %3424 = vmatpush2.msra.mxu0 0.0
    %3425 = vmatprep.subr.mxu0 0.0
    %3426 = vmatpush2.msra.mxu0 0.0
    %3427 = vmatprep.subr.mxu0 0.0
    %3428 = vmatpush2.msra.mxu0 0.0
    %3429 = vmatprep.subr.mxu0 0.0
    %3430 = vmatpush2.msra.mxu0 0.0
    %3431 = vmatprep.subr.mxu0 0.0
    %3432 = vmatpush2.msra.mxu0 0.0
    %3433 = vmatprep.subr.mxu0 0.0
    %3434 = vmatpush2.msra.mxu0 0.0
    %3435 = vmatprep.subr.mxu0 0.0
    %3436 = vmatpush2.msra.mxu0 0.0
    %3437 = vmatprep.subr.mxu0 0.0
    %3438 = vmatpush2.msra.mxu0 0.0
    %3439 = vmatprep.subr.mxu0 0.0
    %3440 = vmatpush2.msra.mxu0 0.0
    %3441 = vmatprep.subr.mxu0 0.0
    %3442 = vmatpush2.msra.mxu0 0.0
    %3443 = vmatprep.subr.mxu0 0.0
    %3444 = vmatpush2.msra.mxu0 0.0
    %3445 = vmatprep.mubr.f32.mxu0 0.0
    %3446 = vmatmul.mubr.f32.gmra.mxu0 %v3379
    %v3447 = vpop.f32.mrf.mxu0
    %v3448 = vadd.f32 0.0, %v3447
    %v3449 = vpop.f32.mrf.mxu0
    %v3450 = vadd.f32 0.0, %v3449
    %3451 = vdwg.mxu0
    %3452 = vmatprep.subr.mxu0 %v1853
    %3453 = vmatpush1.msra.mxu0 %v1852
    %3454 = vmatprep.subr.mxu0 %v1849
    %3455 = vmatpush1.msra.mxu0 %v1848
    %3456 = vmatprep.subr.mxu0 %v1845
    %3457 = vmatpush1.msra.mxu0 %v1844
    %3458 = vmatprep.subr.mxu0 %v1841
    %3459 = vmatpush1.msra.mxu0 %v1840
    %3460 = vmatprep.subr.mxu0 %v1837
    %3461 = vmatpush1.msra.mxu0 %v1836
    %3462 = vmatprep.subr.mxu0 %v1833
    %3463 = vmatpush1.msra.mxu0 %v1832
    %3464 = vmatprep.subr.mxu0 %v1829
    %3465 = vmatpush1.msra.mxu0 %v1828
    %3466 = vmatprep.subr.mxu0 %v1825
    %3467 = vmatpush1.msra.mxu0 %v1824
    %3468 = vmatprep.subr.mxu0 %v1821
    %3469 = vmatpush1.msra.mxu0 %v1820
    %3470 = vmatprep.subr.mxu0 %v1817
    %3471 = vmatpush1.msra.mxu0 %v1816
    %3472 = vmatprep.subr.mxu0 %v1813
    %3473 = vmatpush1.msra.mxu0 %v1812
    %3474 = vmatprep.subr.mxu0 %v1809
    %3475 = vmatpush1.msra.mxu0 %v1808
    %3476 = vmatprep.subr.mxu0 %v1805
    %3477 = vmatpush1.msra.mxu0 %v1804
    %3478 = vmatprep.subr.mxu0 %v1801
    %3479 = vmatpush1.msra.mxu0 %v1800
    %3480 = vmatprep.subr.mxu0 %v1797
    %3481 = vmatpush1.msra.mxu0 %v1796
    %3482 = vmatprep.subr.mxu0 %v1793
    %3483 = vmatpush1.msra.mxu0 %v1792
    %3484 = vmatprep.subr.mxu0 0.0
    %3485 = vmatpush2.msra.mxu0 0.0
    %3486 = vmatprep.subr.mxu0 0.0
    %3487 = vmatpush2.msra.mxu0 0.0
    %3488 = vmatprep.subr.mxu0 0.0
    %3489 = vmatpush2.msra.mxu0 0.0
    %3490 = vmatprep.subr.mxu0 0.0
    %3491 = vmatpush2.msra.mxu0 0.0
    %3492 = vmatprep.subr.mxu0 0.0
    %3493 = vmatpush2.msra.mxu0 0.0
    %3494 = vmatprep.subr.mxu0 0.0
    %3495 = vmatpush2.msra.mxu0 0.0
    %3496 = vmatprep.subr.mxu0 0.0
    %3497 = vmatpush2.msra.mxu0 0.0
    %3498 = vmatprep.subr.mxu0 0.0
    %3499 = vmatpush2.msra.mxu0 0.0
    %3500 = vmatprep.subr.mxu0 0.0
    %3501 = vmatpush2.msra.mxu0 0.0
    %3502 = vmatprep.subr.mxu0 0.0
    %3503 = vmatpush2.msra.mxu0 0.0
    %3504 = vmatprep.subr.mxu0 0.0
    %3505 = vmatpush2.msra.mxu0 0.0
    %3506 = vmatprep.subr.mxu0 0.0
    %3507 = vmatpush2.msra.mxu0 0.0
    %3508 = vmatprep.subr.mxu0 0.0
    %3509 = vmatpush2.msra.mxu0 0.0
    %3510 = vmatprep.subr.mxu0 0.0
    %3511 = vmatpush2.msra.mxu0 0.0
    %3512 = vmatprep.subr.mxu0 0.0
    %3513 = vmatpush2.msra.mxu0 0.0
    %3514 = vmatprep.subr.mxu0 0.0
    %3515 = vmatpush2.msra.mxu0 0.0
    %3516 = vmatprep.mubr.f32.mxu0 0.0
    %3517 = vmatmul.mubr.f32.gmra.mxu0 %v3379
    %v3518 = vpop.f32.mrf.mxu0
    %v3519 = vadd.f32 0.0, %v3518
    %v3520 = vpop.f32.mrf.mxu0
    %v3521 = vadd.f32 0.0, %v3520
    %3522 = vdwg.mxu0
    %v3527 = vrot.slane %v3448, 2
    %v3528 = vrot.slane %v3450, 2
    %v3529 = vrot.slane %v3519, 2
    %v3530 = vrot.slane %v3521, 2
    %v3535 = vadd.f32 %v2013, %v3527
    %v3536 = vadd.f32 %v2015, %v3528
    %v3537 = vadd.f32 %v2090, %v3529
    %v3538 = vadd.f32 %v2092, %v3530
    %v3539 = vxor.u32 %v3535, 2147483648
    %v3540 = vmul.f32 %v3539, 1.442695
    %v3541 = vpow.pop %v3540
    %v3542 = vadd.f32 %v3541, 1.0
    %v3543 = vrcp.pop %v3542
    %v3544 = vmul.f32 1.0, %v3543
    %v3545 = vxor.u32 %v3536, 2147483648
    %v3546 = vmul.f32 %v3545, 1.442695
    %v3547 = vpow.pop %v3546
    %v3548 = vadd.f32 %v3547, 1.0
    %v3549 = vrcp.pop %v3548
    %v3550 = vmul.f32 1.0, %v3549
    %v3551 = vtanh.pop %v3537
    %v3552 = vxor.u32 %v3538, 2147483648
    %v3553 = vmul.f32 %v3552, 1.442695
    %v3554 = vpow.pop %v3553
    %v3555 = vadd.f32 %v3554, 1.0
    %v3556 = vrcp.pop %v3555
    %v3557 = vmul.f32 1.0, %v3556
    %v3559 = vrot.slane %v3375, 6
    %v3561 = vmul.f32 %v3550, %v3559
    %v3562 = vmul.f32 %v3544, %v3551
    %v3563 = vadd.f32 %v3561, %v3562
    %v3564 = vtanh.pop %v3563
    %v3565 = vmul.f32 %v3557, %v3564
    %s3566 = scalar_lea.vmem [#allocation4], 2
    %3567 = vst.msk [vmem:[%s3566 - $0x6] sm:$0xc0] %vm1778, %v3565
    %s3568 = scalar_lea.vmem [#allocation6], 2
    %3569 = vst.msk [vmem:[%s3568 - $0x6] sm:$0xc0] %vm1778, %v3563
    %v3570 = vld [vmem:[%s7] sm:$0xff]
    %v3571 = vld [vmem:[%s7 + $0x8] sm:$0xff]
    %v3572 = vld [vmem:[%s7 + $0x10] sm:$0xff]
    %v3573 = vld [vmem:[%s7 + $0x18] sm:$0xff]
    %v3574 = vld [vmem:[%s7 + $0x20] sm:$0xff]
    %v3575 = vld [vmem:[%s7 + $0x28] sm:$0xff]
    %v3576 = vld [vmem:[%s7 + $0x30] sm:$0xff]
    %v3577 = vld [vmem:[%s7 + $0x38] sm:$0xff]
    %v3578 = vld [vmem:[%s7 + $0x40] sm:$0xff]
    %v3579 = vld [vmem:[%s7 + $0x48] sm:$0xff]
    %v3580 = vld [vmem:[%s7 + $0x50] sm:$0xff]
    %v3581 = vld [vmem:[%s7 + $0x58] sm:$0xff]
    %v3582 = vld [vmem:[%s7 + $0x60] sm:$0xff]
    %v3583 = vld [vmem:[%s7 + $0x68] sm:$0xff]
    %v3584 = vld [vmem:[%s7 + $0x70] sm:$0xff]
    %v3585 = vld [vmem:[%s7 + $0x78] sm:$0xff]
    %v3586 = vld [vmem:[%s8] sm:$0x1]
    %v3588 = vlaneseq
    %v3589 = vshrl.u32 %v3588, 7
    %v3590 = vsub.s32 0, %v3589
    %v3591 = vrot.slane %v3586, %v3590
    %v3594 = vrot.slane %v3565, 6
    %3596 = vmatprep.subr.mxu0 0.0
    %3597 = vmatpush1.msra.mxu0 %v3585
    %3598 = vmatprep.subr.mxu0 0.0
    %3599 = vmatpush1.msra.mxu0 %v3584
    %3600 = vmatprep.subr.mxu0 0.0
    %3601 = vmatpush1.msra.mxu0 %v3583
    %3602 = vmatprep.subr.mxu0 0.0
    %3603 = vmatpush1.msra.mxu0 %v3582
    %3604 = vmatprep.subr.mxu0 0.0
    %3605 = vmatpush1.msra.mxu0 %v3581
    %3606 = vmatprep.subr.mxu0 0.0
    %3607 = vmatpush1.msra.mxu0 %v3580
    %3608 = vmatprep.subr.mxu0 0.0
    %3609 = vmatpush1.msra.mxu0 %v3579
    %3610 = vmatprep.subr.mxu0 0.0
    %3611 = vmatpush1.msra.mxu0 %v3578
    %3612 = vmatprep.subr.mxu0 0.0
    %3613 = vmatpush1.msra.mxu0 %v3577
    %3614 = vmatprep.subr.mxu0 0.0
    %3615 = vmatpush1.msra.mxu0 %v3576
    %3616 = vmatprep.subr.mxu0 0.0
    %3617 = vmatpush1.msra.mxu0 %v3575
    %3618 = vmatprep.subr.mxu0 0.0
    %3619 = vmatpush1.msra.mxu0 %v3574
    %3620 = vmatprep.subr.mxu0 0.0
    %3621 = vmatpush1.msra.mxu0 %v3573
    %3622 = vmatprep.subr.mxu0 0.0
    %3623 = vmatpush1.msra.mxu0 %v3572
    %3624 = vmatprep.subr.mxu0 0.0
    %3625 = vmatpush1.msra.mxu0 %v3571
    %3626 = vmatprep.subr.mxu0 0.0
    %3627 = vmatpush1.msra.mxu0 %v3570
    %3628 = vmatprep.subr.mxu0 0.0
    %3629 = vmatpush2.msra.mxu0 0.0
    %3630 = vmatprep.subr.mxu0 0.0
    %3631 = vmatpush2.msra.mxu0 0.0
    %3632 = vmatprep.subr.mxu0 0.0
    %3633 = vmatpush2.msra.mxu0 0.0
    %3634 = vmatprep.subr.mxu0 0.0
    %3635 = vmatpush2.msra.mxu0 0.0
    %3636 = vmatprep.subr.mxu0 0.0
    %3637 = vmatpush2.msra.mxu0 0.0
    %3638 = vmatprep.subr.mxu0 0.0
    %3639 = vmatpush2.msra.mxu0 0.0
    %3640 = vmatprep.subr.mxu0 0.0
    %3641 = vmatpush2.msra.mxu0 0.0
    %3642 = vmatprep.subr.mxu0 0.0
    %3643 = vmatpush2.msra.mxu0 0.0
    %3644 = vmatprep.subr.mxu0 0.0
    %3645 = vmatpush2.msra.mxu0 0.0
    %3646 = vmatprep.subr.mxu0 0.0
    %3647 = vmatpush2.msra.mxu0 0.0
    %3648 = vmatprep.subr.mxu0 0.0
    %3649 = vmatpush2.msra.mxu0 0.0
    %3650 = vmatprep.subr.mxu0 0.0
    %3651 = vmatpush2.msra.mxu0 0.0
    %3652 = vmatprep.subr.mxu0 0.0
    %3653 = vmatpush2.msra.mxu0 0.0
    %3654 = vmatprep.subr.mxu0 0.0
    %3655 = vmatpush2.msra.mxu0 0.0
    %3656 = vmatprep.subr.mxu0 0.0
    %3657 = vmatpush2.msra.mxu0 0.0
    %3658 = vmatprep.subr.mxu0 0.0
    %3659 = vmatpush2.msra.mxu0 0.0
    %3660 = vmatprep.mubr.f32.mxu0 0.0
    %3661 = vmatmul.mubr.f32.gmra.mxu0 %v3594
    %v3662 = vpop.f32.mrf.mxu0
    %v3663 = vadd.f32 %v3591, %v3662
    %v3664 = vpop.f32.mrf.mxu0
    %3665 = vdwg.mxu0
    %v3666 = vsel %vm1781, %v3663, -inf
    %3667 = vmax.xlane.f32.xlu0 %v3666
    %v3668 = vpop.xlane.xlu0 %3667
    %v3669 = vsub.f32 %v3663, %v3668
    %v3670 = vmul.f32 %v3669, 1.442695
    %v3671 = vpow.pop %v3670
    %v3672 = vsel %vm1781, %v3671, 0.0
    %3673 = vadd.xlane.f32.xlu0 %v3672
    %v3674 = vpop.xlane.xlu0 %3673
    %v3675 = vlog2.pop %v3674
    %v3676 = vmul.f32 %v3675, 0.6931472
    %v3677 = vsub.f32 %v3669, %v3676
    %3678 = vst [vmem:[#allocation2] sm:$0x3] %v3677
    // Predicated region
    $region46: #{custom_model_forward.1} parent=1 // pred_check
      _
    $region47: #{custom_model_forward.1} parent=1 // pred_check_branch
      %3680 = sbr.rel (0) target = $region49
    $region48: #{custom_model_forward.1} parent=1 // pred_region
      %s3682 = ssub.s32 32, 32
      %3683 = vsyncadd [#allocation3], %s3682
      %s3685 = sshll.u32 [#allocation2], 4
      %s3686 = int_to_ptr.vmem [resolvable:$true] %s3685
      %3688 = dma.vmem_to_hbm [thread:$0]  %s3686, 32, %s11, [#allocation3]
    $region49: #{custom_model_forward.1} parent=1 // pred_fallthru
      _
    // Predicated region
    $region50: #{custom_model_forward.1} parent=1 // pred_check
      _
    $region51: #{custom_model_forward.1} parent=1 // pred_check_branch
      %3690 = sbr.rel (0) target = $region53
    $region52: #{custom_model_forward.1} parent=1 // pred_region
      %s3692 = ssub.s32 64, 64
      %3693 = vsyncadd [#allocation5], %s3692
      %s3694 = sshll.u32 [#allocation4], 4
      %s3695 = int_to_ptr.vmem [resolvable:$true] %s3694
      %3700 = dma.vmem_to_hbm [thread:$0]  %s3695, 64, %s12, [#allocation5], 32, 32, 2
    $region53: #{custom_model_forward.1} parent=1 // pred_fallthru
      _
    // Predicated region
    $region54: #{custom_model_forward.1} parent=1 // pred_check
      _
    $region55: #{custom_model_forward.1} parent=1 // pred_check_branch
      %3702 = sbr.rel (0) target = $region57
    $region56: #{custom_model_forward.1} parent=1 // pred_region
      %s3704 = ssub.s32 64, 64
      %3705 = vsyncadd [#allocation5], %s3704
      %s3706 = sshll.u32 [#allocation6], 4
      %s3707 = int_to_ptr.vmem [resolvable:$true] %s3706
      %3712 = dma.vmem_to_hbm [thread:$0]  %s3707, 64, %s13, [#allocation5], 32, 32, 2
    $region57: #{custom_model_forward.1} parent=1 // pred_fallthru
      _
    // Predicated region
    $region58: #{custom_model_forward.1} parent=1 // pred_check
      _
    $region59: #{custom_model_forward.1} parent=1 // pred_check_branch
      %3714 = sbr.rel (0) target = $region61
    $region60: #{custom_model_forward.1} parent=1 // pred_region
      %3715 = dma.done [#allocation3], 32
    $region61: #{custom_model_forward.1} parent=1 // pred_fallthru
      _
    // Predicated region
    $region62: #{custom_model_forward.1} parent=1 // pred_check
      _
    $region63: #{custom_model_forward.1} parent=1 // pred_check_branch
      %3717 = sbr.rel (0) target = $region65
    $region64: #{custom_model_forward.1} parent=1 // pred_region
      %3718 = dma.done [#allocation5], 64
    $region65: #{custom_model_forward.1} parent=1 // pred_fallthru
      _
    // Predicated region
    $region66: #{custom_model_forward.1} parent=1 // pred_check
      _
    $region67: #{custom_model_forward.1} parent=1 // pred_check_branch
      %3720 = sbr.rel (0) target = $region69
    $region68: #{custom_model_forward.1} parent=1 // pred_region
      %3721 = dma.done [#allocation5], 64
    $region69: #{custom_model_forward.1} parent=1 // pred_fallthru
      _
    %3722 = vsyncpa [#allocation3], 1
    %3723 = vsyncpa [#allocation5], 1

</llo_original>
